<compile_context>
chip_gen: v5e
topology: v5e:2x2
jax: 0.10.0
libtpu: 0.0.40
codegen_flags: <defaults>
</compile_context>

<pallas_src>
import jax
import jax.numpy as jnp
from jax import lax
from jax.experimental import pallas as pl
from jax.experimental.pallas import tpu as pltpu

# ----------------------------- configuration --------------------------------
B = 2              # batch
S = 8              # sequence length
WE = 32            # args.word_emb_dim
D = 32             # args.before_att_size
Q = 32             # args.query_hidden_dim
HH = D // 2        # hidden size per direction of the bidirectional LSTM
LABELS = 11
VOCAB = 50
CHAR_VOCAB = 30
NUM_IMG = 4
R = 49             # 7 x 7 image regions
FEAT = 2048        # image feature channels
I_DIM = WE + D     # LSTM input size


# ------------------------------ fused kernel --------------------------------
def _lstm_cell(xg, h, c, whh):
    """One LSTM step. `xg` already contains x @ W_ih + bias.

    Gate column order is [i, f, o, g] so a single contiguous sigmoid covers
    i, f, o and one tanh covers g.
    """
    hdim = h.shape[-1]
    gates = xg + jnp.dot(h, whh, preferred_element_type=jnp.float32)
    sig = jax.nn.sigmoid(gates[:, : 3 * hdim])
    g_g = jnp.tanh(gates[:, 3 * hdim:])
    i_g = sig[:, :hdim]
    f_g = sig[:, hdim:2 * hdim]
    o_g = sig[:, 2 * hdim:3 * hdim]
    c_new = f_g * c + i_g * g_g
    h_new = o_g * jnp.tanh(c_new)
    return h_new, c_new


def _wciv_kernel(x_ref, wm_ref, feat_ref,
                 q_wih_ref, q_whh_ref, q_bias_ref,
                 pt_w_ref, pv_w_ref, wa_w_ref, wa_b_ref,
                 lf_wih_ref, lf_whh_ref, lf_bias_ref,
                 lb_wih_ref, lb_whh_ref, lb_bias_ref,
                 o_w1_ref, o_b1_ref, o_w2_ref, o_b2_ref,
                 logits_ref, att_ref,
                 xpq_scr, xpf_scr, xpb_scr, vc_scr, wc_scr):
    f32 = jnp.float32
    x = x_ref[...]                                              # (S*B, I_DIM)

    # ---------------- query LSTM (zero init), gather step word_mask --------
    # Input projection hoisted out of the recurrence: one (16,64)x(64,128).
    xpq_scr[...] = (jnp.dot(x, q_wih_ref[...], preferred_element_type=f32)
                    + q_bias_ref[...])
    q_whh = q_whh_ref[...]
    wm = wm_ref[...]                                            # (B, 1) int32
    h = jnp.zeros((B, Q), f32)
    c = jnp.zeros((B, Q), f32)
    query = jnp.zeros((B, Q), f32)
    for t in range(S):                                          # static unroll
        xg = xpq_scr[t * B:(t + 1) * B, :]
        h, c = _lstm_cell(xg, h, c, q_whh)
        # query.gather(1, word_mask): keep h at step t == word_mask[b]
        query = jnp.where(wm == t, h, query)

    # ---------------- visual attention (vc Linear pre-folded into feat) ----
    pt_all = jnp.tanh(jnp.dot(query, pt_w_ref[...],
                              preferred_element_type=f32))      # (B, D)
    pv_w = pv_w_ref[...]
    wa_w = wa_w_ref[...]
    wa_b = wa_b_ref[...]
    ones_d = jnp.ones((1, D), f32)
    for b in range(B):                                          # static, B=2
        feat_b = feat_ref[b]                                    # (R, D)
        pv = jnp.tanh(jnp.dot(feat_b, pv_w, preferred_element_type=f32))
        a = pv + pt_all[b:b + 1]                                # (R, D)
        wa = jnp.dot(a, wa_w, preferred_element_type=f32) + wa_b
        # softmax over the 49 regions, independently per channel
        m = jnp.max(wa, axis=0, keepdims=True)
        e = jnp.exp(wa - m)
        et = e / jnp.sum(e, axis=0, keepdims=True)              # (R, D)
        # vc[d] = sum_r E[d, r] * feat[r, d]
        vc_scr[b:b + 1, :] = jnp.sum(et * feat_b, axis=0, keepdims=True)
        # img_attention: mean over D channels, lane-dense (1, R) row via
        # a (1,D)x(R,D)^T contraction on the MXU.
        att_row = lax.dot_general(
            ones_d, et, (((1,), (1,)), ((), ())),
            preferred_element_type=f32) * (1.0 / D)             # (1, R)
        mu = jnp.mean(att_row)
        var = jnp.sum((att_row - mu) ** 2) / (R - 1.0)          # unbiased (torch.std)
        # NOTE: matches torch semantics; a (near-)uniform softmax -> var~0 -> inf/NaN.
        att_ref[b] = (att_row - mu) / jnp.sqrt(var) * (-30.0)

    vc_all = vc_scr[...]                                        # (B, D)

    # ---------------- bidirectional LSTM, h0 = vc.view(b,2,D/2).permute ----
    xpf_scr[...] = (jnp.dot(x, lf_wih_ref[...], preferred_element_type=f32)
                    + lf_bias_ref[...])
    xpb_scr[...] = (jnp.dot(x, lb_wih_ref[...], preferred_element_type=f32)
                    + lb_bias_ref[...])
    lf_whh = lf_whh_ref[...]
    lb_whh = lb_whh_ref[...]
    h_f = vc_all[:, :HH]
    h_b = vc_all[:, HH:]
    c_f = jnp.zeros((B, HH), f32)
    c_b = jnp.zeros((B, HH), f32)
    for t in range(S):                                          # shared fwd/bwd loop
        h_f, c_f = _lstm_cell(xpf_scr[t * B:(t + 1) * B, :], h_f, c_f, lf_whh)
        wc_scr[t * B:(t + 1) * B, 0:HH] = h_f
        tb = S - 1 - t
        h_b, c_b = _lstm_cell(xpb_scr[tb * B:(tb + 1) * B, :], h_b, c_b, lb_whh)
        wc_scr[tb * B:(tb + 1) * B, HH:D] = h_b

    # ---------------- output head: Linear(D,128) -> ReLU -> Linear(128,11) -
    # Dropout(0.3) is eval-mode identity here.
    w_c = wc_scr[...]                                           # (S*B, D)
    h1 = jnp.maximum(
        jnp.dot(w_c, o_w1_ref[...], preferred_element_type=f32) + o_b1_ref[...],
        0.0)
    logits_ref[...] = (jnp.dot(h1, o_w2_ref[...], preferred_element_type=f32)
                       + o_b2_ref[...])


def _vmem_spec():
    return pl.BlockSpec(memory_space=pltpu.MemorySpace.VMEM)


def wciv_fused(x_flat, word_mask, feat, p):
    """x_flat: (S*B, I_DIM) time-major; word_mask: (B,1) int32; feat: (B,R,D)."""
    n_inputs = 20
    logits, att = pl.pallas_call(
        _wciv_kernel,
        out_shape=(jax.ShapeDtypeStruct((S * B, LABELS), jnp.float32),
                   jax.ShapeDtypeStruct((B, 1, R), jnp.float32)),
        in_specs=[_vmem_spec() for _ in range(n_inputs)],
        out_specs=(_vmem_spec(), _vmem_spec()),
        scratch_shapes=[
            pltpu.VMEM((S * B, 4 * Q), jnp.float32),    # query LSTM x-proj
            pltpu.VMEM((S * B, 4 * HH), jnp.float32),   # fwd LSTM x-proj
            pltpu.VMEM((S * B, 4 * HH), jnp.float32),   # bwd LSTM x-proj
            pltpu.VMEM((B, D), jnp.float32),            # vc
            pltpu.VMEM((S * B, D), jnp.float32),        # bi-LSTM outputs
        ],
    )(x_flat, word_mask, feat,
      p["q_wih"], p["q_whh"], p["q_bias"],
      p["pt_w"], p["pv_w"], p["wa_w"], p["wa_b"],
      p["l_wih_f"], p["l_whh_f"], p["l_bias_f"],
      p["l_wih_b"], p["l_whh_b"], p["l_bias_b"],
      p["o_w1"], p["o_b1"], p["o_w2"], p["o_b2"])
    return logits, att


# ---------------------------------- forward -----------------------------------
@jax.jit
def forward(p, word_id, char_id, img_id, char_mask, word_mask):
    b, s = word_id.shape

    # Synthetic external sub-modules (image_embed / char_embed) as lookups.
    # TODO(synk): original char_embed / image_embed are opaque modules passed to
    # __init__; synthesized here as deterministic embedding / feature-bank lookups.
    char_emb = p["char_embed"][char_id] * char_mask[..., None]   # (b, s, D)
    word_emb = p["word_embed"][word_id]                          # (b, s, WE)
    word_char = jnp.concatenate([word_emb, char_emb], axis=-1)   # (b, s, I)

    # time-major, flattened: row t*B + b
    x_flat = jnp.transpose(word_char, (1, 0, 2)).reshape(s * b, I_DIM)

    # vc(image_embed(img_id)) precomputed once at init -> (b, 49, D)
    feat = p["img_bank_vc"][img_id]

    wm = word_mask.reshape(b, 1).astype(jnp.int32)

    logits, att = wciv_fused(x_flat, wm, feat, p)

    out = logits.reshape(s, b, LABELS).transpose(1, 0, 2)        # (b, s, 11)
    img_attention = att.reshape(b, 7, 7)
    return out, img_attention


# --------------------------------- parameters ---------------------------------
def init_params(key):
    ks = iter(jax.random.split(key, 32))

    def rnd(shape, scale=0.1):
        return jax.random.normal(next(ks), shape, jnp.float32) * scale

    # vc: Linear(2048, D) — folded into the static, synthetic image bank below.
    vc_w = rnd((FEAT, D))
    vc_b = rnd((1, D))
    image_bank = rnd((NUM_IMG, FEAT, 7, 7))
    # image_embed is opaque in the reference; composing vc with the (fixed)
    # feature bank at init is semantics-preserving and removes the ~800 KB
    # NCHW transpose + FEAT-sized matmul from every forward pass.
    img_bank_vc = (image_bank.reshape(NUM_IMG, FEAT, R).transpose(0, 2, 1)
                   @ vc_w + vc_b)                                # (NUM_IMG, R, D)

    p = {
        # embedding tables / synthetic external modules
        "word_embed": rnd((VOCAB, WE)),
        "char_embed": rnd((CHAR_VOCAB, D)),
        "img_bank_vc": img_bank_vc,
        # Pv: Linear(D, D, bias=False), Pt: Linear(Q, D, bias=False)
        "pv_w": rnd((D, D)), "pt_w": rnd((Q, D)),
        # Wa: Linear(D, D)
        "wa_w": rnd((D, D)), "wa_b": rnd((1, D)),
        # LSTM weights stored (in_dim, 4H), gate column order [i, f, o, g]
        # (swap the last two gate blocks when importing PyTorch's [i, f, g, o]).
        # query LSTM: input I_DIM, hidden Q
        "q_wih": rnd((I_DIM, 4 * Q)), "q_whh": rnd((Q, 4 * Q)),
        "q_bias": rnd((1, 4 * Q)),
        # bidirectional LSTM: hidden HH per direction
        "l_wih_f": rnd((I_DIM, 4 * HH)), "l_whh_f": rnd((HH, 4 * HH)),
        "l_bias_f": rnd((1, 4 * HH)),
        "l_wih_b": rnd((I_DIM, 4 * HH)), "l_whh_b": rnd((HH, 4 * HH)),
        "l_bias_b": rnd((1, 4 * HH)),
        # out head: Linear(D,128) -> ReLU -> Dropout(eval id) -> Linear(128,11)
        "o_w1": rnd((D, 128)), "o_b1": rnd((1, 128)),
        "o_w2": rnd((128, LABELS)), "o_b2": rnd((1, LABELS)),
    }
    return p
    # TODO(synk): CRF (loss_fn / predict) is not part of forward and is omitted.


# ----------------------------------- main --------------------------------------
if __name__ == "__main__":
    key = jax.random.PRNGKey(0)
    k_param, k_word, k_char, k_img = jax.random.split(key, 4)

    params = init_params(k_param)

    word_id = jax.random.randint(k_word, (B, S), 0, VOCAB, dtype=jnp.int32)
    char_id = jax.random.randint(k_char, (B, S), 0, CHAR_VOCAB, dtype=jnp.int32)
    img_id = jax.random.randint(k_img, (B,), 0, NUM_IMG, dtype=jnp.int32)
    char_mask = jnp.ones((B, S), jnp.float32)
    word_mask = jnp.array([S - 1, S - 2], dtype=jnp.int32)  # last valid step idx

    out, img_attention = forward(params, word_id, char_id, img_id,
                                 char_mask, word_mask)
    jax.block_until_ready((out, img_attention))

    assert out.shape == (B, S, LABELS)
    assert img_attention.shape == (B, 7, 7)
    print("KERNEL_OK")
</pallas_src>

<mosaic_0001>
module attributes {stable_mosaic.version = 11 : i64} {
  func.func @_wciv_kernel(%arg0: memref<16x64xf32, #tpu.memory_space<vmem>>, %arg1: memref<2x1xi32, #tpu.memory_space<vmem>>, %arg2: memref<2x49x32xf32, #tpu.memory_space<vmem>>, %arg3: memref<64x128xf32, #tpu.memory_space<vmem>>, %arg4: memref<32x128xf32, #tpu.memory_space<vmem>>, %arg5: memref<1x128xf32, #tpu.memory_space<vmem>>, %arg6: memref<32x32xf32, #tpu.memory_space<vmem>>, %arg7: memref<32x32xf32, #tpu.memory_space<vmem>>, %arg8: memref<32x32xf32, #tpu.memory_space<vmem>>, %arg9: memref<1x32xf32, #tpu.memory_space<vmem>>, %arg10: memref<64x64xf32, #tpu.memory_space<vmem>>, %arg11: memref<16x64xf32, #tpu.memory_space<vmem>>, %arg12: memref<1x64xf32, #tpu.memory_space<vmem>>, %arg13: memref<64x64xf32, #tpu.memory_space<vmem>>, %arg14: memref<16x64xf32, #tpu.memory_space<vmem>>, %arg15: memref<1x64xf32, #tpu.memory_space<vmem>>, %arg16: memref<32x128xf32, #tpu.memory_space<vmem>>, %arg17: memref<1x128xf32, #tpu.memory_space<vmem>>, %arg18: memref<128x11xf32, #tpu.memory_space<vmem>>, %arg19: memref<1x11xf32, #tpu.memory_space<vmem>>, %arg20: memref<16x11xf32, #tpu.memory_space<vmem>>, %arg21: memref<2x1x49xf32, #tpu.memory_space<vmem>>, %arg22: memref<16x128xf32, #tpu.memory_space<vmem>>, %arg23: memref<16x64xf32, #tpu.memory_space<vmem>>, %arg24: memref<16x64xf32, #tpu.memory_space<vmem>>, %arg25: memref<2x32xf32, #tpu.memory_space<vmem>>, %arg26: memref<16x32xf32, #tpu.memory_space<vmem>>) attributes {dimension_semantics = [], scalar_prefetch = 0 : i64, scratch_operands = 5 : i64, tpu.core_type = #tpu.core_type<tc>} {
    %c0 = arith.constant 0 : index
    %c0_0 = arith.constant 0 : index
    %0 = vector.load %arg0[%c0, %c0_0] : memref<16x64xf32, #tpu.memory_space<vmem>>, vector<16x64xf32>
    %c0_1 = arith.constant 0 : index
    %c0_2 = arith.constant 0 : index
    %1 = vector.load %arg3[%c0_1, %c0_2] : memref<64x128xf32, #tpu.memory_space<vmem>>, vector<64x128xf32>
    %cst = arith.constant dense<0.000000e+00> : vector<16x128xf32>
    %2 = tpu.matmul %0, %1, %cst {dimension_numbers = #tpu.dot_dimension_numbers<[1], [0], [0], [1], [0, 0, 1, 1], [], []>} : vector<16x64xf32>, vector<64x128xf32>, vector<16x128xf32> -> vector<16x128xf32>
    %c0_3 = arith.constant 0 : index
    %c0_4 = arith.constant 0 : index
    %3 = vector.load %arg5[%c0_3, %c0_4] : memref<1x128xf32, #tpu.memory_space<vmem>>, vector<1x128xf32>
    %4 = vector.broadcast %3 : vector<1x128xf32> to vector<16x128xf32>
    %5 = arith.addf %2, %4 : vector<16x128xf32>
    %c0_5 = arith.constant 0 : index
    %c0_6 = arith.constant 0 : index
    %6 = vector.load %arg22[%c0_5, %c0_6] : memref<16x128xf32, #tpu.memory_space<vmem>>, vector<16x128xf32>
    tpu.vector_store %arg22[%c0_5, %c0_6], %5 {strides = array<i32>} : memref<16x128xf32, #tpu.memory_space<vmem>>, vector<16x128xf32>,
    %c0_7 = arith.constant 0 : index
    %c0_8 = arith.constant 0 : index
    %7 = vector.load %arg4[%c0_7, %c0_8] : memref<32x128xf32, #tpu.memory_space<vmem>>, vector<32x128xf32>
    %c0_9 = arith.constant 0 : index
    %c0_10 = arith.constant 0 : index
    %8 = vector.load %arg1[%c0_9, %c0_10] : memref<2x1xi32, #tpu.memory_space<vmem>>, vector<2x1xi32>
    %cst_11 = arith.constant 0.000000e+00 : f32
    %9 = vector.broadcast %cst_11 : f32 to vector<2x32xf32>
    %cst_12 = arith.constant 0.000000e+00 : f32
    %10 = vector.broadcast %cst_12 : f32 to vector<2x32xf32>
    %cst_13 = arith.constant 0.000000e+00 : f32
    %11 = vector.broadcast %cst_13 : f32 to vector<2x32xf32>
    %c0_14 = arith.constant 0 : index
    %c0_15 = arith.constant 0 : index
    %12 = vector.load %arg22[%c0_14, %c0_15] : memref<16x128xf32, #tpu.memory_space<vmem>>, vector<2x128xf32>
    %cst_16 = arith.constant dense<0.000000e+00> : vector<2x128xf32>
    %13 = tpu.matmul %9, %7, %cst_16 {dimension_numbers = #tpu.dot_dimension_numbers<[1], [0], [0], [1], [0, 0, 1, 1], [], []>} : vector<2x32xf32>, vector<32x128xf32>, vector<2x128xf32> -> vector<2x128xf32>
    %14 = arith.addf %12, %13 : vector<2x128xf32>
    %15 = vector.extract_strided_slice %14 {offsets = [0, 0], sizes = [2, 96], strides = [1, 1]} : vector<2x128xf32> to vector<2x96xf32>
    %16 = arith.negf %15 : vector<2x96xf32>
    %17 = math.exp %16 : vector<2x96xf32>
    %cst_17 = arith.constant 1.000000e+00 : f32
    %18 = vector.broadcast %cst_17 : f32 to vector<2x96xf32>
    %19 = arith.addf %18, %17 : vector<2x96xf32>
    %20 = arith.divf %18, %19 : vector<2x96xf32>
    %21 = vector.extract_strided_slice %14 {offsets = [0, 96], sizes = [2, 32], strides = [1, 1]} : vector<2x128xf32> to vector<2x32xf32>
    %22 = math.tanh %21 : vector<2x32xf32>
    %23 = vector.extract_strided_slice %20 {offsets = [0, 0], sizes = [2, 32], strides = [1, 1]} : vector<2x96xf32> to vector<2x32xf32>
    %24 = vector.extract_strided_slice %20 {offsets = [0, 32], sizes = [2, 32], strides = [1, 1]} : vector<2x96xf32> to vector<2x32xf32>
    %25 = vector.extract_strided_slice %20 {offsets = [0, 64], sizes = [2, 32], strides = [1, 1]} : vector<2x96xf32> to vector<2x32xf32>
    %26 = arith.mulf %24, %10 : vector<2x32xf32>
    %27 = arith.mulf %23, %22 : vector<2x32xf32>
    %28 = arith.addf %26, %27 : vector<2x32xf32>
    %29 = math.tanh %28 : vector<2x32xf32>
    %30 = arith.mulf %25, %29 : vector<2x32xf32>
    %c0_i32 = arith.constant 0 : i32
    %31 = vector.broadcast %c0_i32 : i32 to vector<2x1xi32>
    %32 = arith.cmpi eq, %8, %31 : vector<2x1xi32>
    %33 = vector.shape_cast %32 : vector<2x1xi1> to vector<2x1xi1>
    %34 = vector.broadcast %33 : vector<2x1xi1> to vector<2x32xi1>
    %35 = arith.select %34, %30, %11 : vector<2x32xi1>, vector<2x32xf32>
    %c2 = arith.constant 2 : index
    %c0_18 = arith.constant 0 : index
    %36 = vector.load %arg22[%c2, %c0_18] : memref<16x128xf32, #tpu.memory_space<vmem>>, vector<2x128xf32>
    %cst_19 = arith.constant dense<0.000000e+00> : vector<2x128xf32>
    %37 = tpu.matmul %30, %7, %cst_19 {dimension_numbers = #tpu.dot_dimension_numbers<[1], [0], [0], [1], [0, 0, 1, 1], [], []>} : vector<2x32xf32>, vector<32x128xf32>, vector<2x128xf32> -> vector<2x128xf32>
    %38 = arith.addf %36, %37 : vector<2x128xf32>
    %39 = vector.extract_strided_slice %38 {offsets = [0, 0], sizes = [2, 96], strides = [1, 1]} : vector<2x128xf32> to vector<2x96xf32>
    %40 = arith.negf %39 : vector<2x96xf32>
    %41 = math.exp %40 : vector<2x96xf32>
    %cst_20 = arith.constant 1.000000e+00 : f32
    %42 = vector.broadcast %cst_20 : f32 to vector<2x96xf32>
    %43 = arith.addf %42, %41 : vector<2x96xf32>
    %44 = arith.divf %42, %43 : vector<2x96xf32>
    %45 = vector.extract_strided_slice %38 {offsets = [0, 96], sizes = [2, 32], strides = [1, 1]} : vector<2x128xf32> to vector<2x32xf32>
    %46 = math.tanh %45 : vector<2x32xf32>
    %47 = vector.extract_strided_slice %44 {offsets = [0, 0], sizes = [2, 32], strides = [1, 1]} : vector<2x96xf32> to vector<2x32xf32>
    %48 = vector.extract_strided_slice %44 {offsets = [0, 32], sizes = [2, 32], strides = [1, 1]} : vector<2x96xf32> to vector<2x32xf32>
    %49 = vector.extract_strided_slice %44 {offsets = [0, 64], sizes = [2, 32], strides = [1, 1]} : vector<2x96xf32> to vector<2x32xf32>
    %50 = arith.mulf %48, %28 : vector<2x32xf32>
    %51 = arith.mulf %47, %46 : vector<2x32xf32>
    %52 = arith.addf %50, %51 : vector<2x32xf32>
    %53 = math.tanh %52 : vector<2x32xf32>
    %54 = arith.mulf %49, %53 : vector<2x32xf32>
    %c1_i32 = arith.constant 1 : i32
    %55 = vector.broadcast %c1_i32 : i32 to vector<2x1xi32>
    %56 = arith.cmpi eq, %8, %55 : vector<2x1xi32>
    %57 = vector.shape_cast %56 : vector<2x1xi1> to vector<2x1xi1>
    %58 = vector.broadcast %57 : vector<2x1xi1> to vector<2x32xi1>
    %59 = arith.select %58, %54, %35 : vector<2x32xi1>, vector<2x32xf32>
    %c4 = arith.constant 4 : index
    %c0_21 = arith.constant 0 : index
    %60 = vector.load %arg22[%c4, %c0_21] : memref<16x128xf32, #tpu.memory_space<vmem>>, vector<2x128xf32>
    %cst_22 = arith.constant dense<0.000000e+00> : vector<2x128xf32>
    %61 = tpu.matmul %54, %7, %cst_22 {dimension_numbers = #tpu.dot_dimension_numbers<[1], [0], [0], [1], [0, 0, 1, 1], [], []>} : vector<2x32xf32>, vector<32x128xf32>, vector<2x128xf32> -> vector<2x128xf32>
    %62 = arith.addf %60, %61 : vector<2x128xf32>
    %63 = vector.extract_strided_slice %62 {offsets = [0, 0], sizes = [2, 96], strides = [1, 1]} : vector<2x128xf32> to vector<2x96xf32>
    %64 = arith.negf %63 : vector<2x96xf32>
    %65 = math.exp %64 : vector<2x96xf32>
    %cst_23 = arith.constant 1.000000e+00 : f32
    %66 = vector.broadcast %cst_23 : f32 to vector<2x96xf32>
    %67 = arith.addf %66, %65 : vector<2x96xf32>
    %68 = arith.divf %66, %67 : vector<2x96xf32>
    %69 = vector.extract_strided_slice %62 {offsets = [0, 96], sizes = [2, 32], strides = [1, 1]} : vector<2x128xf32> to vector<2x32xf32>
    %70 = math.tanh %69 : vector<2x32xf32>
    %71 = vector.extract_strided_slice %68 {offsets = [0, 0], sizes = [2, 32], strides = [1, 1]} : vector<2x96xf32> to vector<2x32xf32>
    %72 = vector.extract_strided_slice %68 {offsets = [0, 32], sizes = [2, 32], strides = [1, 1]} : vector<2x96xf32> to vector<2x32xf32>
    %73 = vector.extract_strided_slice %68 {offsets = [0, 64], sizes = [2, 32], strides = [1, 1]} : vector<2x96xf32> to vector<2x32xf32>
    %74 = arith.mulf %72, %52 : vector<2x32xf32>
    %75 = arith.mulf %71, %70 : vector<2x32xf32>
    %76 = arith.addf %74, %75 : vector<2x32xf32>
    %77 = math.tanh %76 : vector<2x32xf32>
    %78 = arith.mulf %73, %77 : vector<2x32xf32>
    %c2_i32 = arith.constant 2 : i32
    %79 = vector.broadcast %c2_i32 : i32 to vector<2x1xi32>
    %80 = arith.cmpi eq, %8, %79 : vector<2x1xi32>
    %81 = vector.shape_cast %80 : vector<2x1xi1> to vector<2x1xi1>
    %82 = vector.broadcast %81 : vector<2x1xi1> to vector<2x32xi1>
    %83 = arith.select %82, %78, %59 : vector<2x32xi1>, vector<2x32xf32>
    %c6 = arith.constant 6 : index
    %c0_24 = arith.constant 0 : index
    %84 = vector.load %arg22[%c6, %c0_24] : memref<16x128xf32, #tpu.memory_space<vmem>>, vector<2x128xf32>
    %cst_25 = arith.constant dense<0.000000e+00> : vector<2x128xf32>
    %85 = tpu.matmul %78, %7, %cst_25 {dimension_numbers = #tpu.dot_dimension_numbers<[1], [0], [0], [1], [0, 0, 1, 1], [], []>} : vector<2x32xf32>, vector<32x128xf32>, vector<2x128xf32> -> vector<2x128xf32>
    %86 = arith.addf %84, %85 : vector<2x128xf32>
    %87 = vector.extract_strided_slice %86 {offsets = [0, 0], sizes = [2, 96], strides = [1, 1]} : vector<2x128xf32> to vector<2x96xf32>
    %88 = arith.negf %87 : vector<2x96xf32>
    %89 = math.exp %88 : vector<2x96xf32>
    %cst_26 = arith.constant 1.000000e+00 : f32
    %90 = vector.broadcast %cst_26 : f32 to vector<2x96xf32>
    %91 = arith.addf %90, %89 : vector<2x96xf32>
    %92 = arith.divf %90, %91 : vector<2x96xf32>
    %93 = vector.extract_strided_slice %86 {offsets = [0, 96], sizes = [2, 32], strides = [1, 1]} : vector<2x128xf32> to vector<2x32xf32>
    %94 = math.tanh %93 : vector<2x32xf32>
    %95 = vector.extract_strided_slice %92 {offsets = [0, 0], sizes = [2, 32], strides = [1, 1]} : vector<2x96xf32> to vector<2x32xf32>
    %96 = vector.extract_strided_slice %92 {offsets = [0, 32], sizes = [2, 32], strides = [1, 1]} : vector<2x96xf32> to vector<2x32xf32>
    %97 = vector.extract_strided_slice %92 {offsets = [0, 64], sizes = [2, 32], strides = [1, 1]} : vector<2x96xf32> to vector<2x32xf32>
    %98 = arith.mulf %96, %76 : vector<2x32xf32>
    %99 = arith.mulf %95, %94 : vector<2x32xf32>
    %100 = arith.addf %98, %99 : vector<2x32xf32>
    %101 = math.tanh %100 : vector<2x32xf32>
    %102 = arith.mulf %97, %101 : vector<2x32xf32>
    %c3_i32 = arith.constant 3 : i32
    %103 = vector.broadcast %c3_i32 : i32 to vector<2x1xi32>
    %104 = arith.cmpi eq, %8, %103 : vector<2x1xi32>
    %105 = vector.shape_cast %104 : vector<2x1xi1> to vector<2x1xi1>
    %106 = vector.broadcast %105 : vector<2x1xi1> to vector<2x32xi1>
    %107 = arith.select %106, %102, %83 : vector<2x32xi1>, vector<2x32xf32>
    %c8 = arith.constant 8 : index
    %c0_27 = arith.constant 0 : index
    %108 = vector.load %arg22[%c8, %c0_27] : memref<16x128xf32, #tpu.memory_space<vmem>>, vector<2x128xf32>
    %cst_28 = arith.constant dense<0.000000e+00> : vector<2x128xf32>
    %109 = tpu.matmul %102, %7, %cst_28 {dimension_numbers = #tpu.dot_dimension_numbers<[1], [0], [0], [1], [0, 0, 1, 1], [], []>} : vector<2x32xf32>, vector<32x128xf32>, vector<2x128xf32> -> vector<2x128xf32>
    %110 = arith.addf %108, %109 : vector<2x128xf32>
    %111 = vector.extract_strided_slice %110 {offsets = [0, 0], sizes = [2, 96], strides = [1, 1]} : vector<2x128xf32> to vector<2x96xf32>
    %112 = arith.negf %111 : vector<2x96xf32>
    %113 = math.exp %112 : vector<2x96xf32>
    %cst_29 = arith.constant 1.000000e+00 : f32
    %114 = vector.broadcast %cst_29 : f32 to vector<2x96xf32>
    %115 = arith.addf %114, %113 : vector<2x96xf32>
    %116 = arith.divf %114, %115 : vector<2x96xf32>
    %117 = vector.extract_strided_slice %110 {offsets = [0, 96], sizes = [2, 32], strides = [1, 1]} : vector<2x128xf32> to vector<2x32xf32>
    %118 = math.tanh %117 : vector<2x32xf32>
    %119 = vector.extract_strided_slice %116 {offsets = [0, 0], sizes = [2, 32], strides = [1, 1]} : vector<2x96xf32> to vector<2x32xf32>
    %120 = vector.extract_strided_slice %116 {offsets = [0, 32], sizes = [2, 32], strides = [1, 1]} : vector<2x96xf32> to vector<2x32xf32>
    %121 = vector.extract_strided_slice %116 {offsets = [0, 64], sizes = [2, 32], strides = [1, 1]} : vector<2x96xf32> to vector<2x32xf32>
    %122 = arith.mulf %120, %100 : vector<2x32xf32>
    %123 = arith.mulf %119, %118 : vector<2x32xf32>
    %124 = arith.addf %122, %123 : vector<2x32xf32>
    %125 = math.tanh %124 : vector<2x32xf32>
    %126 = arith.mulf %121, %125 : vector<2x32xf32>
    %c4_i32 = arith.constant 4 : i32
    %127 = vector.broadcast %c4_i32 : i32 to vector<2x1xi32>
    %128 = arith.cmpi eq, %8, %127 : vector<2x1xi32>
    %129 = vector.shape_cast %128 : vector<2x1xi1> to vector<2x1xi1>
    %130 = vector.broadcast %129 : vector<2x1xi1> to vector<2x32xi1>
    %131 = arith.select %130, %126, %107 : vector<2x32xi1>, vector<2x32xf32>
    %c10 = arith.constant 10 : index
    %c0_30 = arith.constant 0 : index
    %132 = vector.load %arg22[%c10, %c0_30] : memref<16x128xf32, #tpu.memory_space<vmem>>, vector<2x128xf32>
    %cst_31 = arith.constant dense<0.000000e+00> : vector<2x128xf32>
    %133 = tpu.matmul %126, %7, %cst_31 {dimension_numbers = #tpu.dot_dimension_numbers<[1], [0], [0], [1], [0, 0, 1, 1], [], []>} : vector<2x32xf32>, vector<32x128xf32>, vector<2x128xf32> -> vector<2x128xf32>
    %134 = arith.addf %132, %133 : vector<2x128xf32>
    %135 = vector.extract_strided_slice %134 {offsets = [0, 0], sizes = [2, 96], strides = [1, 1]} : vector<2x128xf32> to vector<2x96xf32>
    %136 = arith.negf %135 : vector<2x96xf32>
    %137 = math.exp %136 : vector<2x96xf32>
    %cst_32 = arith.constant 1.000000e+00 : f32
    %138 = vector.broadcast %cst_32 : f32 to vector<2x96xf32>
    %139 = arith.addf %138, %137 : vector<2x96xf32>
    %140 = arith.divf %138, %139 : vector<2x96xf32>
    %141 = vector.extract_strided_slice %134 {offsets = [0, 96], sizes = [2, 32], strides = [1, 1]} : vector<2x128xf32> to vector<2x32xf32>
    %142 = math.tanh %141 : vector<2x32xf32>
    %143 = vector.extract_strided_slice %140 {offsets = [0, 0], sizes = [2, 32], strides = [1, 1]} : vector<2x96xf32> to vector<2x32xf32>
    %144 = vector.extract_strided_slice %140 {offsets = [0, 32], sizes = [2, 32], strides = [1, 1]} : vector<2x96xf32> to vector<2x32xf32>
    %145 = vector.extract_strided_slice %140 {offsets = [0, 64], sizes = [2, 32], strides = [1, 1]} : vector<2x96xf32> to vector<2x32xf32>
    %146 = arith.mulf %144, %124 : vector<2x32xf32>
    %147 = arith.mulf %143, %142 : vector<2x32xf32>
    %148 = arith.addf %146, %147 : vector<2x32xf32>
    %149 = math.tanh %148 : vector<2x32xf32>
    %150 = arith.mulf %145, %149 : vector<2x32xf32>
    %c5_i32 = arith.constant 5 : i32
    %151 = vector.broadcast %c5_i32 : i32 to vector<2x1xi32>
    %152 = arith.cmpi eq, %8, %151 : vector<2x1xi32>
    %153 = vector.shape_cast %152 : vector<2x1xi1> to vector<2x1xi1>
    %154 = vector.broadcast %153 : vector<2x1xi1> to vector<2x32xi1>
    %155 = arith.select %154, %150, %131 : vector<2x32xi1>, vector<2x32xf32>
    %c12 = arith.constant 12 : index
    %c0_33 = arith.constant 0 : index
    %156 = vector.load %arg22[%c12, %c0_33] : memref<16x128xf32, #tpu.memory_space<vmem>>, vector<2x128xf32>
    %cst_34 = arith.constant dense<0.000000e+00> : vector<2x128xf32>
    %157 = tpu.matmul %150, %7, %cst_34 {dimension_numbers = #tpu.dot_dimension_numbers<[1], [0], [0], [1], [0, 0, 1, 1], [], []>} : vector<2x32xf32>, vector<32x128xf32>, vector<2x128xf32> -> vector<2x128xf32>
    %158 = arith.addf %156, %157 : vector<2x128xf32>
    %159 = vector.extract_strided_slice %158 {offsets = [0, 0], sizes = [2, 96], strides = [1, 1]} : vector<2x128xf32> to vector<2x96xf32>
    %160 = arith.negf %159 : vector<2x96xf32>
    %161 = math.exp %160 : vector<2x96xf32>
    %cst_35 = arith.constant 1.000000e+00 : f32
    %162 = vector.broadcast %cst_35 : f32 to vector<2x96xf32>
    %163 = arith.addf %162, %161 : vector<2x96xf32>
    %164 = arith.divf %162, %163 : vector<2x96xf32>
    %165 = vector.extract_strided_slice %158 {offsets = [0, 96], sizes = [2, 32], strides = [1, 1]} : vector<2x128xf32> to vector<2x32xf32>
    %166 = math.tanh %165 : vector<2x32xf32>
    %167 = vector.extract_strided_slice %164 {offsets = [0, 0], sizes = [2, 32], strides = [1, 1]} : vector<2x96xf32> to vector<2x32xf32>
    %168 = vector.extract_strided_slice %164 {offsets = [0, 32], sizes = [2, 32], strides = [1, 1]} : vector<2x96xf32> to vector<2x32xf32>
    %169 = vector.extract_strided_slice %164 {offsets = [0, 64], sizes = [2, 32], strides = [1, 1]} : vector<2x96xf32> to vector<2x32xf32>
    %170 = arith.mulf %168, %148 : vector<2x32xf32>
    %171 = arith.mulf %167, %166 : vector<2x32xf32>
    %172 = arith.addf %170, %171 : vector<2x32xf32>
    %173 = math.tanh %172 : vector<2x32xf32>
    %174 = arith.mulf %169, %173 : vector<2x32xf32>
    %c6_i32 = arith.constant 6 : i32
    %175 = vector.broadcast %c6_i32 : i32 to vector<2x1xi32>
    %176 = arith.cmpi eq, %8, %175 : vector<2x1xi32>
    %177 = vector.shape_cast %176 : vector<2x1xi1> to vector<2x1xi1>
    %178 = vector.broadcast %177 : vector<2x1xi1> to vector<2x32xi1>
    %179 = arith.select %178, %174, %155 : vector<2x32xi1>, vector<2x32xf32>
    %c14 = arith.constant 14 : index
    %c0_36 = arith.constant 0 : index
    %180 = vector.load %arg22[%c14, %c0_36] : memref<16x128xf32, #tpu.memory_space<vmem>>, vector<2x128xf32>
    %cst_37 = arith.constant dense<0.000000e+00> : vector<2x128xf32>
    %181 = tpu.matmul %174, %7, %cst_37 {dimension_numbers = #tpu.dot_dimension_numbers<[1], [0], [0], [1], [0, 0, 1, 1], [], []>} : vector<2x32xf32>, vector<32x128xf32>, vector<2x128xf32> -> vector<2x128xf32>
    %182 = arith.addf %180, %181 : vector<2x128xf32>
    %183 = vector.extract_strided_slice %182 {offsets = [0, 0], sizes = [2, 96], strides = [1, 1]} : vector<2x128xf32> to vector<2x96xf32>
    %184 = arith.negf %183 : vector<2x96xf32>
    %185 = math.exp %184 : vector<2x96xf32>
    %cst_38 = arith.constant 1.000000e+00 : f32
    %186 = vector.broadcast %cst_38 : f32 to vector<2x96xf32>
    %187 = arith.addf %186, %185 : vector<2x96xf32>
    %188 = arith.divf %186, %187 : vector<2x96xf32>
    %189 = vector.extract_strided_slice %182 {offsets = [0, 96], sizes = [2, 32], strides = [1, 1]} : vector<2x128xf32> to vector<2x32xf32>
    %190 = math.tanh %189 : vector<2x32xf32>
    %191 = vector.extract_strided_slice %188 {offsets = [0, 0], sizes = [2, 32], strides = [1, 1]} : vector<2x96xf32> to vector<2x32xf32>
    %192 = vector.extract_strided_slice %188 {offsets = [0, 32], sizes = [2, 32], strides = [1, 1]} : vector<2x96xf32> to vector<2x32xf32>
    %193 = vector.extract_strided_slice %188 {offsets = [0, 64], sizes = [2, 32], strides = [1, 1]} : vector<2x96xf32> to vector<2x32xf32>
    %194 = arith.mulf %192, %172 : vector<2x32xf32>
    %195 = arith.mulf %191, %190 : vector<2x32xf32>
    %196 = arith.addf %194, %195 : vector<2x32xf32>
    %197 = math.tanh %196 : vector<2x32xf32>
    %198 = arith.mulf %193, %197 : vector<2x32xf32>
    %c7_i32 = arith.constant 7 : i32
    %199 = vector.broadcast %c7_i32 : i32 to vector<2x1xi32>
    %200 = arith.cmpi eq, %8, %199 : vector<2x1xi32>
    %201 = vector.shape_cast %200 : vector<2x1xi1> to vector<2x1xi1>
    %202 = vector.broadcast %201 : vector<2x1xi1> to vector<2x32xi1>
    %203 = arith.select %202, %198, %179 : vector<2x32xi1>, vector<2x32xf32>
    %c0_39 = arith.constant 0 : index
    %c0_40 = arith.constant 0 : index
    %204 = vector.load %arg6[%c0_39, %c0_40] : memref<32x32xf32, #tpu.memory_space<vmem>>, vector<32x32xf32>
    %cst_41 = arith.constant dense<0.000000e+00> : vector<2x32xf32>
    %205 = tpu.matmul %203, %204, %cst_41 {dimension_numbers = #tpu.dot_dimension_numbers<[1], [0], [0], [1], [0, 0, 1, 1], [], []>} : vector<2x32xf32>, vector<32x32xf32>, vector<2x32xf32> -> vector<2x32xf32>
    %206 = math.tanh %205 : vector<2x32xf32>
    %c0_42 = arith.constant 0 : index
    %c0_43 = arith.constant 0 : index
    %207 = vector.load %arg7[%c0_42, %c0_43] : memref<32x32xf32, #tpu.memory_space<vmem>>, vector<32x32xf32>
    %c0_44 = arith.constant 0 : index
    %c0_45 = arith.constant 0 : index
    %208 = vector.load %arg8[%c0_44, %c0_45] : memref<32x32xf32, #tpu.memory_space<vmem>>, vector<32x32xf32>
    %c0_46 = arith.constant 0 : index
    %c0_47 = arith.constant 0 : index
    %209 = vector.load %arg9[%c0_46, %c0_47] : memref<1x32xf32, #tpu.memory_space<vmem>>, vector<1x32xf32>
    %cst_48 = arith.constant 1.000000e+00 : f32
    %210 = vector.broadcast %cst_48 : f32 to vector<1x32xf32>
    %c0_49 = arith.constant 0 : index
    %c0_50 = arith.constant 0 : index
    %c0_51 = arith.constant 0 : index
    %211 = vector.load %arg2[%c0_49, %c0_50, %c0_51] : memref<2x49x32xf32, #tpu.memory_space<vmem>>, vector<1x49x32xf32>
    %212 = vector.shape_cast %211 : vector<1x49x32xf32> to vector<49x32xf32>
    %cst_52 = arith.constant dense<0.000000e+00> : vector<49x32xf32>
    %213 = tpu.matmul %212, %207, %cst_52 {dimension_numbers = #tpu.dot_dimension_numbers<[1], [0], [0], [1], [0, 0, 1, 1], [], []>} : vector<49x32xf32>, vector<32x32xf32>, vector<49x32xf32> -> vector<49x32xf32>
    %214 = math.tanh %213 : vector<49x32xf32>
    %215 = vector.extract_strided_slice %206 {offsets = [0, 0], sizes = [1, 32], strides = [1, 1]} : vector<2x32xf32> to vector<1x32xf32>
    %216 = vector.broadcast %215 : vector<1x32xf32> to vector<49x32xf32>
    %217 = arith.addf %214, %216 : vector<49x32xf32>
    %cst_53 = arith.constant dense<0.000000e+00> : vector<49x32xf32>
    %218 = tpu.matmul %217, %208, %cst_53 {dimension_numbers = #tpu.dot_dimension_numbers<[1], [0], [0], [1], [0, 0, 1, 1], [], []>} : vector<49x32xf32>, vector<32x32xf32>, vector<49x32xf32> -> vector<49x32xf32>
    %219 = vector.broadcast %209 : vector<1x32xf32> to vector<49x32xf32>
    %220 = arith.addf %218, %219 : vector<49x32xf32>
    %cst_54 = arith.constant dense<0xFF800000> : vector<32xf32>
    %221 = vector.multi_reduction <maximumf>, %220, %cst_54 [0] : vector<49x32xf32> to vector<32xf32>
    %222 = vector.shape_cast %221 : vector<32xf32> to vector<1x32xf32>
    %223 = vector.broadcast %222 : vector<1x32xf32> to vector<49x32xf32>
    %224 = arith.subf %220, %223 : vector<49x32xf32>
    %225 = math.exp %224 : vector<49x32xf32>
    %cst_55 = arith.constant dense<0.000000e+00> : vector<32xf32>
    %226 = vector.multi_reduction <add>, %225, %cst_55 [0] : vector<49x32xf32> to vector<32xf32>
    %227 = vector.shape_cast %226 : vector<32xf32> to vector<1x32xf32>
    %228 = vector.broadcast %227 : vector<1x32xf32> to vector<49x32xf32>
    %229 = arith.divf %225, %228 : vector<49x32xf32>
    %230 = arith.mulf %229, %212 : vector<49x32xf32>
    %cst_56 = arith.constant dense<0.000000e+00> : vector<32xf32>
    %231 = vector.multi_reduction <add>, %230, %cst_56 [0] : vector<49x32xf32> to vector<32xf32>
    %232 = vector.shape_cast %231 : vector<32xf32> to vector<1x32xf32>
    %c0_57 = arith.constant 0 : index
    %c0_58 = arith.constant 0 : index
    %233 = vector.load %arg25[%c0_57, %c0_58] : memref<2x32xf32, #tpu.memory_space<vmem>>, vector<1x32xf32>
    tpu.vector_store %arg25[%c0_57, %c0_58], %232 {strides = array<i32>} : memref<2x32xf32, #tpu.memory_space<vmem>>, vector<1x32xf32>,
    %cst_59 = arith.constant dense<0.000000e+00> : vector<1x49xf32>
    %234 = tpu.matmul %210, %229, %cst_59 {dimension_numbers = #tpu.dot_dimension_numbers<[1], [1], [0], [0], [0, 0, 1, 0], [], []>} : vector<1x32xf32>, vector<49x32xf32>, vector<1x49xf32> -> vector<1x49xf32>
    %cst_60 = arith.constant 3.125000e-02 : f32
    %235 = vector.broadcast %cst_60 : f32 to vector<1x49xf32>
    %236 = arith.mulf %234, %235 : vector<1x49xf32>
    %237 = vector.shape_cast %236 : vector<1x49xf32> to vector<1x1x49xf32>
    %cst_61 = arith.constant dense<0.000000e+00> : vector<1xf32>
    %238 = vector.multi_reduction <add>, %237, %cst_61 [1, 2] : vector<1x1x49xf32> to vector<1xf32>
    %239 = vector.shape_cast %238 : vector<1xf32> to vector<1x1x1xf32>
    %240 = vector.extract %239[0, 0, 0] : f32 from vector<1x1x1xf32>
    %cst_62 = arith.constant 4.900000e+01 : f32
    %241 = arith.divf %240, %cst_62 : f32
    %242 = vector.broadcast %241 : f32 to vector<1x49xf32>
    %243 = arith.subf %236, %242 : vector<1x49xf32>
    %244 = arith.mulf %243, %243 : vector<1x49xf32>
    %245 = vector.shape_cast %244 : vector<1x49xf32> to vector<1x1x49xf32>
    %cst_63 = arith.constant dense<0.000000e+00> : vector<1xf32>
    %246 = vector.multi_reduction <add>, %245, %cst_63 [1, 2] : vector<1x1x49xf32> to vector<1xf32>
    %247 = vector.shape_cast %246 : vector<1xf32> to vector<1x1x1xf32>
    %248 = vector.extract %247[0, 0, 0] : f32 from vector<1x1x1xf32>
    %cst_64 = arith.constant 4.800000e+01 : f32
    %249 = arith.divf %248, %cst_64 : f32
    %250 = vector.broadcast %241 : f32 to vector<1x49xf32>
    %251 = arith.subf %236, %250 : vector<1x49xf32>
    %252 = math.sqrt %249 : f32
    %253 = vector.broadcast %252 : f32 to vector<1x49xf32>
    %254 = arith.divf %251, %253 : vector<1x49xf32>
    %cst_65 = arith.constant -3.000000e+01 : f32
    %255 = vector.broadcast %cst_65 : f32 to vector<1x49xf32>
    %256 = arith.mulf %254, %255 : vector<1x49xf32>
    %c0_66 = arith.constant 0 : index
    %c0_67 = arith.constant 0 : index
    %c0_68 = arith.constant 0 : index
    %257 = vector.load %arg21[%c0_66, %c0_67, %c0_68] : memref<2x1x49xf32, #tpu.memory_space<vmem>>, vector<1x1x49xf32>
    %258 = vector.shape_cast %257 : vector<1x1x49xf32> to vector<1x49xf32>
    %259 = vector.shape_cast %256 : vector<1x49xf32> to vector<1x1x49xf32>
    tpu.vector_store %arg21[%c0_66, %c0_67, %c0_68], %259 {strides = array<i32>} : memref<2x1x49xf32, #tpu.memory_space<vmem>>, vector<1x1x49xf32>,
    %c1 = arith.constant 1 : index
    %c0_69 = arith.constant 0 : index
    %c0_70 = arith.constant 0 : index
    %260 = vector.load %arg2[%c1, %c0_69, %c0_70] : memref<2x49x32xf32, #tpu.memory_space<vmem>>, vector<1x49x32xf32>
    %261 = vector.shape_cast %260 : vector<1x49x32xf32> to vector<49x32xf32>
    %cst_71 = arith.constant dense<0.000000e+00> : vector<49x32xf32>
    %262 = tpu.matmul %261, %207, %cst_71 {dimension_numbers = #tpu.dot_dimension_numbers<[1], [0], [0], [1], [0, 0, 1, 1], [], []>} : vector<49x32xf32>, vector<32x32xf32>, vector<49x32xf32> -> vector<49x32xf32>
    %263 = math.tanh %262 : vector<49x32xf32>
    %264 = vector.extract_strided_slice %206 {offsets = [1, 0], sizes = [1, 32], strides = [1, 1]} : vector<2x32xf32> to vector<1x32xf32>
    %265 = vector.broadcast %264 : vector<1x32xf32> to vector<49x32xf32>
    %266 = arith.addf %263, %265 : vector<49x32xf32>
    %cst_72 = arith.constant dense<0.000000e+00> : vector<49x32xf32>
    %267 = tpu.matmul %266, %208, %cst_72 {dimension_numbers = #tpu.dot_dimension_numbers<[1], [0], [0], [1], [0, 0, 1, 1], [], []>} : vector<49x32xf32>, vector<32x32xf32>, vector<49x32xf32> -> vector<49x32xf32>
    %268 = vector.broadcast %209 : vector<1x32xf32> to vector<49x32xf32>
    %269 = arith.addf %267, %268 : vector<49x32xf32>
    %cst_73 = arith.constant dense<0xFF800000> : vector<32xf32>
    %270 = vector.multi_reduction <maximumf>, %269, %cst_73 [0] : vector<49x32xf32> to vector<32xf32>
    %271 = vector.shape_cast %270 : vector<32xf32> to vector<1x32xf32>
    %272 = vector.broadcast %271 : vector<1x32xf32> to vector<49x32xf32>
    %273 = arith.subf %269, %272 : vector<49x32xf32>
    %274 = math.exp %273 : vector<49x32xf32>
    %cst_74 = arith.constant dense<0.000000e+00> : vector<32xf32>
    %275 = vector.multi_reduction <add>, %274, %cst_74 [0] : vector<49x32xf32> to vector<32xf32>
    %276 = vector.shape_cast %275 : vector<32xf32> to vector<1x32xf32>
    %277 = vector.broadcast %276 : vector<1x32xf32> to vector<49x32xf32>
    %278 = arith.divf %274, %277 : vector<49x32xf32>
    %279 = arith.mulf %278, %261 : vector<49x32xf32>
    %cst_75 = arith.constant dense<0.000000e+00> : vector<32xf32>
    %280 = vector.multi_reduction <add>, %279, %cst_75 [0] : vector<49x32xf32> to vector<32xf32>
    %281 = vector.shape_cast %280 : vector<32xf32> to vector<1x32xf32>
    %c1_76 = arith.constant 1 : index
    %c0_77 = arith.constant 0 : index
    %282 = vector.load %arg25[%c1_76, %c0_77] : memref<2x32xf32, #tpu.memory_space<vmem>>, vector<1x32xf32>
    tpu.vector_store %arg25[%c1_76, %c0_77], %281 {strides = array<i32>} : memref<2x32xf32, #tpu.memory_space<vmem>>, vector<1x32xf32>,
    %cst_78 = arith.constant dense<0.000000e+00> : vector<1x49xf32>
    %283 = tpu.matmul %210, %278, %cst_78 {dimension_numbers = #tpu.dot_dimension_numbers<[1], [1], [0], [0], [0, 0, 1, 0], [], []>} : vector<1x32xf32>, vector<49x32xf32>, vector<1x49xf32> -> vector<1x49xf32>
    %cst_79 = arith.constant 3.125000e-02 : f32
    %284 = vector.broadcast %cst_79 : f32 to vector<1x49xf32>
    %285 = arith.mulf %283, %284 : vector<1x49xf32>
    %286 = vector.shape_cast %285 : vector<1x49xf32> to vector<1x1x49xf32>
    %cst_80 = arith.constant dense<0.000000e+00> : vector<1xf32>
    %287 = vector.multi_reduction <add>, %286, %cst_80 [1, 2] : vector<1x1x49xf32> to vector<1xf32>
    %288 = vector.shape_cast %287 : vector<1xf32> to vector<1x1x1xf32>
    %289 = vector.extract %288[0, 0, 0] : f32 from vector<1x1x1xf32>
    %cst_81 = arith.constant 4.900000e+01 : f32
    %290 = arith.divf %289, %cst_81 : f32
    %291 = vector.broadcast %290 : f32 to vector<1x49xf32>
    %292 = arith.subf %285, %291 : vector<1x49xf32>
    %293 = arith.mulf %292, %292 : vector<1x49xf32>
    %294 = vector.shape_cast %293 : vector<1x49xf32> to vector<1x1x49xf32>
    %cst_82 = arith.constant dense<0.000000e+00> : vector<1xf32>
    %295 = vector.multi_reduction <add>, %294, %cst_82 [1, 2] : vector<1x1x49xf32> to vector<1xf32>
    %296 = vector.shape_cast %295 : vector<1xf32> to vector<1x1x1xf32>
    %297 = vector.extract %296[0, 0, 0] : f32 from vector<1x1x1xf32>
    %cst_83 = arith.constant 4.800000e+01 : f32
    %298 = arith.divf %297, %cst_83 : f32
    %299 = vector.broadcast %290 : f32 to vector<1x49xf32>
    %300 = arith.subf %285, %299 : vector<1x49xf32>
    %301 = math.sqrt %298 : f32
    %302 = vector.broadcast %301 : f32 to vector<1x49xf32>
    %303 = arith.divf %300, %302 : vector<1x49xf32>
    %cst_84 = arith.constant -3.000000e+01 : f32
    %304 = vector.broadcast %cst_84 : f32 to vector<1x49xf32>
    %305 = arith.mulf %303, %304 : vector<1x49xf32>
    %c1_85 = arith.constant 1 : index
    %c0_86 = arith.constant 0 : index
    %c0_87 = arith.constant 0 : index
    %306 = vector.load %arg21[%c1_85, %c0_86, %c0_87] : memref<2x1x49xf32, #tpu.memory_space<vmem>>, vector<1x1x49xf32>
    %307 = vector.shape_cast %306 : vector<1x1x49xf32> to vector<1x49xf32>
    %308 = vector.shape_cast %305 : vector<1x49xf32> to vector<1x1x49xf32>
    tpu.vector_store %arg21[%c1_85, %c0_86, %c0_87], %308 {strides = array<i32>} : memref<2x1x49xf32, #tpu.memory_space<vmem>>, vector<1x1x49xf32>,
    %c0_88 = arith.constant 0 : index
    %c0_89 = arith.constant 0 : index
    %309 = vector.load %arg25[%c0_88, %c0_89] : memref<2x32xf32, #tpu.memory_space<vmem>>, vector<2x32xf32>
    %c0_90 = arith.constant 0 : index
    %c0_91 = arith.constant 0 : index
    %310 = vector.load %arg10[%c0_90, %c0_91] : memref<64x64xf32, #tpu.memory_space<vmem>>, vector<64x64xf32>
    %cst_92 = arith.constant dense<0.000000e+00> : vector<16x64xf32>
    %311 = tpu.matmul %0, %310, %cst_92 {dimension_numbers = #tpu.dot_dimension_numbers<[1], [0], [0], [1], [0, 0, 1, 1], [], []>} : vector<16x64xf32>, vector<64x64xf32>, vector<16x64xf32> -> vector<16x64xf32>
    %c0_93 = arith.constant 0 : index
    %c0_94 = arith.constant 0 : index
    %312 = vector.load %arg12[%c0_93, %c0_94] : memref<1x64xf32, #tpu.memory_space<vmem>>, vector<1x64xf32>
    %313 = vector.broadcast %312 : vector<1x64xf32> to vector<16x64xf32>
    %314 = arith.addf %311, %313 : vector<16x64xf32>
    %c0_95 = arith.constant 0 : index
    %c0_96 = arith.constant 0 : index
    %315 = vector.load %arg23[%c0_95, %c0_96] : memref<16x64xf32, #tpu.memory_space<vmem>>, vector<16x64xf32>
    tpu.vector_store %arg23[%c0_95, %c0_96], %314 {strides = array<i32>} : memref<16x64xf32, #tpu.memory_space<vmem>>, vector<16x64xf32>,
    %c0_97 = arith.constant 0 : index
    %c0_98 = arith.constant 0 : index
    %316 = vector.load %arg13[%c0_97, %c0_98] : memref<64x64xf32, #tpu.memory_space<vmem>>, vector<64x64xf32>
    %cst_99 = arith.constant dense<0.000000e+00> : vector<16x64xf32>
    %317 = tpu.matmul %0, %316, %cst_99 {dimension_numbers = #tpu.dot_dimension_numbers<[1], [0], [0], [1], [0, 0, 1, 1], [], []>} : vector<16x64xf32>, vector<64x64xf32>, vector<16x64xf32> -> vector<16x64xf32>
    %c0_100 = arith.constant 0 : index
    %c0_101 = arith.constant 0 : index
    %318 = vector.load %arg15[%c0_100, %c0_101] : memref<1x64xf32, #tpu.memory_space<vmem>>, vector<1x64xf32>
    %319 = vector.broadcast %318 : vector<1x64xf32> to vector<16x64xf32>
    %320 = arith.addf %317, %319 : vector<16x64xf32>
    %c0_102 = arith.constant 0 : index
    %c0_103 = arith.constant 0 : index
    %321 = vector.load %arg24[%c0_102, %c0_103] : memref<16x64xf32, #tpu.memory_space<vmem>>, vector<16x64xf32>
    tpu.vector_store %arg24[%c0_102, %c0_103], %320 {strides = array<i32>} : memref<16x64xf32, #tpu.memory_space<vmem>>, vector<16x64xf32>,
    %c0_104 = arith.constant 0 : index
    %c0_105 = arith.constant 0 : index
    %322 = vector.load %arg11[%c0_104, %c0_105] : memref<16x64xf32, #tpu.memory_space<vmem>>, vector<16x64xf32>
    %c0_106 = arith.constant 0 : index
    %c0_107 = arith.constant 0 : index
    %323 = vector.load %arg14[%c0_106, %c0_107] : memref<16x64xf32, #tpu.memory_space<vmem>>, vector<16x64xf32>
    %324 = vector.extract_strided_slice %309 {offsets = [0, 0], sizes = [2, 16], strides = [1, 1]} : vector<2x32xf32> to vector<2x16xf32>
    %325 = vector.extract_strided_slice %309 {offsets = [0, 16], sizes = [2, 16], strides = [1, 1]} : vector<2x32xf32> to vector<2x16xf32>
    %cst_108 = arith.constant 0.000000e+00 : f32
    %326 = vector.broadcast %cst_108 : f32 to vector<2x16xf32>
    %cst_109 = arith.constant 0.000000e+00 : f32
    %327 = vector.broadcast %cst_109 : f32 to vector<2x16xf32>
    %c0_110 = arith.constant 0 : index
    %c0_111 = arith.constant 0 : index
    %328 = vector.load %arg23[%c0_110, %c0_111] : memref<16x64xf32, #tpu.memory_space<vmem>>, vector<2x64xf32>
    %cst_112 = arith.constant dense<0.000000e+00> : vector<2x64xf32>
    %329 = tpu.matmul %324, %322, %cst_112 {dimension_numbers = #tpu.dot_dimension_numbers<[1], [0], [0], [1], [0, 0, 1, 1], [], []>} : vector<2x16xf32>, vector<16x64xf32>, vector<2x64xf32> -> vector<2x64xf32>
    %330 = arith.addf %328, %329 : vector<2x64xf32>
    %331 = vector.extract_strided_slice %330 {offsets = [0, 0], sizes = [2, 48], strides = [1, 1]} : vector<2x64xf32> to vector<2x48xf32>
    %332 = arith.negf %331 : vector<2x48xf32>
    %333 = math.exp %332 : vector<2x48xf32>
    %cst_113 = arith.constant 1.000000e+00 : f32
    %334 = vector.broadcast %cst_113 : f32 to vector<2x48xf32>
    %335 = arith.addf %334, %333 : vector<2x48xf32>
    %336 = arith.divf %334, %335 : vector<2x48xf32>
    %337 = vector.extract_strided_slice %330 {offsets = [0, 48], sizes = [2, 16], strides = [1, 1]} : vector<2x64xf32> to vector<2x16xf32>
    %338 = math.tanh %337 : vector<2x16xf32>
    %339 = vector.extract_strided_slice %336 {offsets = [0, 0], sizes = [2, 16], strides = [1, 1]} : vector<2x48xf32> to vector<2x16xf32>
    %340 = vector.extract_strided_slice %336 {offsets = [0, 16], sizes = [2, 16], strides = [1, 1]} : vector<2x48xf32> to vector<2x16xf32>
    %341 = vector.extract_strided_slice %336 {offsets = [0, 32], sizes = [2, 16], strides = [1, 1]} : vector<2x48xf32> to vector<2x16xf32>
    %342 = arith.mulf %340, %326 : vector<2x16xf32>
    %343 = arith.mulf %339, %338 : vector<2x16xf32>
    %344 = arith.addf %342, %343 : vector<2x16xf32>
    %345 = math.tanh %344 : vector<2x16xf32>
    %346 = arith.mulf %341, %345 : vector<2x16xf32>
    %c0_114 = arith.constant 0 : index
    %c0_115 = arith.constant 0 : index
    %347 = vector.load %arg26[%c0_114, %c0_115] : memref<16x32xf32, #tpu.memory_space<vmem>>, vector<2x16xf32>
    tpu.vector_store %arg26[%c0_114, %c0_115], %346 {strides = array<i32>} : memref<16x32xf32, #tpu.memory_space<vmem>>, vector<2x16xf32>,
    %c14_116 = arith.constant 14 : index
    %c0_117 = arith.constant 0 : index
    %348 = vector.load %arg24[%c14_116, %c0_117] : memref<16x64xf32, #tpu.memory_space<vmem>>, vector<2x64xf32>
    %cst_118 = arith.constant dense<0.000000e+00> : vector<2x64xf32>
    %349 = tpu.matmul %325, %323, %cst_118 {dimension_numbers = #tpu.dot_dimension_numbers<[1], [0], [0], [1], [0, 0, 1, 1], [], []>} : vector<2x16xf32>, vector<16x64xf32>, vector<2x64xf32> -> vector<2x64xf32>
    %350 = arith.addf %348, %349 : vector<2x64xf32>
    %351 = vector.extract_strided_slice %350 {offsets = [0, 0], sizes = [2, 48], strides = [1, 1]} : vector<2x64xf32> to vector<2x48xf32>
    %352 = arith.negf %351 : vector<2x48xf32>
    %353 = math.exp %352 : vector<2x48xf32>
    %cst_119 = arith.constant 1.000000e+00 : f32
    %354 = vector.broadcast %cst_119 : f32 to vector<2x48xf32>
    %355 = arith.addf %354, %353 : vector<2x48xf32>
    %356 = arith.divf %354, %355 : vector<2x48xf32>
    %357 = vector.extract_strided_slice %350 {offsets = [0, 48], sizes = [2, 16], strides = [1, 1]} : vector<2x64xf32> to vector<2x16xf32>
    %358 = math.tanh %357 : vector<2x16xf32>
    %359 = vector.extract_strided_slice %356 {offsets = [0, 0], sizes = [2, 16], strides = [1, 1]} : vector<2x48xf32> to vector<2x16xf32>
    %360 = vector.extract_strided_slice %356 {offsets = [0, 16], sizes = [2, 16], strides = [1, 1]} : vector<2x48xf32> to vector<2x16xf32>
    %361 = vector.extract_strided_slice %356 {offsets = [0, 32], sizes = [2, 16], strides = [1, 1]} : vector<2x48xf32> to vector<2x16xf32>
    %362 = arith.mulf %360, %327 : vector<2x16xf32>
    %363 = arith.mulf %359, %358 : vector<2x16xf32>
    %364 = arith.addf %362, %363 : vector<2x16xf32>
    %365 = math.tanh %364 : vector<2x16xf32>
    %366 = arith.mulf %361, %365 : vector<2x16xf32>
    %c14_120 = arith.constant 14 : index
    %c16 = arith.constant 16 : index
    %367 = vector.load %arg26[%c14_120, %c16] : memref<16x32xf32, #tpu.memory_space<vmem>>, vector<2x16xf32>
    tpu.vector_store %arg26[%c14_120, %c16], %366 {strides = array<i32>} : memref<16x32xf32, #tpu.memory_space<vmem>>, vector<2x16xf32>,
    %c2_121 = arith.constant 2 : index
    %c0_122 = arith.constant 0 : index
    %368 = vector.load %arg23[%c2_121, %c0_122] : memref<16x64xf32, #tpu.memory_space<vmem>>, vector<2x64xf32>
    %cst_123 = arith.constant dense<0.000000e+00> : vector<2x64xf32>
    %369 = tpu.matmul %346, %322, %cst_123 {dimension_numbers = #tpu.dot_dimension_numbers<[1], [0], [0], [1], [0, 0, 1, 1], [], []>} : vector<2x16xf32>, vector<16x64xf32>, vector<2x64xf32> -> vector<2x64xf32>
    %370 = arith.addf %368, %369 : vector<2x64xf32>
    %371 = vector.extract_strided_slice %370 {offsets = [0, 0], sizes = [2, 48], strides = [1, 1]} : vector<2x64xf32> to vector<2x48xf32>
    %372 = arith.negf %371 : vector<2x48xf32>
    %373 = math.exp %372 : vector<2x48xf32>
    %cst_124 = arith.constant 1.000000e+00 : f32
    %374 = vector.broadcast %cst_124 : f32 to vector<2x48xf32>
    %375 = arith.addf %374, %373 : vector<2x48xf32>
    %376 = arith.divf %374, %375 : vector<2x48xf32>
    %377 = vector.extract_strided_slice %370 {offsets = [0, 48], sizes = [2, 16], strides = [1, 1]} : vector<2x64xf32> to vector<2x16xf32>
    %378 = math.tanh %377 : vector<2x16xf32>
    %379 = vector.extract_strided_slice %376 {offsets = [0, 0], sizes = [2, 16], strides = [1, 1]} : vector<2x48xf32> to vector<2x16xf32>
    %380 = vector.extract_strided_slice %376 {offsets = [0, 16], sizes = [2, 16], strides = [1, 1]} : vector<2x48xf32> to vector<2x16xf32>
    %381 = vector.extract_strided_slice %376 {offsets = [0, 32], sizes = [2, 16], strides = [1, 1]} : vector<2x48xf32> to vector<2x16xf32>
    %382 = arith.mulf %380, %344 : vector<2x16xf32>
    %383 = arith.mulf %379, %378 : vector<2x16xf32>
    %384 = arith.addf %382, %383 : vector<2x16xf32>
    %385 = math.tanh %384 : vector<2x16xf32>
    %386 = arith.mulf %381, %385 : vector<2x16xf32>
    %c2_125 = arith.constant 2 : index
    %c0_126 = arith.constant 0 : index
    %387 = vector.load %arg26[%c2_125, %c0_126] : memref<16x32xf32, #tpu.memory_space<vmem>>, vector<2x16xf32>
    tpu.vector_store %arg26[%c2_125, %c0_126], %386 {strides = array<i32>} : memref<16x32xf32, #tpu.memory_space<vmem>>, vector<2x16xf32>,
    %c12_127 = arith.constant 12 : index
    %c0_128 = arith.constant 0 : index
    %388 = vector.load %arg24[%c12_127, %c0_128] : memref<16x64xf32, #tpu.memory_space<vmem>>, vector<2x64xf32>
    %cst_129 = arith.constant dense<0.000000e+00> : vector<2x64xf32>
    %389 = tpu.matmul %366, %323, %cst_129 {dimension_numbers = #tpu.dot_dimension_numbers<[1], [0], [0], [1], [0, 0, 1, 1], [], []>} : vector<2x16xf32>, vector<16x64xf32>, vector<2x64xf32> -> vector<2x64xf32>
    %390 = arith.addf %388, %389 : vector<2x64xf32>
    %391 = vector.extract_strided_slice %390 {offsets = [0, 0], sizes = [2, 48], strides = [1, 1]} : vector<2x64xf32> to vector<2x48xf32>
    %392 = arith.negf %391 : vector<2x48xf32>
    %393 = math.exp %392 : vector<2x48xf32>
    %cst_130 = arith.constant 1.000000e+00 : f32
    %394 = vector.broadcast %cst_130 : f32 to vector<2x48xf32>
    %395 = arith.addf %394, %393 : vector<2x48xf32>
    %396 = arith.divf %394, %395 : vector<2x48xf32>
    %397 = vector.extract_strided_slice %390 {offsets = [0, 48], sizes = [2, 16], strides = [1, 1]} : vector<2x64xf32> to vector<2x16xf32>
    %398 = math.tanh %397 : vector<2x16xf32>
    %399 = vector.extract_strided_slice %396 {offsets = [0, 0], sizes = [2, 16], strides = [1, 1]} : vector<2x48xf32> to vector<2x16xf32>
    %400 = vector.extract_strided_slice %396 {offsets = [0, 16], sizes = [2, 16], strides = [1, 1]} : vector<2x48xf32> to vector<2x16xf32>
    %401 = vector.extract_strided_slice %396 {offsets = [0, 32], sizes = [2, 16], strides = [1, 1]} : vector<2x48xf32> to vector<2x16xf32>
    %402 = arith.mulf %400, %364 : vector<2x16xf32>
    %403 = arith.mulf %399, %398 : vector<2x16xf32>
    %404 = arith.addf %402, %403 : vector<2x16xf32>
    %405 = math.tanh %404 : vector<2x16xf32>
    %406 = arith.mulf %401, %405 : vector<2x16xf32>
    %c12_131 = arith.constant 12 : index
    %c16_132 = arith.constant 16 : index
    %407 = vector.load %arg26[%c12_131, %c16_132] : memref<16x32xf32, #tpu.memory_space<vmem>>, vector<2x16xf32>
    tpu.vector_store %arg26[%c12_131, %c16_132], %406 {strides = array<i32>} : memref<16x32xf32, #tpu.memory_space<vmem>>, vector<2x16xf32>,
    %c4_133 = arith.constant 4 : index
    %c0_134 = arith.constant 0 : index
    %408 = vector.load %arg23[%c4_133, %c0_134] : memref<16x64xf32, #tpu.memory_space<vmem>>, vector<2x64xf32>
    %cst_135 = arith.constant dense<0.000000e+00> : vector<2x64xf32>
    %409 = tpu.matmul %386, %322, %cst_135 {dimension_numbers = #tpu.dot_dimension_numbers<[1], [0], [0], [1], [0, 0, 1, 1], [], []>} : vector<2x16xf32>, vector<16x64xf32>, vector<2x64xf32> -> vector<2x64xf32>
    %410 = arith.addf %408, %409 : vector<2x64xf32>
    %411 = vector.extract_strided_slice %410 {offsets = [0, 0], sizes = [2, 48], strides = [1, 1]} : vector<2x64xf32> to vector<2x48xf32>
    %412 = arith.negf %411 : vector<2x48xf32>
    %413 = math.exp %412 : vector<2x48xf32>
    %cst_136 = arith.constant 1.000000e+00 : f32
    %414 = vector.broadcast %cst_136 : f32 to vector<2x48xf32>
    %415 = arith.addf %414, %413 : vector<2x48xf32>
    %416 = arith.divf %414, %415 : vector<2x48xf32>
    %417 = vector.extract_strided_slice %410 {offsets = [0, 48], sizes = [2, 16], strides = [1, 1]} : vector<2x64xf32> to vector<2x16xf32>
    %418 = math.tanh %417 : vector<2x16xf32>
    %419 = vector.extract_strided_slice %416 {offsets = [0, 0], sizes = [2, 16], strides = [1, 1]} : vector<2x48xf32> to vector<2x16xf32>
    %420 = vector.extract_strided_slice %416 {offsets = [0, 16], sizes = [2, 16], strides = [1, 1]} : vector<2x48xf32> to vector<2x16xf32>
    %421 = vector.extract_strided_slice %416 {offsets = [0, 32], sizes = [2, 16], strides = [1, 1]} : vector<2x48xf32> to vector<2x16xf32>
    %422 = arith.mulf %420, %384 : vector<2x16xf32>
    %423 = arith.mulf %419, %418 : vector<2x16xf32>
    %424 = arith.addf %422, %423 : vector<2x16xf32>
    %425 = math.tanh %424 : vector<2x16xf32>
    %426 = arith.mulf %421, %425 : vector<2x16xf32>
    %c4_137 = arith.constant 4 : index
    %c0_138 = arith.constant 0 : index
    %427 = vector.load %arg26[%c4_137, %c0_138] : memref<16x32xf32, #tpu.memory_space<vmem>>, vector<2x16xf32>
    tpu.vector_store %arg26[%c4_137, %c0_138], %426 {strides = array<i32>} : memref<16x32xf32, #tpu.memory_space<vmem>>, vector<2x16xf32>,
    %c10_139 = arith.constant 10 : index
    %c0_140 = arith.constant 0 : index
    %428 = vector.load %arg24[%c10_139, %c0_140] : memref<16x64xf32, #tpu.memory_space<vmem>>, vector<2x64xf32>
    %cst_141 = arith.constant dense<0.000000e+00> : vector<2x64xf32>
    %429 = tpu.matmul %406, %323, %cst_141 {dimension_numbers = #tpu.dot_dimension_numbers<[1], [0], [0], [1], [0, 0, 1, 1], [], []>} : vector<2x16xf32>, vector<16x64xf32>, vector<2x64xf32> -> vector<2x64xf32>
    %430 = arith.addf %428, %429 : vector<2x64xf32>
    %431 = vector.extract_strided_slice %430 {offsets = [0, 0], sizes = [2, 48], strides = [1, 1]} : vector<2x64xf32> to vector<2x48xf32>
    %432 = arith.negf %431 : vector<2x48xf32>
    %433 = math.exp %432 : vector<2x48xf32>
    %cst_142 = arith.constant 1.000000e+00 : f32
    %434 = vector.broadcast %cst_142 : f32 to vector<2x48xf32>
    %435 = arith.addf %434, %433 : vector<2x48xf32>
    %436 = arith.divf %434, %435 : vector<2x48xf32>
    %437 = vector.extract_strided_slice %430 {offsets = [0, 48], sizes = [2, 16], strides = [1, 1]} : vector<2x64xf32> to vector<2x16xf32>
    %438 = math.tanh %437 : vector<2x16xf32>
    %439 = vector.extract_strided_slice %436 {offsets = [0, 0], sizes = [2, 16], strides = [1, 1]} : vector<2x48xf32> to vector<2x16xf32>
    %440 = vector.extract_strided_slice %436 {offsets = [0, 16], sizes = [2, 16], strides = [1, 1]} : vector<2x48xf32> to vector<2x16xf32>
    %441 = vector.extract_strided_slice %436 {offsets = [0, 32], sizes = [2, 16], strides = [1, 1]} : vector<2x48xf32> to vector<2x16xf32>
    %442 = arith.mulf %440, %404 : vector<2x16xf32>
    %443 = arith.mulf %439, %438 : vector<2x16xf32>
    %444 = arith.addf %442, %443 : vector<2x16xf32>
    %445 = math.tanh %444 : vector<2x16xf32>
    %446 = arith.mulf %441, %445 : vector<2x16xf32>
    %c10_143 = arith.constant 10 : index
    %c16_144 = arith.constant 16 : index
    %447 = vector.load %arg26[%c10_143, %c16_144] : memref<16x32xf32, #tpu.memory_space<vmem>>, vector<2x16xf32>
    tpu.vector_store %arg26[%c10_143, %c16_144], %446 {strides = array<i32>} : memref<16x32xf32, #tpu.memory_space<vmem>>, vector<2x16xf32>,
    %c6_145 = arith.constant 6 : index
    %c0_146 = arith.constant 0 : index
    %448 = vector.load %arg23[%c6_145, %c0_146] : memref<16x64xf32, #tpu.memory_space<vmem>>, vector<2x64xf32>
    %cst_147 = arith.constant dense<0.000000e+00> : vector<2x64xf32>
    %449 = tpu.matmul %426, %322, %cst_147 {dimension_numbers = #tpu.dot_dimension_numbers<[1], [0], [0], [1], [0, 0, 1, 1], [], []>} : vector<2x16xf32>, vector<16x64xf32>, vector<2x64xf32> -> vector<2x64xf32>
    %450 = arith.addf %448, %449 : vector<2x64xf32>
    %451 = vector.extract_strided_slice %450 {offsets = [0, 0], sizes = [2, 48], strides = [1, 1]} : vector<2x64xf32> to vector<2x48xf32>
    %452 = arith.negf %451 : vector<2x48xf32>
    %453 = math.exp %452 : vector<2x48xf32>
    %cst_148 = arith.constant 1.000000e+00 : f32
    %454 = vector.broadcast %cst_148 : f32 to vector<2x48xf32>
    %455 = arith.addf %454, %453 : vector<2x48xf32>
    %456 = arith.divf %454, %455 : vector<2x48xf32>
    %457 = vector.extract_strided_slice %450 {offsets = [0, 48], sizes = [2, 16], strides = [1, 1]} : vector<2x64xf32> to vector<2x16xf32>
    %458 = math.tanh %457 : vector<2x16xf32>
    %459 = vector.extract_strided_slice %456 {offsets = [0, 0], sizes = [2, 16], strides = [1, 1]} : vector<2x48xf32> to vector<2x16xf32>
    %460 = vector.extract_strided_slice %456 {offsets = [0, 16], sizes = [2, 16], strides = [1, 1]} : vector<2x48xf32> to vector<2x16xf32>
    %461 = vector.extract_strided_slice %456 {offsets = [0, 32], sizes = [2, 16], strides = [1, 1]} : vector<2x48xf32> to vector<2x16xf32>
    %462 = arith.mulf %460, %424 : vector<2x16xf32>
    %463 = arith.mulf %459, %458 : vector<2x16xf32>
    %464 = arith.addf %462, %463 : vector<2x16xf32>
    %465 = math.tanh %464 : vector<2x16xf32>
    %466 = arith.mulf %461, %465 : vector<2x16xf32>
    %c6_149 = arith.constant 6 : index
    %c0_150 = arith.constant 0 : index
    %467 = vector.load %arg26[%c6_149, %c0_150] : memref<16x32xf32, #tpu.memory_space<vmem>>, vector<2x16xf32>
    tpu.vector_store %arg26[%c6_149, %c0_150], %466 {strides = array<i32>} : memref<16x32xf32, #tpu.memory_space<vmem>>, vector<2x16xf32>,
    %c8_151 = arith.constant 8 : index
    %c0_152 = arith.constant 0 : index
    %468 = vector.load %arg24[%c8_151, %c0_152] : memref<16x64xf32, #tpu.memory_space<vmem>>, vector<2x64xf32>
    %cst_153 = arith.constant dense<0.000000e+00> : vector<2x64xf32>
    %469 = tpu.matmul %446, %323, %cst_153 {dimension_numbers = #tpu.dot_dimension_numbers<[1], [0], [0], [1], [0, 0, 1, 1], [], []>} : vector<2x16xf32>, vector<16x64xf32>, vector<2x64xf32> -> vector<2x64xf32>
    %470 = arith.addf %468, %469 : vector<2x64xf32>
    %471 = vector.extract_strided_slice %470 {offsets = [0, 0], sizes = [2, 48], strides = [1, 1]} : vector<2x64xf32> to vector<2x48xf32>
    %472 = arith.negf %471 : vector<2x48xf32>
    %473 = math.exp %472 : vector<2x48xf32>
    %cst_154 = arith.constant 1.000000e+00 : f32
    %474 = vector.broadcast %cst_154 : f32 to vector<2x48xf32>
    %475 = arith.addf %474, %473 : vector<2x48xf32>
    %476 = arith.divf %474, %475 : vector<2x48xf32>
    %477 = vector.extract_strided_slice %470 {offsets = [0, 48], sizes = [2, 16], strides = [1, 1]} : vector<2x64xf32> to vector<2x16xf32>
    %478 = math.tanh %477 : vector<2x16xf32>
    %479 = vector.extract_strided_slice %476 {offsets = [0, 0], sizes = [2, 16], strides = [1, 1]} : vector<2x48xf32> to vector<2x16xf32>
    %480 = vector.extract_strided_slice %476 {offsets = [0, 16], sizes = [2, 16], strides = [1, 1]} : vector<2x48xf32> to vector<2x16xf32>
    %481 = vector.extract_strided_slice %476 {offsets = [0, 32], sizes = [2, 16], strides = [1, 1]} : vector<2x48xf32> to vector<2x16xf32>
    %482 = arith.mulf %480, %444 : vector<2x16xf32>
    %483 = arith.mulf %479, %478 : vector<2x16xf32>
    %484 = arith.addf %482, %483 : vector<2x16xf32>
    %485 = math.tanh %484 : vector<2x16xf32>
    %486 = arith.mulf %481, %485 : vector<2x16xf32>
    %c8_155 = arith.constant 8 : index
    %c16_156 = arith.constant 16 : index
    %487 = vector.load %arg26[%c8_155, %c16_156] : memref<16x32xf32, #tpu.memory_space<vmem>>, vector<2x16xf32>
    tpu.vector_store %arg26[%c8_155, %c16_156], %486 {strides = array<i32>} : memref<16x32xf32, #tpu.memory_space<vmem>>, vector<2x16xf32>,
    %c8_157 = arith.constant 8 : index
    %c0_158 = arith.constant 0 : index
    %488 = vector.load %arg23[%c8_157, %c0_158] : memref<16x64xf32, #tpu.memory_space<vmem>>, vector<2x64xf32>
    %cst_159 = arith.constant dense<0.000000e+00> : vector<2x64xf32>
    %489 = tpu.matmul %466, %322, %cst_159 {dimension_numbers = #tpu.dot_dimension_numbers<[1], [0], [0], [1], [0, 0, 1, 1], [], []>} : vector<2x16xf32>, vector<16x64xf32>, vector<2x64xf32> -> vector<2x64xf32>
    %490 = arith.addf %488, %489 : vector<2x64xf32>
    %491 = vector.extract_strided_slice %490 {offsets = [0, 0], sizes = [2, 48], strides = [1, 1]} : vector<2x64xf32> to vector<2x48xf32>
    %492 = arith.negf %491 : vector<2x48xf32>
    %493 = math.exp %492 : vector<2x48xf32>
    %cst_160 = arith.constant 1.000000e+00 : f32
    %494 = vector.broadcast %cst_160 : f32 to vector<2x48xf32>
    %495 = arith.addf %494, %493 : vector<2x48xf32>
    %496 = arith.divf %494, %495 : vector<2x48xf32>
    %497 = vector.extract_strided_slice %490 {offsets = [0, 48], sizes = [2, 16], strides = [1, 1]} : vector<2x64xf32> to vector<2x16xf32>
    %498 = math.tanh %497 : vector<2x16xf32>
    %499 = vector.extract_strided_slice %496 {offsets = [0, 0], sizes = [2, 16], strides = [1, 1]} : vector<2x48xf32> to vector<2x16xf32>
    %500 = vector.extract_strided_slice %496 {offsets = [0, 16], sizes = [2, 16], strides = [1, 1]} : vector<2x48xf32> to vector<2x16xf32>
    %501 = vector.extract_strided_slice %496 {offsets = [0, 32], sizes = [2, 16], strides = [1, 1]} : vector<2x48xf32> to vector<2x16xf32>
    %502 = arith.mulf %500, %464 : vector<2x16xf32>
    %503 = arith.mulf %499, %498 : vector<2x16xf32>
    %504 = arith.addf %502, %503 : vector<2x16xf32>
    %505 = math.tanh %504 : vector<2x16xf32>
    %506 = arith.mulf %501, %505 : vector<2x16xf32>
    %c8_161 = arith.constant 8 : index
    %c0_162 = arith.constant 0 : index
    %507 = vector.load %arg26[%c8_161, %c0_162] : memref<16x32xf32, #tpu.memory_space<vmem>>, vector<2x16xf32>
    tpu.vector_store %arg26[%c8_161, %c0_162], %506 {strides = array<i32>} : memref<16x32xf32, #tpu.memory_space<vmem>>, vector<2x16xf32>,
    %c6_163 = arith.constant 6 : index
    %c0_164 = arith.constant 0 : index
    %508 = vector.load %arg24[%c6_163, %c0_164] : memref<16x64xf32, #tpu.memory_space<vmem>>, vector<2x64xf32>
    %cst_165 = arith.constant dense<0.000000e+00> : vector<2x64xf32>
    %509 = tpu.matmul %486, %323, %cst_165 {dimension_numbers = #tpu.dot_dimension_numbers<[1], [0], [0], [1], [0, 0, 1, 1], [], []>} : vector<2x16xf32>, vector<16x64xf32>, vector<2x64xf32> -> vector<2x64xf32>
    %510 = arith.addf %508, %509 : vector<2x64xf32>
    %511 = vector.extract_strided_slice %510 {offsets = [0, 0], sizes = [2, 48], strides = [1, 1]} : vector<2x64xf32> to vector<2x48xf32>
    %512 = arith.negf %511 : vector<2x48xf32>
    %513 = math.exp %512 : vector<2x48xf32>
    %cst_166 = arith.constant 1.000000e+00 : f32
    %514 = vector.broadcast %cst_166 : f32 to vector<2x48xf32>
    %515 = arith.addf %514, %513 : vector<2x48xf32>
    %516 = arith.divf %514, %515 : vector<2x48xf32>
    %517 = vector.extract_strided_slice %510 {offsets = [0, 48], sizes = [2, 16], strides = [1, 1]} : vector<2x64xf32> to vector<2x16xf32>
    %518 = math.tanh %517 : vector<2x16xf32>
    %519 = vector.extract_strided_slice %516 {offsets = [0, 0], sizes = [2, 16], strides = [1, 1]} : vector<2x48xf32> to vector<2x16xf32>
    %520 = vector.extract_strided_slice %516 {offsets = [0, 16], sizes = [2, 16], strides = [1, 1]} : vector<2x48xf32> to vector<2x16xf32>
    %521 = vector.extract_strided_slice %516 {offsets = [0, 32], sizes = [2, 16], strides = [1, 1]} : vector<2x48xf32> to vector<2x16xf32>
    %522 = arith.mulf %520, %484 : vector<2x16xf32>
    %523 = arith.mulf %519, %518 : vector<2x16xf32>
    %524 = arith.addf %522, %523 : vector<2x16xf32>
    %525 = math.tanh %524 : vector<2x16xf32>
    %526 = arith.mulf %521, %525 : vector<2x16xf32>
    %c6_167 = arith.constant 6 : index
    %c16_168 = arith.constant 16 : index
    %527 = vector.load %arg26[%c6_167, %c16_168] : memref<16x32xf32, #tpu.memory_space<vmem>>, vector<2x16xf32>
    tpu.vector_store %arg26[%c6_167, %c16_168], %526 {strides = array<i32>} : memref<16x32xf32, #tpu.memory_space<vmem>>, vector<2x16xf32>,
    %c10_169 = arith.constant 10 : index
    %c0_170 = arith.constant 0 : index
    %528 = vector.load %arg23[%c10_169, %c0_170] : memref<16x64xf32, #tpu.memory_space<vmem>>, vector<2x64xf32>
    %cst_171 = arith.constant dense<0.000000e+00> : vector<2x64xf32>
    %529 = tpu.matmul %506, %322, %cst_171 {dimension_numbers = #tpu.dot_dimension_numbers<[1], [0], [0], [1], [0, 0, 1, 1], [], []>} : vector<2x16xf32>, vector<16x64xf32>, vector<2x64xf32> -> vector<2x64xf32>
    %530 = arith.addf %528, %529 : vector<2x64xf32>
    %531 = vector.extract_strided_slice %530 {offsets = [0, 0], sizes = [2, 48], strides = [1, 1]} : vector<2x64xf32> to vector<2x48xf32>
    %532 = arith.negf %531 : vector<2x48xf32>
    %533 = math.exp %532 : vector<2x48xf32>
    %cst_172 = arith.constant 1.000000e+00 : f32
    %534 = vector.broadcast %cst_172 : f32 to vector<2x48xf32>
    %535 = arith.addf %534, %533 : vector<2x48xf32>
    %536 = arith.divf %534, %535 : vector<2x48xf32>
    %537 = vector.extract_strided_slice %530 {offsets = [0, 48], sizes = [2, 16], strides = [1, 1]} : vector<2x64xf32> to vector<2x16xf32>
    %538 = math.tanh %537 : vector<2x16xf32>
    %539 = vector.extract_strided_slice %536 {offsets = [0, 0], sizes = [2, 16], strides = [1, 1]} : vector<2x48xf32> to vector<2x16xf32>
    %540 = vector.extract_strided_slice %536 {offsets = [0, 16], sizes = [2, 16], strides = [1, 1]} : vector<2x48xf32> to vector<2x16xf32>
    %541 = vector.extract_strided_slice %536 {offsets = [0, 32], sizes = [2, 16], strides = [1, 1]} : vector<2x48xf32> to vector<2x16xf32>
    %542 = arith.mulf %540, %504 : vector<2x16xf32>
    %543 = arith.mulf %539, %538 : vector<2x16xf32>
    %544 = arith.addf %542, %543 : vector<2x16xf32>
    %545 = math.tanh %544 : vector<2x16xf32>
    %546 = arith.mulf %541, %545 : vector<2x16xf32>
    %c10_173 = arith.constant 10 : index
    %c0_174 = arith.constant 0 : index
    %547 = vector.load %arg26[%c10_173, %c0_174] : memref<16x32xf32, #tpu.memory_space<vmem>>, vector<2x16xf32>
    tpu.vector_store %arg26[%c10_173, %c0_174], %546 {strides = array<i32>} : memref<16x32xf32, #tpu.memory_space<vmem>>, vector<2x16xf32>,
    %c4_175 = arith.constant 4 : index
    %c0_176 = arith.constant 0 : index
    %548 = vector.load %arg24[%c4_175, %c0_176] : memref<16x64xf32, #tpu.memory_space<vmem>>, vector<2x64xf32>
    %cst_177 = arith.constant dense<0.000000e+00> : vector<2x64xf32>
    %549 = tpu.matmul %526, %323, %cst_177 {dimension_numbers = #tpu.dot_dimension_numbers<[1], [0], [0], [1], [0, 0, 1, 1], [], []>} : vector<2x16xf32>, vector<16x64xf32>, vector<2x64xf32> -> vector<2x64xf32>
    %550 = arith.addf %548, %549 : vector<2x64xf32>
    %551 = vector.extract_strided_slice %550 {offsets = [0, 0], sizes = [2, 48], strides = [1, 1]} : vector<2x64xf32> to vector<2x48xf32>
    %552 = arith.negf %551 : vector<2x48xf32>
    %553 = math.exp %552 : vector<2x48xf32>
    %cst_178 = arith.constant 1.000000e+00 : f32
    %554 = vector.broadcast %cst_178 : f32 to vector<2x48xf32>
    %555 = arith.addf %554, %553 : vector<2x48xf32>
    %556 = arith.divf %554, %555 : vector<2x48xf32>
    %557 = vector.extract_strided_slice %550 {offsets = [0, 48], sizes = [2, 16], strides = [1, 1]} : vector<2x64xf32> to vector<2x16xf32>
    %558 = math.tanh %557 : vector<2x16xf32>
    %559 = vector.extract_strided_slice %556 {offsets = [0, 0], sizes = [2, 16], strides = [1, 1]} : vector<2x48xf32> to vector<2x16xf32>
    %560 = vector.extract_strided_slice %556 {offsets = [0, 16], sizes = [2, 16], strides = [1, 1]} : vector<2x48xf32> to vector<2x16xf32>
    %561 = vector.extract_strided_slice %556 {offsets = [0, 32], sizes = [2, 16], strides = [1, 1]} : vector<2x48xf32> to vector<2x16xf32>
    %562 = arith.mulf %560, %524 : vector<2x16xf32>
    %563 = arith.mulf %559, %558 : vector<2x16xf32>
    %564 = arith.addf %562, %563 : vector<2x16xf32>
    %565 = math.tanh %564 : vector<2x16xf32>
    %566 = arith.mulf %561, %565 : vector<2x16xf32>
    %c4_179 = arith.constant 4 : index
    %c16_180 = arith.constant 16 : index
    %567 = vector.load %arg26[%c4_179, %c16_180] : memref<16x32xf32, #tpu.memory_space<vmem>>, vector<2x16xf32>
    tpu.vector_store %arg26[%c4_179, %c16_180], %566 {strides = array<i32>} : memref<16x32xf32, #tpu.memory_space<vmem>>, vector<2x16xf32>,
    %c12_181 = arith.constant 12 : index
    %c0_182 = arith.constant 0 : index
    %568 = vector.load %arg23[%c12_181, %c0_182] : memref<16x64xf32, #tpu.memory_space<vmem>>, vector<2x64xf32>
    %cst_183 = arith.constant dense<0.000000e+00> : vector<2x64xf32>
    %569 = tpu.matmul %546, %322, %cst_183 {dimension_numbers = #tpu.dot_dimension_numbers<[1], [0], [0], [1], [0, 0, 1, 1], [], []>} : vector<2x16xf32>, vector<16x64xf32>, vector<2x64xf32> -> vector<2x64xf32>
    %570 = arith.addf %568, %569 : vector<2x64xf32>
    %571 = vector.extract_strided_slice %570 {offsets = [0, 0], sizes = [2, 48], strides = [1, 1]} : vector<2x64xf32> to vector<2x48xf32>
    %572 = arith.negf %571 : vector<2x48xf32>
    %573 = math.exp %572 : vector<2x48xf32>
    %cst_184 = arith.constant 1.000000e+00 : f32
    %574 = vector.broadcast %cst_184 : f32 to vector<2x48xf32>
    %575 = arith.addf %574, %573 : vector<2x48xf32>
    %576 = arith.divf %574, %575 : vector<2x48xf32>
    %577 = vector.extract_strided_slice %570 {offsets = [0, 48], sizes = [2, 16], strides = [1, 1]} : vector<2x64xf32> to vector<2x16xf32>
    %578 = math.tanh %577 : vector<2x16xf32>
    %579 = vector.extract_strided_slice %576 {offsets = [0, 0], sizes = [2, 16], strides = [1, 1]} : vector<2x48xf32> to vector<2x16xf32>
    %580 = vector.extract_strided_slice %576 {offsets = [0, 16], sizes = [2, 16], strides = [1, 1]} : vector<2x48xf32> to vector<2x16xf32>
    %581 = vector.extract_strided_slice %576 {offsets = [0, 32], sizes = [2, 16], strides = [1, 1]} : vector<2x48xf32> to vector<2x16xf32>
    %582 = arith.mulf %580, %544 : vector<2x16xf32>
    %583 = arith.mulf %579, %578 : vector<2x16xf32>
    %584 = arith.addf %582, %583 : vector<2x16xf32>
    %585 = math.tanh %584 : vector<2x16xf32>
    %586 = arith.mulf %581, %585 : vector<2x16xf32>
    %c12_185 = arith.constant 12 : index
    %c0_186 = arith.constant 0 : index
    %587 = vector.load %arg26[%c12_185, %c0_186] : memref<16x32xf32, #tpu.memory_space<vmem>>, vector<2x16xf32>
    tpu.vector_store %arg26[%c12_185, %c0_186], %586 {strides = array<i32>} : memref<16x32xf32, #tpu.memory_space<vmem>>, vector<2x16xf32>,
    %c2_187 = arith.constant 2 : index
    %c0_188 = arith.constant 0 : index
    %588 = vector.load %arg24[%c2_187, %c0_188] : memref<16x64xf32, #tpu.memory_space<vmem>>, vector<2x64xf32>
    %cst_189 = arith.constant dense<0.000000e+00> : vector<2x64xf32>
    %589 = tpu.matmul %566, %323, %cst_189 {dimension_numbers = #tpu.dot_dimension_numbers<[1], [0], [0], [1], [0, 0, 1, 1], [], []>} : vector<2x16xf32>, vector<16x64xf32>, vector<2x64xf32> -> vector<2x64xf32>
    %590 = arith.addf %588, %589 : vector<2x64xf32>
    %591 = vector.extract_strided_slice %590 {offsets = [0, 0], sizes = [2, 48], strides = [1, 1]} : vector<2x64xf32> to vector<2x48xf32>
    %592 = arith.negf %591 : vector<2x48xf32>
    %593 = math.exp %592 : vector<2x48xf32>
    %cst_190 = arith.constant 1.000000e+00 : f32
    %594 = vector.broadcast %cst_190 : f32 to vector<2x48xf32>
    %595 = arith.addf %594, %593 : vector<2x48xf32>
    %596 = arith.divf %594, %595 : vector<2x48xf32>
    %597 = vector.extract_strided_slice %590 {offsets = [0, 48], sizes = [2, 16], strides = [1, 1]} : vector<2x64xf32> to vector<2x16xf32>
    %598 = math.tanh %597 : vector<2x16xf32>
    %599 = vector.extract_strided_slice %596 {offsets = [0, 0], sizes = [2, 16], strides = [1, 1]} : vector<2x48xf32> to vector<2x16xf32>
    %600 = vector.extract_strided_slice %596 {offsets = [0, 16], sizes = [2, 16], strides = [1, 1]} : vector<2x48xf32> to vector<2x16xf32>
    %601 = vector.extract_strided_slice %596 {offsets = [0, 32], sizes = [2, 16], strides = [1, 1]} : vector<2x48xf32> to vector<2x16xf32>
    %602 = arith.mulf %600, %564 : vector<2x16xf32>
    %603 = arith.mulf %599, %598 : vector<2x16xf32>
    %604 = arith.addf %602, %603 : vector<2x16xf32>
    %605 = math.tanh %604 : vector<2x16xf32>
    %606 = arith.mulf %601, %605 : vector<2x16xf32>
    %c2_191 = arith.constant 2 : index
    %c16_192 = arith.constant 16 : index
    %607 = vector.load %arg26[%c2_191, %c16_192] : memref<16x32xf32, #tpu.memory_space<vmem>>, vector<2x16xf32>
    tpu.vector_store %arg26[%c2_191, %c16_192], %606 {strides = array<i32>} : memref<16x32xf32, #tpu.memory_space<vmem>>, vector<2x16xf32>,
    %c14_193 = arith.constant 14 : index
    %c0_194 = arith.constant 0 : index
    %608 = vector.load %arg23[%c14_193, %c0_194] : memref<16x64xf32, #tpu.memory_space<vmem>>, vector<2x64xf32>
    %cst_195 = arith.constant dense<0.000000e+00> : vector<2x64xf32>
    %609 = tpu.matmul %586, %322, %cst_195 {dimension_numbers = #tpu.dot_dimension_numbers<[1], [0], [0], [1], [0, 0, 1, 1], [], []>} : vector<2x16xf32>, vector<16x64xf32>, vector<2x64xf32> -> vector<2x64xf32>
    %610 = arith.addf %608, %609 : vector<2x64xf32>
    %611 = vector.extract_strided_slice %610 {offsets = [0, 0], sizes = [2, 48], strides = [1, 1]} : vector<2x64xf32> to vector<2x48xf32>
    %612 = arith.negf %611 : vector<2x48xf32>
    %613 = math.exp %612 : vector<2x48xf32>
    %cst_196 = arith.constant 1.000000e+00 : f32
    %614 = vector.broadcast %cst_196 : f32 to vector<2x48xf32>
    %615 = arith.addf %614, %613 : vector<2x48xf32>
    %616 = arith.divf %614, %615 : vector<2x48xf32>
    %617 = vector.extract_strided_slice %610 {offsets = [0, 48], sizes = [2, 16], strides = [1, 1]} : vector<2x64xf32> to vector<2x16xf32>
    %618 = math.tanh %617 : vector<2x16xf32>
    %619 = vector.extract_strided_slice %616 {offsets = [0, 0], sizes = [2, 16], strides = [1, 1]} : vector<2x48xf32> to vector<2x16xf32>
    %620 = vector.extract_strided_slice %616 {offsets = [0, 16], sizes = [2, 16], strides = [1, 1]} : vector<2x48xf32> to vector<2x16xf32>
    %621 = vector.extract_strided_slice %616 {offsets = [0, 32], sizes = [2, 16], strides = [1, 1]} : vector<2x48xf32> to vector<2x16xf32>
    %622 = arith.mulf %620, %584 : vector<2x16xf32>
    %623 = arith.mulf %619, %618 : vector<2x16xf32>
    %624 = arith.addf %622, %623 : vector<2x16xf32>
    %625 = math.tanh %624 : vector<2x16xf32>
    %626 = arith.mulf %621, %625 : vector<2x16xf32>
    %c14_197 = arith.constant 14 : index
    %c0_198 = arith.constant 0 : index
    %627 = vector.load %arg26[%c14_197, %c0_198] : memref<16x32xf32, #tpu.memory_space<vmem>>, vector<2x16xf32>
    tpu.vector_store %arg26[%c14_197, %c0_198], %626 {strides = array<i32>} : memref<16x32xf32, #tpu.memory_space<vmem>>, vector<2x16xf32>,
    %c0_199 = arith.constant 0 : index
    %c0_200 = arith.constant 0 : index
    %628 = vector.load %arg24[%c0_199, %c0_200] : memref<16x64xf32, #tpu.memory_space<vmem>>, vector<2x64xf32>
    %cst_201 = arith.constant dense<0.000000e+00> : vector<2x64xf32>
    %629 = tpu.matmul %606, %323, %cst_201 {dimension_numbers = #tpu.dot_dimension_numbers<[1], [0], [0], [1], [0, 0, 1, 1], [], []>} : vector<2x16xf32>, vector<16x64xf32>, vector<2x64xf32> -> vector<2x64xf32>
    %630 = arith.addf %628, %629 : vector<2x64xf32>
    %631 = vector.extract_strided_slice %630 {offsets = [0, 0], sizes = [2, 48], strides = [1, 1]} : vector<2x64xf32> to vector<2x48xf32>
    %632 = arith.negf %631 : vector<2x48xf32>
    %633 = math.exp %632 : vector<2x48xf32>
    %cst_202 = arith.constant 1.000000e+00 : f32
    %634 = vector.broadcast %cst_202 : f32 to vector<2x48xf32>
    %635 = arith.addf %634, %633 : vector<2x48xf32>
    %636 = arith.divf %634, %635 : vector<2x48xf32>
    %637 = vector.extract_strided_slice %630 {offsets = [0, 48], sizes = [2, 16], strides = [1, 1]} : vector<2x64xf32> to vector<2x16xf32>
    %638 = math.tanh %637 : vector<2x16xf32>
    %639 = vector.extract_strided_slice %636 {offsets = [0, 0], sizes = [2, 16], strides = [1, 1]} : vector<2x48xf32> to vector<2x16xf32>
    %640 = vector.extract_strided_slice %636 {offsets = [0, 16], sizes = [2, 16], strides = [1, 1]} : vector<2x48xf32> to vector<2x16xf32>
    %641 = vector.extract_strided_slice %636 {offsets = [0, 32], sizes = [2, 16], strides = [1, 1]} : vector<2x48xf32> to vector<2x16xf32>
    %642 = arith.mulf %640, %604 : vector<2x16xf32>
    %643 = arith.mulf %639, %638 : vector<2x16xf32>
    %644 = arith.addf %642, %643 : vector<2x16xf32>
    %645 = math.tanh %644 : vector<2x16xf32>
    %646 = arith.mulf %641, %645 : vector<2x16xf32>
    %c0_203 = arith.constant 0 : index
    %c16_204 = arith.constant 16 : index
    %647 = vector.load %arg26[%c0_203, %c16_204] : memref<16x32xf32, #tpu.memory_space<vmem>>, vector<2x16xf32>
    tpu.vector_store %arg26[%c0_203, %c16_204], %646 {strides = array<i32>} : memref<16x32xf32, #tpu.memory_space<vmem>>, vector<2x16xf32>,
    %c0_205 = arith.constant 0 : index
    %c0_206 = arith.constant 0 : index
    %648 = vector.load %arg26[%c0_205, %c0_206] : memref<16x32xf32, #tpu.memory_space<vmem>>, vector<16x32xf32>
    %c0_207 = arith.constant 0 : index
    %c0_208 = arith.constant 0 : index
    %649 = vector.load %arg16[%c0_207, %c0_208] : memref<32x128xf32, #tpu.memory_space<vmem>>, vector<32x128xf32>
    %cst_209 = arith.constant dense<0.000000e+00> : vector<16x128xf32>
    %650 = tpu.matmul %648, %649, %cst_209 {dimension_numbers = #tpu.dot_dimension_numbers<[1], [0], [0], [1], [0, 0, 1, 1], [], []>} : vector<16x32xf32>, vector<32x128xf32>, vector<16x128xf32> -> vector<16x128xf32>
    %c0_210 = arith.constant 0 : index
    %c0_211 = arith.constant 0 : index
    %651 = vector.load %arg17[%c0_210, %c0_211] : memref<1x128xf32, #tpu.memory_space<vmem>>, vector<1x128xf32>
    %652 = vector.broadcast %651 : vector<1x128xf32> to vector<16x128xf32>
    %653 = arith.addf %650, %652 : vector<16x128xf32>
    %cst_212 = arith.constant 0.000000e+00 : f32
    %654 = vector.broadcast %cst_212 : f32 to vector<16x128xf32>
    %655 = arith.maximumf %653, %654 : vector<16x128xf32>
    %c0_213 = arith.constant 0 : index
    %c0_214 = arith.constant 0 : index
    %656 = vector.load %arg18[%c0_213, %c0_214] : memref<128x11xf32, #tpu.memory_space<vmem>>, vector<128x11xf32>
    %cst_215 = arith.constant dense<0.000000e+00> : vector<16x11xf32>
    %657 = tpu.matmul %655, %656, %cst_215 {dimension_numbers = #tpu.dot_dimension_numbers<[1], [0], [0], [1], [0, 0, 1, 1], [], []>} : vector<16x128xf32>, vector<128x11xf32>, vector<16x11xf32> -> vector<16x11xf32>
    %c0_216 = arith.constant 0 : index
    %c0_217 = arith.constant 0 : index
    %658 = vector.load %arg19[%c0_216, %c0_217] : memref<1x11xf32, #tpu.memory_space<vmem>>, vector<1x11xf32>
    %659 = vector.broadcast %658 : vector<1x11xf32> to vector<16x11xf32>
    %660 = arith.addf %657, %659 : vector<16x11xf32>
    %c0_218 = arith.constant 0 : index
    %c0_219 = arith.constant 0 : index
    %661 = vector.load %arg20[%c0_218, %c0_219] : memref<16x11xf32, #tpu.memory_space<vmem>>, vector<16x11xf32>
    tpu.vector_store %arg20[%c0_218, %c0_219], %660 {strides = array<i32>} : memref<16x11xf32, #tpu.memory_space<vmem>>, vector<16x11xf32>,
    return
  }
}

</mosaic_0001>

<llo_original>
// kernel: forward.1
$region0: #{forward.1}
  #allocation0 [shape = 'u32[]', space=smem, size = 0x4, offset = 0x4, fixed_abs, tag = 'smem constant byte address 0x4 - core index']
  #allocation1 [shape = 'u32[72,128]{1,0:T(1,128)}', space=vmem, size = 0x9000, scoped, tag = 'internal scratch']
  #allocation2 [shape = 'f32[16,128]{1,0:T(8,128)}', space=vmem, size = 0x2000, scoped, tag = 'scratch operand']
  #allocation3 [shape = 'f32[16,64]{1,0:T(8,128)}', space=vmem, size = 0x2000, scoped, tag = 'scratch operand']
  #allocation4 [shape = 'f32[16,64]{1,0:T(8,128)}', space=vmem, size = 0x2000, scoped, tag = 'scratch operand']
  #allocation5 [shape = 'f32[2,32]{1,0:T(2,128)}', space=vmem, size = 0x400, scoped, tag = 'scratch operand']
  #allocation6 [shape = 'f32[16,32]{1,0:T(8,128)}', space=vmem, size = 0x2000, scoped, tag = 'scratch operand']
  %s0 = inlined_call_operand.vmem [shape: f32[16,64], index: 0, kind: input, shape index: {}]
  %s1 = inlined_call_operand.vmem [shape: s32[2,1], index: 1, kind: input, shape index: {}]
  %s2 = inlined_call_operand.vmem [shape: f32[2,49,32], index: 2, kind: input, shape index: {}]
  %s3 = inlined_call_operand.vmem [shape: f32[64,128], index: 3, kind: input, shape index: {}]
  %s4 = inlined_call_operand.vmem [shape: f32[32,128], index: 4, kind: input, shape index: {}]
  %s5 = inlined_call_operand.vmem [shape: f32[1,128], index: 5, kind: input, shape index: {}]
  %s6 = inlined_call_operand.vmem [shape: f32[32,32], index: 6, kind: input, shape index: {}]
  %s7 = inlined_call_operand.vmem [shape: f32[32,32], index: 7, kind: input, shape index: {}]
  %s8 = inlined_call_operand.vmem [shape: f32[32,32], index: 8, kind: input, shape index: {}]
  %s9 = inlined_call_operand.vmem [shape: f32[1,32], index: 9, kind: input, shape index: {}]
  %s10 = inlined_call_operand.vmem [shape: f32[64,64], index: 10, kind: input, shape index: {}]
  %s11 = inlined_call_operand.vmem [shape: f32[16,64], index: 11, kind: input, shape index: {}]
  %s12 = inlined_call_operand.vmem [shape: f32[1,64], index: 12, kind: input, shape index: {}]
  %s13 = inlined_call_operand.vmem [shape: f32[64,64], index: 13, kind: input, shape index: {}]
  %s14 = inlined_call_operand.vmem [shape: f32[16,64], index: 14, kind: input, shape index: {}]
  %s15 = inlined_call_operand.vmem [shape: f32[1,64], index: 15, kind: input, shape index: {}]
  %s16 = inlined_call_operand.vmem [shape: f32[32,128], index: 16, kind: input, shape index: {}]
  %s17 = inlined_call_operand.vmem [shape: f32[1,128], index: 17, kind: input, shape index: {}]
  %s18 = inlined_call_operand.vmem [shape: f32[128,11], index: 18, kind: input, shape index: {}]
  %s19 = inlined_call_operand.vmem [shape: f32[1,11], index: 19, kind: input, shape index: {}]
  %s20 = inlined_call_operand.vmem [shape: f32[16,11], index: 20, kind: output, shape index: {0}]
  %s21 = inlined_call_operand.vmem [shape: f32[2,1,49], index: 21, kind: output, shape index: {1}]
  %22 = xla_tuple %s20, %s21
  %s23 = sld [smem:[#allocation0]]
  $region98: #{forward.1} parent=0
    _
  %s25 = ssub.s32 1, %s23
  %s26 = scalar_select 0, %s25, %s23
  // Predicated region
  $region2: #{forward.1} parent=0 // pred_check
    _
  $region3: #{forward.1} parent=0 // pred_check_branch
    %28 = sbr.rel (0) target = $region5
  $region4: #{forward.1} parent=0 // pred_region
    _
  $region5: #{forward.1} parent=0 // pred_fallthru
    _
  // Predicated region
  $region6: #{forward.1} parent=0 // pred_check
    _
  $region7: #{forward.1} parent=0 // pred_check_branch
    %30 = sbr.rel (0) target = $region9
  $region8: #{forward.1} parent=0 // pred_region
    _
  $region9: #{forward.1} parent=0 // pred_fallthru
    _
  // Predicated region
  $region10: #{forward.1} parent=0 // pred_check
    _
  $region11: #{forward.1} parent=0 // pred_check_branch
    %32 = sbr.rel (0) target = $region13
  $region12: #{forward.1} parent=0 // pred_region
    _
  $region13: #{forward.1} parent=0 // pred_fallthru
    _
  // Predicated region
  $region14: #{forward.1} parent=0 // pred_check
    _
  $region15: #{forward.1} parent=0 // pred_check_branch
    %34 = sbr.rel (0) target = $region17
  $region16: #{forward.1} parent=0 // pred_region
    _
  $region17: #{forward.1} parent=0 // pred_fallthru
    _
  // Predicated region
  $region18: #{forward.1} parent=0 // pred_check
    _
  $region19: #{forward.1} parent=0 // pred_check_branch
    %36 = sbr.rel (0) target = $region21
  $region20: #{forward.1} parent=0 // pred_region
    _
  $region21: #{forward.1} parent=0 // pred_fallthru
    _
  // Predicated region
  $region22: #{forward.1} parent=0 // pred_check
    _
  $region23: #{forward.1} parent=0 // pred_check_branch
    %38 = sbr.rel (0) target = $region25
  $region24: #{forward.1} parent=0 // pred_region
    _
  $region25: #{forward.1} parent=0 // pred_fallthru
    _
  // Predicated region
  $region26: #{forward.1} parent=0 // pred_check
    _
  $region27: #{forward.1} parent=0 // pred_check_branch
    %40 = sbr.rel (0) target = $region29
  $region28: #{forward.1} parent=0 // pred_region
    _
  $region29: #{forward.1} parent=0 // pred_fallthru
    _
  // Predicated region
  $region30: #{forward.1} parent=0 // pred_check
    _
  $region31: #{forward.1} parent=0 // pred_check_branch
    %42 = sbr.rel (0) target = $region33
  $region32: #{forward.1} parent=0 // pred_region
    _
  $region33: #{forward.1} parent=0 // pred_fallthru
    _
  // Predicated region
  $region34: #{forward.1} parent=0 // pred_check
    _
  $region35: #{forward.1} parent=0 // pred_check_branch
    %44 = sbr.rel (0) target = $region37
  $region36: #{forward.1} parent=0 // pred_region
    _
  $region37: #{forward.1} parent=0 // pred_fallthru
    _
  // Predicated region
  $region38: #{forward.1} parent=0 // pred_check
    _
  $region39: #{forward.1} parent=0 // pred_check_branch
    %46 = sbr.rel (0) target = $region41
  $region40: #{forward.1} parent=0 // pred_region
    _
  $region41: #{forward.1} parent=0 // pred_fallthru
    _
  // Predicated region
  $region42: #{forward.1} parent=0 // pred_check
    _
  $region43: #{forward.1} parent=0 // pred_check_branch
    %48 = sbr.rel (0) target = $region45
  $region44: #{forward.1} parent=0 // pred_region
    _
  $region45: #{forward.1} parent=0 // pred_fallthru
    _
  // Predicated region
  $region46: #{forward.1} parent=0 // pred_check
    _
  $region47: #{forward.1} parent=0 // pred_check_branch
    %50 = sbr.rel (0) target = $region49
  $region48: #{forward.1} parent=0 // pred_region
    _
  $region49: #{forward.1} parent=0 // pred_fallthru
    _
  // Predicated region
  $region50: #{forward.1} parent=0 // pred_check
    _
  $region51: #{forward.1} parent=0 // pred_check_branch
    %52 = sbr.rel (0) target = $region53
  $region52: #{forward.1} parent=0 // pred_region
    _
  $region53: #{forward.1} parent=0 // pred_fallthru
    _
  // Predicated region
  $region54: #{forward.1} parent=0 // pred_check
    _
  $region55: #{forward.1} parent=0 // pred_check_branch
    %54 = sbr.rel (0) target = $region57
  $region56: #{forward.1} parent=0 // pred_region
    _
  $region57: #{forward.1} parent=0 // pred_fallthru
    _
  // Predicated region
  $region58: #{forward.1} parent=0 // pred_check
    _
  $region59: #{forward.1} parent=0 // pred_check_branch
    %56 = sbr.rel (0) target = $region61
  $region60: #{forward.1} parent=0 // pred_region
    _
  $region61: #{forward.1} parent=0 // pred_fallthru
    _
  // Predicated region
  $region62: #{forward.1} parent=0 // pred_check
    _
  $region63: #{forward.1} parent=0 // pred_check_branch
    %58 = sbr.rel (0) target = $region65
  $region64: #{forward.1} parent=0 // pred_region
    _
  $region65: #{forward.1} parent=0 // pred_fallthru
    _
  // Predicated region
  $region66: #{forward.1} parent=0 // pred_check
    _
  $region67: #{forward.1} parent=0 // pred_check_branch
    %60 = sbr.rel (0) target = $region69
  $region68: #{forward.1} parent=0 // pred_region
    _
  $region69: #{forward.1} parent=0 // pred_fallthru
    _
  // Predicated region
  $region70: #{forward.1} parent=0 // pred_check
    _
  $region71: #{forward.1} parent=0 // pred_check_branch
    %62 = sbr.rel (0) target = $region73
  $region72: #{forward.1} parent=0 // pred_region
    _
  $region73: #{forward.1} parent=0 // pred_fallthru
    _
  // Predicated region
  $region74: #{forward.1} parent=0 // pred_check
    _
  $region75: #{forward.1} parent=0 // pred_check_branch
    %64 = sbr.rel (0) target = $region77
  $region76: #{forward.1} parent=0 // pred_region
    _
  $region77: #{forward.1} parent=0 // pred_fallthru
    _
  // Predicated region
  $region78: #{forward.1} parent=0 // pred_check
    _
  $region79: #{forward.1} parent=0 // pred_check_branch
    %66 = sbr.rel (0) target = $region81
  $region80: #{forward.1} parent=0 // pred_region
    _
  $region81: #{forward.1} parent=0 // pred_fallthru
    _
  %v67 = vld [vmem:[%s0] sm:$0xff]
  %v68 = vld [vmem:[%s0 + $0x8] sm:$0xff]
  %v69 = vld [vmem:[%s3] sm:$0xff]
  %v70 = vld [vmem:[%s3 + $0x8] sm:$0xff]
  %v71 = vld [vmem:[%s3 + $0x10] sm:$0xff]
  %v72 = vld [vmem:[%s3 + $0x18] sm:$0xff]
  %v73 = vld [vmem:[%s3 + $0x20] sm:$0xff]
  %v74 = vld [vmem:[%s3 + $0x28] sm:$0xff]
  %v75 = vld [vmem:[%s3 + $0x30] sm:$0xff]
  %v76 = vld [vmem:[%s3 + $0x38] sm:$0xff]
  %v77 = vld [vmem:[%s5] sm:$0x1]
  %v79 = vperm.slane %v77, 0
  %vm81 = vcmask 523264
  %v83 = vsel %vm81, %v67, 0
  %v86 = vsel %vm81, %v68, 0
  %88 = vmatpush.msra.mxu0 0.0
  %89 = vmatpush.msra.mxu0 0.0
  %90 = vmatpush.msra.mxu0 0.0
  %91 = vmatpush.msra.mxu0 0.0
  %92 = vmatpush.msra.mxu0 0.0
  %93 = vmatpush.msra.mxu0 0.0
  %94 = vmatpush.msra.mxu0 0.0
  %95 = vmatpush.msra.mxu0 0.0
  %96 = vmatpush.msra.mxu0 %v76
  %97 = vmatpush.msra.mxu0 %v75
  %98 = vmatpush.msra.mxu0 %v74
  %99 = vmatpush.msra.mxu0 %v73
  %100 = vmatpush.msra.mxu0 %v72
  %101 = vmatpush.msra.mxu0 %v71
  %102 = vmatpush.msra.mxu0 %v70
  %103 = vmatpush.msra.mxu0 %v69
  %104 = vmatmul.f32.gmra.mxu0 %v83
  %v105 = vpop.f32.mrf.mxu0
  %v106 = vadd.f32 %v79, %v105
  %107 = vmatmul.f32.gmra.mxu0 %v86
  %v108 = vpop.f32.mrf.mxu0
  %v109 = vadd.f32 %v79, %v108
  %110 = vdwg.mxu0
  %111 = vst [vmem:[#allocation2] sm:$0xff] %v106
  %112 = vst [vmem:[#allocation2 + $0x8] sm:$0xff] %v109
  %v113 = vld [vmem:[%s4] sm:$0xff]
  %v114 = vld [vmem:[%s4 + $0x8] sm:$0xff]
  %v115 = vld [vmem:[%s4 + $0x10] sm:$0xff]
  %v116 = vld [vmem:[%s4 + $0x18] sm:$0xff]
  %v117 = vld [vmem:[%s1] sm:$0x3]
  %v118 = vld [vmem:[#allocation2] sm:$0x3]
  %vm119 = vcmask 261120
  %v121 = vsel %vm119, 0.0, 0
  %123 = vmatpush.msra.mxu0 0.0
  %124 = vmatpush.msra.mxu0 0.0
  %125 = vmatpush.msra.mxu0 0.0
  %126 = vmatpush.msra.mxu0 0.0
  %127 = vmatpush.msra.mxu0 0.0
  %128 = vmatpush.msra.mxu0 0.0
  %129 = vmatpush.msra.mxu0 0.0
  %130 = vmatpush.msra.mxu0 0.0
  %131 = vmatpush.msra.mxu0 0.0
  %132 = vmatpush.msra.mxu0 0.0
  %133 = vmatpush.msra.mxu0 0.0
  %134 = vmatpush.msra.mxu0 0.0
  %135 = vmatpush.msra.mxu0 %v116
  %136 = vmatpush.msra.mxu0 %v115
  %137 = vmatpush.msra.mxu0 %v114
  %138 = vmatpush.msra.mxu0 %v113
  %139 = vmatmul.f32.gmra.mxu0 %v121
  %v140 = vpop.f32.mrf.mxu0
  %v141 = vadd.f32 0.0, %v140
  %142 = vdwg.mxu0
  %v143 = vadd.f32 %v118, %v141
  %v144 = vxor.u32 %v143, 2147483648
  %v145 = vmul.f32 %v144, 1.442695
  %v146 = vpow.pop %v145
  %v147 = vadd.f32 %v146, 1.0
  %v148 = vrcp.pop %v147
  %v149 = vmul.f32 %v147, %v148
  %v150 = vsub.f32 1.0, %v149
  %v151 = vmul.f32 %v148, %v150
  %v152 = vadd.f32 %v148, %v151
  %vm153 = vweird.f32 %v147
  %vm154 = vweird.f32 %v148
  %vm155 = vmor %vm153, %vm154
  %v156 = vsel %vm155, %v148, %v152
  %v157 = vand.u32 2147483647, %v147
  %vm158 = vcmp.eq.f32.partialorder %v157, 8.507059e+37
  %v159 = vand.u32 %v147, 2147483648
  %v160 = vor.u32 1.1754944e-38, %v159
  %v161 = vsel %vm158, %v160, %v156
  %v162 = vmul.f32 1.0, %v161
  %v163 = vtanh.pop %v143
  %v164 = vmul.f32 %v162, 0.0
  %166 = vrot.lane.b32.xlu0 %v163, 32
  %v167 = vpop.permute.xlu0 %166
  %v169 = vmul.f32 %v162, %v167
  %171 = vrot.lane.b32.xlu0 %v169, 32
  %v172 = vpop.permute.xlu0 %171
  %v174 = vadd.f32 %v164, %v172
  %v175 = vtanh.pop %v174
  %177 = vrot.lane.b32.xlu0 %v175, 32
  %v178 = vpop.permute.xlu0 %177
  %v180 = vmul.f32 %v162, %v178
  %vm181 = vcmp.eq.s32.totalorder %v117, 0
  %v182 = vsel %vm181, 1, 0
  %183 = vset.pattern.permute.xlu0 0
  %184 = vperm.xlu0 %183, %v182
  %v185 = vpop.permute.xlu0 %184
  %vm186 = vcmp.eq.s32.totalorder %v185, 1
  %v187 = vsel %vm186, %v180, 0.0
  %v188 = vld [vmem:[#allocation2 + $0x2] sm:$0x3]
  %190 = vrot.lane.b32.xlu0 %v180, 64
  %v191 = vpop.permute.xlu0 %190
  %v192 = vsel %vm119, %v191, 0
  %194 = vmatpush.msra.mxu0 0.0
  %195 = vmatpush.msra.mxu0 0.0
  %196 = vmatpush.msra.mxu0 0.0
  %197 = vmatpush.msra.mxu0 0.0
  %198 = vmatpush.msra.mxu0 0.0
  %199 = vmatpush.msra.mxu0 0.0
  %200 = vmatpush.msra.mxu0 0.0
  %201 = vmatpush.msra.mxu0 0.0
  %202 = vmatpush.msra.mxu0 0.0
  %203 = vmatpush.msra.mxu0 0.0
  %204 = vmatpush.msra.mxu0 0.0
  %205 = vmatpush.msra.mxu0 0.0
  %206 = vmatpush.msra.mxu0 %v116
  %207 = vmatpush.msra.mxu0 %v115
  %208 = vmatpush.msra.mxu0 %v114
  %209 = vmatpush.msra.mxu0 %v113
  %210 = vmatmul.f32.gmra.mxu0 %v192
  %v211 = vpop.f32.mrf.mxu0
  %v212 = vadd.f32 0.0, %v211
  %213 = vdwg.mxu0
  %v214 = vadd.f32 %v188, %v212
  %v215 = vxor.u32 %v214, 2147483648
  %v216 = vmul.f32 %v215, 1.442695
  %v217 = vpow.pop %v216
  %v218 = vadd.f32 %v217, 1.0
  %v219 = vrcp.pop %v218
  %v220 = vmul.f32 %v218, %v219
  %v221 = vsub.f32 1.0, %v220
  %v222 = vmul.f32 %v219, %v221
  %v223 = vadd.f32 %v219, %v222
  %vm224 = vweird.f32 %v218
  %vm225 = vweird.f32 %v219
  %vm226 = vmor %vm224, %vm225
  %v227 = vsel %vm226, %v219, %v223
  %v228 = vand.u32 2147483647, %v218
  %vm229 = vcmp.eq.f32.partialorder %v228, 8.507059e+37
  %v230 = vand.u32 %v218, 2147483648
  %v231 = vor.u32 1.1754944e-38, %v230
  %v232 = vsel %vm229, %v231, %v227
  %v233 = vmul.f32 1.0, %v232
  %v234 = vtanh.pop %v214
  %v235 = vmul.f32 %v233, %v174
  %237 = vrot.lane.b32.xlu0 %v234, 32
  %v238 = vpop.permute.xlu0 %237
  %v240 = vmul.f32 %v233, %v238
  %242 = vrot.lane.b32.xlu0 %v240, 32
  %v243 = vpop.permute.xlu0 %242
  %v245 = vadd.f32 %v235, %v243
  %v246 = vtanh.pop %v245
  %248 = vrot.lane.b32.xlu0 %v246, 32
  %v249 = vpop.permute.xlu0 %248
  %v251 = vmul.f32 %v233, %v249
  %vm252 = vcmp.eq.s32.totalorder %v117, 1
  %v253 = vsel %vm252, 1, 0
  %254 = vset.pattern.permute.xlu0 0
  %255 = vperm.xlu0 %254, %v253
  %v256 = vpop.permute.xlu0 %255
  %vm257 = vcmp.eq.s32.totalorder %v256, 1
  %v258 = vsel %vm257, %v251, %v187
  %v259 = vld [vmem:[#allocation2 + $0x4] sm:$0x3]
  %261 = vrot.lane.b32.xlu0 %v251, 64
  %v262 = vpop.permute.xlu0 %261
  %v263 = vsel %vm119, %v262, 0
  %265 = vmatpush.msra.mxu0 0.0
  %266 = vmatpush.msra.mxu0 0.0
  %267 = vmatpush.msra.mxu0 0.0
  %268 = vmatpush.msra.mxu0 0.0
  %269 = vmatpush.msra.mxu0 0.0
  %270 = vmatpush.msra.mxu0 0.0
  %271 = vmatpush.msra.mxu0 0.0
  %272 = vmatpush.msra.mxu0 0.0
  %273 = vmatpush.msra.mxu0 0.0
  %274 = vmatpush.msra.mxu0 0.0
  %275 = vmatpush.msra.mxu0 0.0
  %276 = vmatpush.msra.mxu0 0.0
  %277 = vmatpush.msra.mxu0 %v116
  %278 = vmatpush.msra.mxu0 %v115
  %279 = vmatpush.msra.mxu0 %v114
  %280 = vmatpush.msra.mxu0 %v113
  %281 = vmatmul.f32.gmra.mxu0 %v263
  %v282 = vpop.f32.mrf.mxu0
  %v283 = vadd.f32 0.0, %v282
  %284 = vdwg.mxu0
  %v285 = vadd.f32 %v259, %v283
  %v286 = vxor.u32 %v285, 2147483648
  %v287 = vmul.f32 %v286, 1.442695
  %v288 = vpow.pop %v287
  %v289 = vadd.f32 %v288, 1.0
  %v290 = vrcp.pop %v289
  %v291 = vmul.f32 %v289, %v290
  %v292 = vsub.f32 1.0, %v291
  %v293 = vmul.f32 %v290, %v292
  %v294 = vadd.f32 %v290, %v293
  %vm295 = vweird.f32 %v289
  %vm296 = vweird.f32 %v290
  %vm297 = vmor %vm295, %vm296
  %v298 = vsel %vm297, %v290, %v294
  %v299 = vand.u32 2147483647, %v289
  %vm300 = vcmp.eq.f32.partialorder %v299, 8.507059e+37
  %v301 = vand.u32 %v289, 2147483648
  %v302 = vor.u32 1.1754944e-38, %v301
  %v303 = vsel %vm300, %v302, %v298
  %v304 = vmul.f32 1.0, %v303
  %v305 = vtanh.pop %v285
  %v306 = vmul.f32 %v304, %v245
  %308 = vrot.lane.b32.xlu0 %v305, 32
  %v309 = vpop.permute.xlu0 %308
  %v311 = vmul.f32 %v304, %v309
  %313 = vrot.lane.b32.xlu0 %v311, 32
  %v314 = vpop.permute.xlu0 %313
  %v316 = vadd.f32 %v306, %v314
  %v317 = vtanh.pop %v316
  %319 = vrot.lane.b32.xlu0 %v317, 32
  %v320 = vpop.permute.xlu0 %319
  %v322 = vmul.f32 %v304, %v320
  %vm323 = vcmp.eq.s32.totalorder %v117, 2
  %v324 = vsel %vm323, 1, 0
  %325 = vset.pattern.permute.xlu0 0
  %326 = vperm.xlu0 %325, %v324
  %v327 = vpop.permute.xlu0 %326
  %vm328 = vcmp.eq.s32.totalorder %v327, 1
  %v329 = vsel %vm328, %v322, %v258
  %v330 = vld [vmem:[#allocation2 + $0x6] sm:$0x3]
  %332 = vrot.lane.b32.xlu0 %v322, 64
  %v333 = vpop.permute.xlu0 %332
  %v334 = vsel %vm119, %v333, 0
  %336 = vmatpush.msra.mxu0 0.0
  %337 = vmatpush.msra.mxu0 0.0
  %338 = vmatpush.msra.mxu0 0.0
  %339 = vmatpush.msra.mxu0 0.0
  %340 = vmatpush.msra.mxu0 0.0
  %341 = vmatpush.msra.mxu0 0.0
  %342 = vmatpush.msra.mxu0 0.0
  %343 = vmatpush.msra.mxu0 0.0
  %344 = vmatpush.msra.mxu0 0.0
  %345 = vmatpush.msra.mxu0 0.0
  %346 = vmatpush.msra.mxu0 0.0
  %347 = vmatpush.msra.mxu0 0.0
  %348 = vmatpush.msra.mxu0 %v116
  %349 = vmatpush.msra.mxu0 %v115
  %350 = vmatpush.msra.mxu0 %v114
  %351 = vmatpush.msra.mxu0 %v113
  %352 = vmatmul.f32.gmra.mxu0 %v334
  %v353 = vpop.f32.mrf.mxu0
  %v354 = vadd.f32 0.0, %v353
  %355 = vdwg.mxu0
  %v356 = vadd.f32 %v330, %v354
  %v357 = vxor.u32 %v356, 2147483648
  %v358 = vmul.f32 %v357, 1.442695
  %v359 = vpow.pop %v358
  %v360 = vadd.f32 %v359, 1.0
  %v361 = vrcp.pop %v360
  %v362 = vmul.f32 %v360, %v361
  %v363 = vsub.f32 1.0, %v362
  %v364 = vmul.f32 %v361, %v363
  %v365 = vadd.f32 %v361, %v364
  %vm366 = vweird.f32 %v360
  %vm367 = vweird.f32 %v361
  %vm368 = vmor %vm366, %vm367
  %v369 = vsel %vm368, %v361, %v365
  %v370 = vand.u32 2147483647, %v360
  %vm371 = vcmp.eq.f32.partialorder %v370, 8.507059e+37
  %v372 = vand.u32 %v360, 2147483648
  %v373 = vor.u32 1.1754944e-38, %v372
  %v374 = vsel %vm371, %v373, %v369
  %v375 = vmul.f32 1.0, %v374
  %v376 = vtanh.pop %v356
  %v377 = vmul.f32 %v375, %v316
  %379 = vrot.lane.b32.xlu0 %v376, 32
  %v380 = vpop.permute.xlu0 %379
  %v382 = vmul.f32 %v375, %v380
  %384 = vrot.lane.b32.xlu0 %v382, 32
  %v385 = vpop.permute.xlu0 %384
  %v387 = vadd.f32 %v377, %v385
  %v388 = vtanh.pop %v387
  %390 = vrot.lane.b32.xlu0 %v388, 32
  %v391 = vpop.permute.xlu0 %390
  %v393 = vmul.f32 %v375, %v391
  %vm394 = vcmp.eq.s32.totalorder %v117, 3
  %v395 = vsel %vm394, 1, 0
  %396 = vset.pattern.permute.xlu0 0
  %397 = vperm.xlu0 %396, %v395
  %v398 = vpop.permute.xlu0 %397
  %vm399 = vcmp.eq.s32.totalorder %v398, 1
  %v400 = vsel %vm399, %v393, %v329
  %v401 = vld [vmem:[#allocation2 + $0x8] sm:$0x3]
  %403 = vrot.lane.b32.xlu0 %v393, 64
  %v404 = vpop.permute.xlu0 %403
  %v405 = vsel %vm119, %v404, 0
  %407 = vmatpush.msra.mxu0 0.0
  %408 = vmatpush.msra.mxu0 0.0
  %409 = vmatpush.msra.mxu0 0.0
  %410 = vmatpush.msra.mxu0 0.0
  %411 = vmatpush.msra.mxu0 0.0
  %412 = vmatpush.msra.mxu0 0.0
  %413 = vmatpush.msra.mxu0 0.0
  %414 = vmatpush.msra.mxu0 0.0
  %415 = vmatpush.msra.mxu0 0.0
  %416 = vmatpush.msra.mxu0 0.0
  %417 = vmatpush.msra.mxu0 0.0
  %418 = vmatpush.msra.mxu0 0.0
  %419 = vmatpush.msra.mxu0 %v116
  %420 = vmatpush.msra.mxu0 %v115
  %421 = vmatpush.msra.mxu0 %v114
  %422 = vmatpush.msra.mxu0 %v113
  %423 = vmatmul.f32.gmra.mxu0 %v405
  %v424 = vpop.f32.mrf.mxu0
  %v425 = vadd.f32 0.0, %v424
  %426 = vdwg.mxu0
  %v427 = vadd.f32 %v401, %v425
  %v428 = vxor.u32 %v427, 2147483648
  %v429 = vmul.f32 %v428, 1.442695
  %v430 = vpow.pop %v429
  %v431 = vadd.f32 %v430, 1.0
  %v432 = vrcp.pop %v431
  %v433 = vmul.f32 %v431, %v432
  %v434 = vsub.f32 1.0, %v433
  %v435 = vmul.f32 %v432, %v434
  %v436 = vadd.f32 %v432, %v435
  %vm437 = vweird.f32 %v431
  %vm438 = vweird.f32 %v432
  %vm439 = vmor %vm437, %vm438
  %v440 = vsel %vm439, %v432, %v436
  %v441 = vand.u32 2147483647, %v431
  %vm442 = vcmp.eq.f32.partialorder %v441, 8.507059e+37
  %v443 = vand.u32 %v431, 2147483648
  %v444 = vor.u32 1.1754944e-38, %v443
  %v445 = vsel %vm442, %v444, %v440
  %v446 = vmul.f32 1.0, %v445
  %v447 = vtanh.pop %v427
  %v448 = vmul.f32 %v446, %v387
  %450 = vrot.lane.b32.xlu0 %v447, 32
  %v451 = vpop.permute.xlu0 %450
  %v453 = vmul.f32 %v446, %v451
  %455 = vrot.lane.b32.xlu0 %v453, 32
  %v456 = vpop.permute.xlu0 %455
  %v458 = vadd.f32 %v448, %v456
  %v459 = vtanh.pop %v458
  %461 = vrot.lane.b32.xlu0 %v459, 32
  %v462 = vpop.permute.xlu0 %461
  %v464 = vmul.f32 %v446, %v462
  %vm465 = vcmp.eq.s32.totalorder %v117, 4
  %v466 = vsel %vm465, 1, 0
  %467 = vset.pattern.permute.xlu0 0
  %468 = vperm.xlu0 %467, %v466
  %v469 = vpop.permute.xlu0 %468
  %vm470 = vcmp.eq.s32.totalorder %v469, 1
  %v471 = vsel %vm470, %v464, %v400
  %v472 = vld [vmem:[#allocation2 + $0xa] sm:$0x3]
  %474 = vrot.lane.b32.xlu0 %v464, 64
  %v475 = vpop.permute.xlu0 %474
  %v476 = vsel %vm119, %v475, 0
  %478 = vmatpush.msra.mxu0 0.0
  %479 = vmatpush.msra.mxu0 0.0
  %480 = vmatpush.msra.mxu0 0.0
  %481 = vmatpush.msra.mxu0 0.0
  %482 = vmatpush.msra.mxu0 0.0
  %483 = vmatpush.msra.mxu0 0.0
  %484 = vmatpush.msra.mxu0 0.0
  %485 = vmatpush.msra.mxu0 0.0
  %486 = vmatpush.msra.mxu0 0.0
  %487 = vmatpush.msra.mxu0 0.0
  %488 = vmatpush.msra.mxu0 0.0
  %489 = vmatpush.msra.mxu0 0.0
  %490 = vmatpush.msra.mxu0 %v116
  %491 = vmatpush.msra.mxu0 %v115
  %492 = vmatpush.msra.mxu0 %v114
  %493 = vmatpush.msra.mxu0 %v113
  %494 = vmatmul.f32.gmra.mxu0 %v476
  %v495 = vpop.f32.mrf.mxu0
  %v496 = vadd.f32 0.0, %v495
  %497 = vdwg.mxu0
  %v498 = vadd.f32 %v472, %v496
  %v499 = vxor.u32 %v498, 2147483648
  %v500 = vmul.f32 %v499, 1.442695
  %v501 = vpow.pop %v500
  %v502 = vadd.f32 %v501, 1.0
  %v503 = vrcp.pop %v502
  %v504 = vmul.f32 %v502, %v503
  %v505 = vsub.f32 1.0, %v504
  %v506 = vmul.f32 %v503, %v505
  %v507 = vadd.f32 %v503, %v506
  %vm508 = vweird.f32 %v502
  %vm509 = vweird.f32 %v503
  %vm510 = vmor %vm508, %vm509
  %v511 = vsel %vm510, %v503, %v507
  %v512 = vand.u32 2147483647, %v502
  %vm513 = vcmp.eq.f32.partialorder %v512, 8.507059e+37
  %v514 = vand.u32 %v502, 2147483648
  %v515 = vor.u32 1.1754944e-38, %v514
  %v516 = vsel %vm513, %v515, %v511
  %v517 = vmul.f32 1.0, %v516
  %v518 = vtanh.pop %v498
  %v519 = vmul.f32 %v517, %v458
  %521 = vrot.lane.b32.xlu0 %v518, 32
  %v522 = vpop.permute.xlu0 %521
  %v524 = vmul.f32 %v517, %v522
  %526 = vrot.lane.b32.xlu0 %v524, 32
  %v527 = vpop.permute.xlu0 %526
  %v529 = vadd.f32 %v519, %v527
  %v530 = vtanh.pop %v529
  %532 = vrot.lane.b32.xlu0 %v530, 32
  %v533 = vpop.permute.xlu0 %532
  %v535 = vmul.f32 %v517, %v533
  %vm536 = vcmp.eq.s32.totalorder %v117, 5
  %v537 = vsel %vm536, 1, 0
  %538 = vset.pattern.permute.xlu0 0
  %539 = vperm.xlu0 %538, %v537
  %v540 = vpop.permute.xlu0 %539
  %vm541 = vcmp.eq.s32.totalorder %v540, 1
  %v542 = vsel %vm541, %v535, %v471
  %v543 = vld [vmem:[#allocation2 + $0xc] sm:$0x3]
  %545 = vrot.lane.b32.xlu0 %v535, 64
  %v546 = vpop.permute.xlu0 %545
  %v547 = vsel %vm119, %v546, 0
  %549 = vmatpush.msra.mxu0 0.0
  %550 = vmatpush.msra.mxu0 0.0
  %551 = vmatpush.msra.mxu0 0.0
  %552 = vmatpush.msra.mxu0 0.0
  %553 = vmatpush.msra.mxu0 0.0
  %554 = vmatpush.msra.mxu0 0.0
  %555 = vmatpush.msra.mxu0 0.0
  %556 = vmatpush.msra.mxu0 0.0
  %557 = vmatpush.msra.mxu0 0.0
  %558 = vmatpush.msra.mxu0 0.0
  %559 = vmatpush.msra.mxu0 0.0
  %560 = vmatpush.msra.mxu0 0.0
  %561 = vmatpush.msra.mxu0 %v116
  %562 = vmatpush.msra.mxu0 %v115
  %563 = vmatpush.msra.mxu0 %v114
  %564 = vmatpush.msra.mxu0 %v113
  %565 = vmatmul.f32.gmra.mxu0 %v547
  %v566 = vpop.f32.mrf.mxu0
  %v567 = vadd.f32 0.0, %v566
  %568 = vdwg.mxu0
  %v569 = vadd.f32 %v543, %v567
  %v570 = vxor.u32 %v569, 2147483648
  %v571 = vmul.f32 %v570, 1.442695
  %v572 = vpow.pop %v571
  %v573 = vadd.f32 %v572, 1.0
  %v574 = vrcp.pop %v573
  %v575 = vmul.f32 %v573, %v574
  %v576 = vsub.f32 1.0, %v575
  %v577 = vmul.f32 %v574, %v576
  %v578 = vadd.f32 %v574, %v577
  %vm579 = vweird.f32 %v573
  %vm580 = vweird.f32 %v574
  %vm581 = vmor %vm579, %vm580
  %v582 = vsel %vm581, %v574, %v578
  %v583 = vand.u32 2147483647, %v573
  %vm584 = vcmp.eq.f32.partialorder %v583, 8.507059e+37
  %v585 = vand.u32 %v573, 2147483648
  %v586 = vor.u32 1.1754944e-38, %v585
  %v587 = vsel %vm584, %v586, %v582
  %v588 = vmul.f32 1.0, %v587
  %v589 = vtanh.pop %v569
  %v590 = vmul.f32 %v588, %v529
  %592 = vrot.lane.b32.xlu0 %v589, 32
  %v593 = vpop.permute.xlu0 %592
  %v595 = vmul.f32 %v588, %v593
  %597 = vrot.lane.b32.xlu0 %v595, 32
  %v598 = vpop.permute.xlu0 %597
  %v600 = vadd.f32 %v590, %v598
  %v601 = vtanh.pop %v600
  %603 = vrot.lane.b32.xlu0 %v601, 32
  %v604 = vpop.permute.xlu0 %603
  %v606 = vmul.f32 %v588, %v604
  %vm607 = vcmp.eq.s32.totalorder %v117, 6
  %v608 = vsel %vm607, 1, 0
  %609 = vset.pattern.permute.xlu0 0
  %610 = vperm.xlu0 %609, %v608
  %v611 = vpop.permute.xlu0 %610
  %vm612 = vcmp.eq.s32.totalorder %v611, 1
  %v613 = vsel %vm612, %v606, %v542
  %v614 = vld [vmem:[#allocation2 + $0xe] sm:$0x3]
  %616 = vrot.lane.b32.xlu0 %v606, 64
  %v617 = vpop.permute.xlu0 %616
  %v618 = vsel %vm119, %v617, 0
  %620 = vmatpush.msra.mxu0 0.0
  %621 = vmatpush.msra.mxu0 0.0
  %622 = vmatpush.msra.mxu0 0.0
  %623 = vmatpush.msra.mxu0 0.0
  %624 = vmatpush.msra.mxu0 0.0
  %625 = vmatpush.msra.mxu0 0.0
  %626 = vmatpush.msra.mxu0 0.0
  %627 = vmatpush.msra.mxu0 0.0
  %628 = vmatpush.msra.mxu0 0.0
  %629 = vmatpush.msra.mxu0 0.0
  %630 = vmatpush.msra.mxu0 0.0
  %631 = vmatpush.msra.mxu0 0.0
  %632 = vmatpush.msra.mxu0 %v116
  %633 = vmatpush.msra.mxu0 %v115
  %634 = vmatpush.msra.mxu0 %v114
  %635 = vmatpush.msra.mxu0 %v113
  %636 = vmatmul.f32.gmra.mxu0 %v618
  %v637 = vpop.f32.mrf.mxu0
  %v638 = vadd.f32 0.0, %v637
  %639 = vdwg.mxu0
  %v640 = vadd.f32 %v614, %v638
  %v641 = vxor.u32 %v640, 2147483648
  %v642 = vmul.f32 %v641, 1.442695
  %v643 = vpow.pop %v642
  %v644 = vadd.f32 %v643, 1.0
  %v645 = vrcp.pop %v644
  %v646 = vmul.f32 %v644, %v645
  %v647 = vsub.f32 1.0, %v646
  %v648 = vmul.f32 %v645, %v647
  %v649 = vadd.f32 %v645, %v648
  %vm650 = vweird.f32 %v644
  %vm651 = vweird.f32 %v645
  %vm652 = vmor %vm650, %vm651
  %v653 = vsel %vm652, %v645, %v649
  %v654 = vand.u32 2147483647, %v644
  %vm655 = vcmp.eq.f32.partialorder %v654, 8.507059e+37
  %v656 = vand.u32 %v644, 2147483648
  %v657 = vor.u32 1.1754944e-38, %v656
  %v658 = vsel %vm655, %v657, %v653
  %v659 = vmul.f32 1.0, %v658
  %v660 = vtanh.pop %v640
  %v661 = vmul.f32 %v659, %v600
  %663 = vrot.lane.b32.xlu0 %v660, 32
  %v664 = vpop.permute.xlu0 %663
  %v666 = vmul.f32 %v659, %v664
  %668 = vrot.lane.b32.xlu0 %v666, 32
  %v669 = vpop.permute.xlu0 %668
  %v671 = vadd.f32 %v661, %v669
  %v672 = vtanh.pop %v671
  %674 = vrot.lane.b32.xlu0 %v672, 32
  %v675 = vpop.permute.xlu0 %674
  %v677 = vmul.f32 %v659, %v675
  %vm678 = vcmp.eq.s32.totalorder %v117, 7
  %v679 = vsel %vm678, 1, 0
  %680 = vset.pattern.permute.xlu0 0
  %681 = vperm.xlu0 %680, %v679
  %v682 = vpop.permute.xlu0 %681
  %vm683 = vcmp.eq.s32.totalorder %v682, 1
  %v684 = vsel %vm683, %v677, %v613
  %v685 = vld [vmem:[%s6] sm:$0xff]
  %v686 = vld [vmem:[%s6 + $0x8] sm:$0xff]
  %v687 = vld [vmem:[%s6 + $0x10] sm:$0xff]
  %v688 = vld [vmem:[%s6 + $0x18] sm:$0xff]
  %690 = vrot.lane.b32.xlu0 %v684, 64
  %v691 = vpop.permute.xlu0 %690
  %v692 = vsel %vm119, %v691, 0
  %694 = vmatpush.msra.mxu0 0.0
  %695 = vmatpush.msra.mxu0 0.0
  %696 = vmatpush.msra.mxu0 0.0
  %697 = vmatpush.msra.mxu0 0.0
  %698 = vmatpush.msra.mxu0 0.0
  %699 = vmatpush.msra.mxu0 0.0
  %700 = vmatpush.msra.mxu0 0.0
  %701 = vmatpush.msra.mxu0 0.0
  %702 = vmatpush.msra.mxu0 0.0
  %703 = vmatpush.msra.mxu0 0.0
  %704 = vmatpush.msra.mxu0 0.0
  %705 = vmatpush.msra.mxu0 0.0
  %706 = vmatpush.msra.mxu0 %v688
  %707 = vmatpush.msra.mxu0 %v687
  %708 = vmatpush.msra.mxu0 %v686
  %709 = vmatpush.msra.mxu0 %v685
  %710 = vmatmul.f32.gmra.mxu0 %v692
  %v711 = vpop.f32.mrf.mxu0
  %v712 = vadd.f32 0.0, %v711
  %713 = vdwg.mxu0
  %v714 = vtanh.pop %v712
  %v715 = vld [vmem:[%s7] sm:$0xff]
  %v716 = vld [vmem:[%s7 + $0x8] sm:$0xff]
  %v717 = vld [vmem:[%s7 + $0x10] sm:$0xff]
  %v718 = vld [vmem:[%s7 + $0x18] sm:$0xff]
  %v719 = vld [vmem:[%s8] sm:$0xff]
  %v720 = vld [vmem:[%s8 + $0x8] sm:$0xff]
  %v721 = vld [vmem:[%s8 + $0x10] sm:$0xff]
  %v722 = vld [vmem:[%s8 + $0x18] sm:$0xff]
  %v723 = vld [vmem:[%s9] sm:$0x1]
  %v724 = vld [vmem:[%s2] sm:$0xff]
  %v725 = vld [vmem:[%s2 + $0x8] sm:$0xff]
  %v726 = vld [vmem:[%s2 + $0x10] sm:$0xff]
  %v727 = vld [vmem:[%s2 + $0x18] sm:$0xff]
  %v728 = vld [vmem:[%s2 + $0x20] sm:$0xff]
  %v729 = vld [vmem:[%s2 + $0x28] sm:$0xff]
  %v730 = vld [vmem:[%s2 + $0x30] sm:$0x1]
  %v732 = vsel %vm119, %v724, 0
  %v735 = vsel %vm119, %v725, 0
  %v738 = vsel %vm119, %v726, 0
  %v741 = vsel %vm119, %v727, 0
  %v744 = vsel %vm119, %v728, 0
  %v747 = vsel %vm119, %v729, 0
  %v750 = vsel %vm119, %v730, 0
  %752 = vmatpush.msra.mxu0 0.0
  %753 = vmatpush.msra.mxu0 0.0
  %754 = vmatpush.msra.mxu0 0.0
  %755 = vmatpush.msra.mxu0 0.0
  %756 = vmatpush.msra.mxu0 0.0
  %757 = vmatpush.msra.mxu0 0.0
  %758 = vmatpush.msra.mxu0 0.0
  %759 = vmatpush.msra.mxu0 0.0
  %760 = vmatpush.msra.mxu0 0.0
  %761 = vmatpush.msra.mxu0 0.0
  %762 = vmatpush.msra.mxu0 0.0
  %763 = vmatpush.msra.mxu0 0.0
  %764 = vmatpush.msra.mxu0 %v718
  %765 = vmatpush.msra.mxu0 %v717
  %766 = vmatpush.msra.mxu0 %v716
  %767 = vmatpush.msra.mxu0 %v715
  %768 = vmatmul.f32.gmra.mxu0 %v732
  %v769 = vpop.f32.mrf.mxu0
  %v770 = vadd.f32 0.0, %v769
  %771 = vmatmul.f32.gmra.mxu0 %v735
  %v772 = vpop.f32.mrf.mxu0
  %v773 = vadd.f32 0.0, %v772
  %774 = vmatmul.f32.gmra.mxu0 %v738
  %v775 = vpop.f32.mrf.mxu0
  %v776 = vadd.f32 0.0, %v775
  %777 = vmatmul.f32.gmra.mxu0 %v741
  %v778 = vpop.f32.mrf.mxu0
  %v779 = vadd.f32 0.0, %v778
  %780 = vmatmul.f32.gmra.mxu0 %v744
  %v781 = vpop.f32.mrf.mxu0
  %v782 = vadd.f32 0.0, %v781
  %783 = vmatmul.f32.gmra.mxu0 %v747
  %v784 = vpop.f32.mrf.mxu0
  %v785 = vadd.f32 0.0, %v784
  %786 = vmatmul.f32.gmra.mxu0 %v750
  %v787 = vpop.f32.mrf.mxu0
  %v788 = vadd.f32 0.0, %v787
  %789 = vdwg.mxu0
  %v790 = vtanh.pop %v770
  %v791 = vtanh.pop %v773
  %v792 = vtanh.pop %v776
  %v793 = vtanh.pop %v779
  %v794 = vtanh.pop %v782
  %v795 = vtanh.pop %v785
  %v796 = vtanh.pop %v788
  %v797 = vperm.slane %v714, 0
  %v798 = vadd.f32 %v790, %v797
  %v799 = vadd.f32 %v791, %v797
  %v800 = vadd.f32 %v792, %v797
  %v801 = vadd.f32 %v793, %v797
  %v802 = vadd.f32 %v794, %v797
  %v803 = vadd.f32 %v795, %v797
  %v804 = vadd.f32 %v796, %v797
  %v806 = vperm.slane %v723, 0
  %v809 = vsel %vm119, %v798, 0
  %v812 = vsel %vm119, %v799, 0
  %v815 = vsel %vm119, %v800, 0
  %v818 = vsel %vm119, %v801, 0
  %v821 = vsel %vm119, %v802, 0
  %v824 = vsel %vm119, %v803, 0
  %v827 = vsel %vm119, %v804, 0
  %829 = vmatpush.msra.mxu0 0.0
  %830 = vmatpush.msra.mxu0 0.0
  %831 = vmatpush.msra.mxu0 0.0
  %832 = vmatpush.msra.mxu0 0.0
  %833 = vmatpush.msra.mxu0 0.0
  %834 = vmatpush.msra.mxu0 0.0
  %835 = vmatpush.msra.mxu0 0.0
  %836 = vmatpush.msra.mxu0 0.0
  %837 = vmatpush.msra.mxu0 0.0
  %838 = vmatpush.msra.mxu0 0.0
  %839 = vmatpush.msra.mxu0 0.0
  %840 = vmatpush.msra.mxu0 0.0
  %841 = vmatpush.msra.mxu0 %v722
  %842 = vmatpush.msra.mxu0 %v721
  %843 = vmatpush.msra.mxu0 %v720
  %844 = vmatpush.msra.mxu0 %v719
  %845 = vmatmul.f32.gmra.mxu0 %v809
  %v846 = vpop.f32.mrf.mxu0
  %v847 = vadd.f32 %v806, %v846
  %848 = vmatmul.f32.gmra.mxu0 %v812
  %v849 = vpop.f32.mrf.mxu0
  %v850 = vadd.f32 %v806, %v849
  %851 = vmatmul.f32.gmra.mxu0 %v815
  %v852 = vpop.f32.mrf.mxu0
  %v853 = vadd.f32 %v806, %v852
  %854 = vmatmul.f32.gmra.mxu0 %v818
  %v855 = vpop.f32.mrf.mxu0
  %v856 = vadd.f32 %v806, %v855
  %857 = vmatmul.f32.gmra.mxu0 %v821
  %v858 = vpop.f32.mrf.mxu0
  %v859 = vadd.f32 %v806, %v858
  %860 = vmatmul.f32.gmra.mxu0 %v824
  %v861 = vpop.f32.mrf.mxu0
  %v862 = vadd.f32 %v806, %v861
  %863 = vmatmul.f32.gmra.mxu0 %v827
  %v864 = vpop.f32.mrf.mxu0
  %v865 = vadd.f32 %v806, %v864
  %866 = vdwg.mxu0
  %v867 = vsel %vm119, %v847, -inf
  %v868 = vsel %vm119, %v850, -inf
  %v869 = vsel %vm119, %v853, -inf
  %v870 = vsel %vm119, %v856, -inf
  %v871 = vsel %vm119, %v859, -inf
  %v872 = vmax.f32 %v867, %v871
  %v873 = vsel %vm119, %v862, -inf
  %v874 = vmax.f32 %v868, %v873
  %vm875 = vcmask 253952
  %v876 = vsel %vm875, %v865, -inf
  %v877 = vmax.f32 %v869, %v876
  %v878 = vmax.f32 %v872, %v874
  %v879 = vmax.f32 %v877, %v870
  %v880 = vmax.f32 %v878, %v879
  %v881 = vrot.slane %v880, 4
  %v882 = vmax.f32 %v880, %v881
  %v883 = vrot.slane %v882, 2
  %v884 = vmax.f32 %v882, %v883
  %v885 = vrot.slane %v884, 1
  %v886 = vmax.f32 %v884, %v885
  %v887 = vsub.f32 %v847, %v886
  %v888 = vsub.f32 %v850, %v886
  %v889 = vsub.f32 %v853, %v886
  %v890 = vsub.f32 %v856, %v886
  %v891 = vsub.f32 %v859, %v886
  %v892 = vsub.f32 %v862, %v886
  %v893 = vsub.f32 %v865, %v886
  %v894 = vmul.f32 %v887, 1.442695
  %v895 = vpow.pop %v894
  %v896 = vmul.f32 %v888, 1.442695
  %v897 = vpow.pop %v896
  %v898 = vmul.f32 %v889, 1.442695
  %v899 = vpow.pop %v898
  %v900 = vmul.f32 %v890, 1.442695
  %v901 = vpow.pop %v900
  %v902 = vmul.f32 %v891, 1.442695
  %v903 = vpow.pop %v902
  %v904 = vmul.f32 %v892, 1.442695
  %v905 = vpow.pop %v904
  %v906 = vmul.f32 %v893, 1.442695
  %v907 = vpow.pop %v906
  %v908 = vsel %vm119, %v895, 0.0
  %v909 = vsel %vm119, %v897, 0.0
  %v910 = vadd.f32 %v908, %v909
  %v911 = vsel %vm119, %v899, 0.0
  %v912 = vadd.f32 %v910, %v911
  %v913 = vsel %vm119, %v901, 0.0
  %v914 = vadd.f32 %v912, %v913
  %v915 = vsel %vm119, %v903, 0.0
  %v916 = vadd.f32 %v914, %v915
  %v917 = vsel %vm119, %v905, 0.0
  %v918 = vadd.f32 %v916, %v917
  %v919 = vsel %vm875, %v907, 0.0
  %v920 = vadd.f32 %v918, %v919
  %v921 = vrot.slane %v920, 4
  %v922 = vadd.f32 %v920, %v921
  %v923 = vrot.slane %v922, 2
  %v924 = vadd.f32 %v922, %v923
  %v925 = vrot.slane %v924, 1
  %v926 = vadd.f32 %v924, %v925
  %v927 = vrcp.pop %v926
  %v928 = vmul.f32 %v926, %v927
  %v929 = vsub.f32 1.0, %v928
  %v930 = vmul.f32 %v927, %v929
  %v931 = vadd.f32 %v927, %v930
  %vm932 = vweird.f32 %v926
  %vm933 = vweird.f32 %v927
  %vm934 = vmor %vm932, %vm933
  %v935 = vsel %vm934, %v927, %v931
  %v936 = vand.u32 2147483647, %v926
  %vm937 = vcmp.eq.f32.partialorder %v936, 8.507059e+37
  %v938 = vand.u32 %v926, 2147483648
  %v939 = vor.u32 1.1754944e-38, %v938
  %v940 = vsel %vm937, %v939, %v935
  %v941 = vmul.f32 %v895, %v940
  %v942 = vmul.f32 %v897, %v940
  %v943 = vmul.f32 %v899, %v940
  %v944 = vmul.f32 %v901, %v940
  %v945 = vmul.f32 %v903, %v940
  %v946 = vmul.f32 %v905, %v940
  %v947 = vmul.f32 %v907, %v940
  %v948 = vmul.f32 %v941, %v724
  %v949 = vmul.f32 %v942, %v725
  %v950 = vmul.f32 %v943, %v726
  %v951 = vmul.f32 %v944, %v727
  %v952 = vmul.f32 %v945, %v728
  %v953 = vmul.f32 %v946, %v729
  %v954 = vmul.f32 %v947, %v730
  %v955 = vsel %vm119, %v948, 0.0
  %v956 = vsel %vm119, %v949, 0.0
  %v957 = vadd.f32 %v955, %v956
  %v958 = vsel %vm119, %v950, 0.0
  %v959 = vadd.f32 %v957, %v958
  %v960 = vsel %vm119, %v951, 0.0
  %v961 = vadd.f32 %v959, %v960
  %v962 = vsel %vm119, %v952, 0.0
  %v963 = vadd.f32 %v961, %v962
  %v964 = vsel %vm119, %v953, 0.0
  %v965 = vadd.f32 %v963, %v964
  %v966 = vsel %vm875, %v954, 0.0
  %v967 = vadd.f32 %v965, %v966
  %v968 = vrot.slane %v967, 4
  %v969 = vadd.f32 %v967, %v968
  %v970 = vrot.slane %v969, 2
  %v971 = vadd.f32 %v969, %v970
  %v972 = vrot.slane %v971, 1
  %v973 = vadd.f32 %v971, %v972
  %974 = vst.msk [vmem:[#allocation5] sm:$0x1] %vm875, %v973
  %v976 = vsel %vm119, 1.0, 0
  %v979 = vsel %vm119, %v941, 0
  %v982 = vsel %vm119, %v942, 0
  %v985 = vsel %vm119, %v943, 0
  %v988 = vsel %vm119, %v944, 0
  %v991 = vsel %vm119, %v945, 0
  %v994 = vsel %vm119, %v946, 0
  %v997 = vsel %vm119, %v947, 0
  %999 = vmatpush.xpose.msra.mxu0 0.0
  %1000 = vmatpush.xpose.msra.mxu0 0.0
  %1001 = vmatpush.xpose.msra.mxu0 0.0
  %1002 = vmatpush.xpose.msra.mxu0 0.0
  %1003 = vmatpush.xpose.msra.mxu0 0.0
  %1004 = vmatpush.xpose.msra.mxu0 0.0
  %1005 = vmatpush.xpose.msra.mxu0 0.0
  %1006 = vmatpush.xpose.msra.mxu0 0.0
  %1007 = vmatpush.xpose.msra.mxu0 0.0
  %1008 = vmatpush.xpose.msra.mxu0 %v997
  %1009 = vmatpush.xpose.msra.mxu0 %v994
  %1010 = vmatpush.xpose.msra.mxu0 %v991
  %1011 = vmatpush.xpose.msra.mxu0 %v988
  %1012 = vmatpush.xpose.msra.mxu0 %v985
  %1013 = vmatpush.xpose.msra.mxu0 %v982
  %1014 = vmatpush.xpose.msra.mxu0 %v979
  %1015 = vmatmul.f32.gmra.mxu0 %v976
  %v1016 = vpop.f32.mrf.mxu0
  %v1017 = vadd.f32 0.0, %v1016
  %1018 = vdwg.mxu0
  %v1019 = vmul.f32 %v1017, 0.03125
  %vm1020 = vcmask 393216
  %v1021 = vsel %vm1020, %v1019, 0.0
  %1022 = vadd.xlane.f32.xlu0 %v1021
  %v1023 = vpop.xlane.xlu0 %1022
  %v1024 = vrot.slane %v1023, 4
  %v1025 = vadd.f32 %v1023, %v1024
  %v1026 = vrot.slane %v1025, 2
  %v1027 = vadd.f32 %v1025, %v1026
  %v1028 = vrot.slane %v1027, 1
  %v1029 = vadd.f32 %v1027, %v1028
  %s1030 = vtos %v1029
  %v1031 = vrcp.pop 49.0
  %v1032 = vmul.f32 49.0, %v1031
  %v1033 = vsub.f32 1.0, %v1032
  %v1034 = vmul.f32 %v1031, %v1033
  %v1035 = vadd.f32 %v1031, %v1034
  %vm1036 = vweird.f32 %v1031
  %v1037 = vsel %vm1036, %v1031, %v1035
  %s1038 = vtos %v1037
  %s1039 = smul.f32 %s1030, %s1038
  %v1040 = vstv %s1039
  %v1041 = vsub.f32 %v1019, %v1040
  %v1042 = vmul.f32 %v1041, %v1041
  %v1043 = vsel %vm1020, %v1042, 0.0
  %1044 = vadd.xlane.f32.xlu0 %v1043
  %v1045 = vpop.xlane.xlu0 %1044
  %v1046 = vrot.slane %v1045, 4
  %v1047 = vadd.f32 %v1045, %v1046
  %v1048 = vrot.slane %v1047, 2
  %v1049 = vadd.f32 %v1047, %v1048
  %v1050 = vrot.slane %v1049, 1
  %v1051 = vadd.f32 %v1049, %v1050
  %s1052 = vtos %v1051
  %v1053 = vrcp.pop 48.0
  %v1054 = vmul.f32 48.0, %v1053
  %v1055 = vsub.f32 1.0, %v1054
  %v1056 = vmul.f32 %v1053, %v1055
  %v1057 = vadd.f32 %v1053, %v1056
  %vm1058 = vweird.f32 %v1053
  %v1059 = vsel %vm1058, %v1053, %v1057
  %s1060 = vtos %v1059
  %s1061 = smul.f32 %s1052, %s1060
  %v1062 = vstv %s1061
  %v1063 = vrsqrt.pop %v1062
  %v1064 = vmul.f32 %v1063, %v1062
  %v1065 = vmul.f32 %v1064, %v1063
  %v1066 = vmul.f32 0.5, %v1065
  %v1067 = vsub.f32 1.5, %v1066
  %v1068 = vmul.f32 %v1063, %v1067
  %v1069 = vmul.f32 %v1062, %v1068
  %vm1070 = vcmp.eq.f32.partialorder %v1062, inf
  %v1071 = vsel %vm1070, %v1062, %v1069
  %vm1072 = vcmp.eq.f32.partialorder %v1062, 0.0
  %v1073 = vand.u32 %v1062, 2147483648
  %v1074 = vsel %vm1072, %v1073, %v1071
  %s1075 = vtos %v1074
  %v1076 = vstv %s1075
  %v1077 = vrcp.pop %v1076
  %v1078 = vmul.f32 %v1076, %v1077
  %v1079 = vsub.f32 1.0, %v1078
  %v1080 = vmul.f32 %v1077, %v1079
  %v1081 = vadd.f32 %v1077, %v1080
  %vm1082 = vweird.f32 %v1076
  %vm1083 = vweird.f32 %v1077
  %vm1084 = vmor %vm1082, %vm1083
  %v1085 = vsel %vm1084, %v1077, %v1081
  %v1086 = vand.u32 2147483647, %v1076
  %vm1087 = vcmp.eq.f32.partialorder %v1086, 8.507059e+37
  %v1088 = vand.u32 %v1076, 2147483648
  %v1089 = vor.u32 1.1754944e-38, %v1088
  %v1090 = vsel %vm1087, %v1089, %v1085
  %v1091 = vmul.f32 %v1041, %v1090
  %v1092 = vmul.f32 %v1091, -30.0
  %1093 = vst.msk [vmem:[%s21] sm:$0x1] %vm1020, %v1092
  %s1094 = scalar_lea.vmem %s2, 56
  %v1095 = vld [vmem:[%s1094] sm:$0xff]
  %v1096 = vld [vmem:[%s1094 + $0x8] sm:$0xff]
  %v1097 = vld [vmem:[%s1094 + $0x10] sm:$0xff]
  %v1098 = vld [vmem:[%s1094 + $0x18] sm:$0xff]
  %v1099 = vld [vmem:[%s1094 + $0x20] sm:$0xff]
  %v1100 = vld [vmem:[%s1094 + $0x28] sm:$0xff]
  %v1101 = vld [vmem:[%s1094 + $0x30] sm:$0x1]
  %v1103 = vsel %vm119, %v1095, 0
  %v1106 = vsel %vm119, %v1096, 0
  %v1109 = vsel %vm119, %v1097, 0
  %v1112 = vsel %vm119, %v1098, 0
  %v1115 = vsel %vm119, %v1099, 0
  %v1118 = vsel %vm119, %v1100, 0
  %v1121 = vsel %vm119, %v1101, 0
  %1123 = vmatpush.msra.mxu0 0.0
  %1124 = vmatpush.msra.mxu0 0.0
  %1125 = vmatpush.msra.mxu0 0.0
  %1126 = vmatpush.msra.mxu0 0.0
  %1127 = vmatpush.msra.mxu0 0.0
  %1128 = vmatpush.msra.mxu0 0.0
  %1129 = vmatpush.msra.mxu0 0.0
  %1130 = vmatpush.msra.mxu0 0.0
  %1131 = vmatpush.msra.mxu0 0.0
  %1132 = vmatpush.msra.mxu0 0.0
  %1133 = vmatpush.msra.mxu0 0.0
  %1134 = vmatpush.msra.mxu0 0.0
  %1135 = vmatpush.msra.mxu0 %v718
  %1136 = vmatpush.msra.mxu0 %v717
  %1137 = vmatpush.msra.mxu0 %v716
  %1138 = vmatpush.msra.mxu0 %v715
  %1139 = vmatmul.f32.gmra.mxu0 %v1103
  %v1140 = vpop.f32.mrf.mxu0
  %v1141 = vadd.f32 0.0, %v1140
  %1142 = vmatmul.f32.gmra.mxu0 %v1106
  %v1143 = vpop.f32.mrf.mxu0
  %v1144 = vadd.f32 0.0, %v1143
  %1145 = vmatmul.f32.gmra.mxu0 %v1109
  %v1146 = vpop.f32.mrf.mxu0
  %v1147 = vadd.f32 0.0, %v1146
  %1148 = vmatmul.f32.gmra.mxu0 %v1112
  %v1149 = vpop.f32.mrf.mxu0
  %v1150 = vadd.f32 0.0, %v1149
  %1151 = vmatmul.f32.gmra.mxu0 %v1115
  %v1152 = vpop.f32.mrf.mxu0
  %v1153 = vadd.f32 0.0, %v1152
  %1154 = vmatmul.f32.gmra.mxu0 %v1118
  %v1155 = vpop.f32.mrf.mxu0
  %v1156 = vadd.f32 0.0, %v1155
  %1157 = vmatmul.f32.gmra.mxu0 %v1121
  %v1158 = vpop.f32.mrf.mxu0
  %v1159 = vadd.f32 0.0, %v1158
  %1160 = vdwg.mxu0
  %v1161 = vtanh.pop %v1141
  %v1162 = vtanh.pop %v1144
  %v1163 = vtanh.pop %v1147
  %v1164 = vtanh.pop %v1150
  %v1165 = vtanh.pop %v1153
  %v1166 = vtanh.pop %v1156
  %v1167 = vtanh.pop %v1159
  %v1168 = vperm.slane %v714, 1
  %v1169 = vadd.f32 %v1161, %v1168
  %v1170 = vadd.f32 %v1162, %v1168
  %v1171 = vadd.f32 %v1163, %v1168
  %v1172 = vadd.f32 %v1164, %v1168
  %v1173 = vadd.f32 %v1165, %v1168
  %v1174 = vadd.f32 %v1166, %v1168
  %v1175 = vadd.f32 %v1167, %v1168
  %v1177 = vsel %vm119, %v1169, 0
  %v1180 = vsel %vm119, %v1170, 0
  %v1183 = vsel %vm119, %v1171, 0
  %v1186 = vsel %vm119, %v1172, 0
  %v1189 = vsel %vm119, %v1173, 0
  %v1192 = vsel %vm119, %v1174, 0
  %v1195 = vsel %vm119, %v1175, 0
  %1197 = vmatpush.msra.mxu0 0.0
  %1198 = vmatpush.msra.mxu0 0.0
  %1199 = vmatpush.msra.mxu0 0.0
  %1200 = vmatpush.msra.mxu0 0.0
  %1201 = vmatpush.msra.mxu0 0.0
  %1202 = vmatpush.msra.mxu0 0.0
  %1203 = vmatpush.msra.mxu0 0.0
  %1204 = vmatpush.msra.mxu0 0.0
  %1205 = vmatpush.msra.mxu0 0.0
  %1206 = vmatpush.msra.mxu0 0.0
  %1207 = vmatpush.msra.mxu0 0.0
  %1208 = vmatpush.msra.mxu0 0.0
  %1209 = vmatpush.msra.mxu0 %v722
  %1210 = vmatpush.msra.mxu0 %v721
  %1211 = vmatpush.msra.mxu0 %v720
  %1212 = vmatpush.msra.mxu0 %v719
  %1213 = vmatmul.f32.gmra.mxu0 %v1177
  %v1214 = vpop.f32.mrf.mxu0
  %v1215 = vadd.f32 %v806, %v1214
  %1216 = vmatmul.f32.gmra.mxu0 %v1180
  %v1217 = vpop.f32.mrf.mxu0
  %v1218 = vadd.f32 %v806, %v1217
  %1219 = vmatmul.f32.gmra.mxu0 %v1183
  %v1220 = vpop.f32.mrf.mxu0
  %v1221 = vadd.f32 %v806, %v1220
  %1222 = vmatmul.f32.gmra.mxu0 %v1186
  %v1223 = vpop.f32.mrf.mxu0
  %v1224 = vadd.f32 %v806, %v1223
  %1225 = vmatmul.f32.gmra.mxu0 %v1189
  %v1226 = vpop.f32.mrf.mxu0
  %v1227 = vadd.f32 %v806, %v1226
  %1228 = vmatmul.f32.gmra.mxu0 %v1192
  %v1229 = vpop.f32.mrf.mxu0
  %v1230 = vadd.f32 %v806, %v1229
  %1231 = vmatmul.f32.gmra.mxu0 %v1195
  %v1232 = vpop.f32.mrf.mxu0
  %v1233 = vadd.f32 %v806, %v1232
  %1234 = vdwg.mxu0
  %v1235 = vsel %vm119, %v1215, -inf
  %v1236 = vsel %vm119, %v1218, -inf
  %v1237 = vsel %vm119, %v1221, -inf
  %v1238 = vsel %vm119, %v1224, -inf
  %v1239 = vsel %vm119, %v1227, -inf
  %v1240 = vmax.f32 %v1235, %v1239
  %v1241 = vsel %vm119, %v1230, -inf
  %v1242 = vmax.f32 %v1236, %v1241
  %v1243 = vsel %vm875, %v1233, -inf
  %v1244 = vmax.f32 %v1237, %v1243
  %v1245 = vmax.f32 %v1240, %v1242
  %v1246 = vmax.f32 %v1244, %v1238
  %v1247 = vmax.f32 %v1245, %v1246
  %v1248 = vrot.slane %v1247, 4
  %v1249 = vmax.f32 %v1247, %v1248
  %v1250 = vrot.slane %v1249, 2
  %v1251 = vmax.f32 %v1249, %v1250
  %v1252 = vrot.slane %v1251, 1
  %v1253 = vmax.f32 %v1251, %v1252
  %v1254 = vsub.f32 %v1215, %v1253
  %v1255 = vsub.f32 %v1218, %v1253
  %v1256 = vsub.f32 %v1221, %v1253
  %v1257 = vsub.f32 %v1224, %v1253
  %v1258 = vsub.f32 %v1227, %v1253
  %v1259 = vsub.f32 %v1230, %v1253
  %v1260 = vsub.f32 %v1233, %v1253
  %v1261 = vmul.f32 %v1254, 1.442695
  %v1262 = vpow.pop %v1261
  %v1263 = vmul.f32 %v1255, 1.442695
  %v1264 = vpow.pop %v1263
  %v1265 = vmul.f32 %v1256, 1.442695
  %v1266 = vpow.pop %v1265
  %v1267 = vmul.f32 %v1257, 1.442695
  %v1268 = vpow.pop %v1267
  %v1269 = vmul.f32 %v1258, 1.442695
  %v1270 = vpow.pop %v1269
  %v1271 = vmul.f32 %v1259, 1.442695
  %v1272 = vpow.pop %v1271
  %v1273 = vmul.f32 %v1260, 1.442695
  %v1274 = vpow.pop %v1273
  %v1275 = vsel %vm119, %v1262, 0.0
  %v1276 = vsel %vm119, %v1264, 0.0
  %v1277 = vadd.f32 %v1275, %v1276
  %v1278 = vsel %vm119, %v1266, 0.0
  %v1279 = vadd.f32 %v1277, %v1278
  %v1280 = vsel %vm119, %v1268, 0.0
  %v1281 = vadd.f32 %v1279, %v1280
  %v1282 = vsel %vm119, %v1270, 0.0
  %v1283 = vadd.f32 %v1281, %v1282
  %v1284 = vsel %vm119, %v1272, 0.0
  %v1285 = vadd.f32 %v1283, %v1284
  %v1286 = vsel %vm875, %v1274, 0.0
  %v1287 = vadd.f32 %v1285, %v1286
  %v1288 = vrot.slane %v1287, 4
  %v1289 = vadd.f32 %v1287, %v1288
  %v1290 = vrot.slane %v1289, 2
  %v1291 = vadd.f32 %v1289, %v1290
  %v1292 = vrot.slane %v1291, 1
  %v1293 = vadd.f32 %v1291, %v1292
  %v1294 = vrcp.pop %v1293
  %v1295 = vmul.f32 %v1293, %v1294
  %v1296 = vsub.f32 1.0, %v1295
  %v1297 = vmul.f32 %v1294, %v1296
  %v1298 = vadd.f32 %v1294, %v1297
  %vm1299 = vweird.f32 %v1293
  %vm1300 = vweird.f32 %v1294
  %vm1301 = vmor %vm1299, %vm1300
  %v1302 = vsel %vm1301, %v1294, %v1298
  %v1303 = vand.u32 2147483647, %v1293
  %vm1304 = vcmp.eq.f32.partialorder %v1303, 8.507059e+37
  %v1305 = vand.u32 %v1293, 2147483648
  %v1306 = vor.u32 1.1754944e-38, %v1305
  %v1307 = vsel %vm1304, %v1306, %v1302
  %v1308 = vmul.f32 %v1262, %v1307
  %v1309 = vmul.f32 %v1264, %v1307
  %v1310 = vmul.f32 %v1266, %v1307
  %v1311 = vmul.f32 %v1268, %v1307
  %v1312 = vmul.f32 %v1270, %v1307
  %v1313 = vmul.f32 %v1272, %v1307
  %v1314 = vmul.f32 %v1274, %v1307
  %v1315 = vmul.f32 %v1308, %v1095
  %v1316 = vmul.f32 %v1309, %v1096
  %v1317 = vmul.f32 %v1310, %v1097
  %v1318 = vmul.f32 %v1311, %v1098
  %v1319 = vmul.f32 %v1312, %v1099
  %v1320 = vmul.f32 %v1313, %v1100
  %v1321 = vmul.f32 %v1314, %v1101
  %v1322 = vsel %vm119, %v1315, 0.0
  %v1323 = vsel %vm119, %v1316, 0.0
  %v1324 = vadd.f32 %v1322, %v1323
  %v1325 = vsel %vm119, %v1317, 0.0
  %v1326 = vadd.f32 %v1324, %v1325
  %v1327 = vsel %vm119, %v1318, 0.0
  %v1328 = vadd.f32 %v1326, %v1327
  %v1329 = vsel %vm119, %v1319, 0.0
  %v1330 = vadd.f32 %v1328, %v1329
  %v1331 = vsel %vm119, %v1320, 0.0
  %v1332 = vadd.f32 %v1330, %v1331
  %v1333 = vsel %vm875, %v1321, 0.0
  %v1334 = vadd.f32 %v1332, %v1333
  %v1335 = vrot.slane %v1334, 4
  %v1336 = vadd.f32 %v1334, %v1335
  %v1337 = vrot.slane %v1336, 2
  %v1338 = vadd.f32 %v1336, %v1337
  %v1339 = vrot.slane %v1338, 1
  %v1340 = vadd.f32 %v1338, %v1339
  %1341 = vst.msk [vmem:[#allocation5 + $0x1] sm:$0x1] %vm875, %v1340
  %v1343 = vsel %vm119, %v1308, 0
  %v1346 = vsel %vm119, %v1309, 0
  %v1349 = vsel %vm119, %v1310, 0
  %v1352 = vsel %vm119, %v1311, 0
  %v1355 = vsel %vm119, %v1312, 0
  %v1358 = vsel %vm119, %v1313, 0
  %v1361 = vsel %vm119, %v1314, 0
  %1363 = vmatpush.xpose.msra.mxu0 0.0
  %1364 = vmatpush.xpose.msra.mxu0 0.0
  %1365 = vmatpush.xpose.msra.mxu0 0.0
  %1366 = vmatpush.xpose.msra.mxu0 0.0
  %1367 = vmatpush.xpose.msra.mxu0 0.0
  %1368 = vmatpush.xpose.msra.mxu0 0.0
  %1369 = vmatpush.xpose.msra.mxu0 0.0
  %1370 = vmatpush.xpose.msra.mxu0 0.0
  %1371 = vmatpush.xpose.msra.mxu0 0.0
  %1372 = vmatpush.xpose.msra.mxu0 %v1361
  %1373 = vmatpush.xpose.msra.mxu0 %v1358
  %1374 = vmatpush.xpose.msra.mxu0 %v1355
  %1375 = vmatpush.xpose.msra.mxu0 %v1352
  %1376 = vmatpush.xpose.msra.mxu0 %v1349
  %1377 = vmatpush.xpose.msra.mxu0 %v1346
  %1378 = vmatpush.xpose.msra.mxu0 %v1343
  %1379 = vmatmul.f32.gmra.mxu0 %v976
  %v1380 = vpop.f32.mrf.mxu0
  %v1381 = vadd.f32 0.0, %v1380
  %1382 = vdwg.mxu0
  %v1383 = vmul.f32 %v1381, 0.03125
  %v1384 = vsel %vm1020, %v1383, 0.0
  %1385 = vadd.xlane.f32.xlu0 %v1384
  %v1386 = vpop.xlane.xlu0 %1385
  %v1387 = vrot.slane %v1386, 4
  %v1388 = vadd.f32 %v1386, %v1387
  %v1389 = vrot.slane %v1388, 2
  %v1390 = vadd.f32 %v1388, %v1389
  %v1391 = vrot.slane %v1390, 1
  %v1392 = vadd.f32 %v1390, %v1391
  %s1393 = vtos %v1392
  %v1394 = vrcp.pop 49.0
  %v1395 = vmul.f32 49.0, %v1394
  %v1396 = vsub.f32 1.0, %v1395
  %v1397 = vmul.f32 %v1394, %v1396
  %v1398 = vadd.f32 %v1394, %v1397
  %vm1399 = vweird.f32 %v1394
  %v1400 = vsel %vm1399, %v1394, %v1398
  %s1401 = vtos %v1400
  %s1402 = smul.f32 %s1393, %s1401
  %v1403 = vstv %s1402
  %v1404 = vsub.f32 %v1383, %v1403
  %v1405 = vmul.f32 %v1404, %v1404
  %v1406 = vsel %vm1020, %v1405, 0.0
  %1407 = vadd.xlane.f32.xlu0 %v1406
  %v1408 = vpop.xlane.xlu0 %1407
  %v1409 = vrot.slane %v1408, 4
  %v1410 = vadd.f32 %v1408, %v1409
  %v1411 = vrot.slane %v1410, 2
  %v1412 = vadd.f32 %v1410, %v1411
  %v1413 = vrot.slane %v1412, 1
  %v1414 = vadd.f32 %v1412, %v1413
  %s1415 = vtos %v1414
  %v1416 = vrcp.pop 48.0
  %v1417 = vmul.f32 48.0, %v1416
  %v1418 = vsub.f32 1.0, %v1417
  %v1419 = vmul.f32 %v1416, %v1418
  %v1420 = vadd.f32 %v1416, %v1419
  %vm1421 = vweird.f32 %v1416
  %v1422 = vsel %vm1421, %v1416, %v1420
  %s1423 = vtos %v1422
  %s1424 = smul.f32 %s1415, %s1423
  %v1425 = vstv %s1424
  %v1426 = vrsqrt.pop %v1425
  %v1427 = vmul.f32 %v1426, %v1425
  %v1428 = vmul.f32 %v1427, %v1426
  %v1429 = vmul.f32 0.5, %v1428
  %v1430 = vsub.f32 1.5, %v1429
  %v1431 = vmul.f32 %v1426, %v1430
  %v1432 = vmul.f32 %v1425, %v1431
  %vm1433 = vcmp.eq.f32.partialorder %v1425, inf
  %v1434 = vsel %vm1433, %v1425, %v1432
  %vm1435 = vcmp.eq.f32.partialorder %v1425, 0.0
  %v1436 = vand.u32 %v1425, 2147483648
  %v1437 = vsel %vm1435, %v1436, %v1434
  %s1438 = vtos %v1437
  %v1439 = vstv %s1438
  %v1440 = vrcp.pop %v1439
  %v1441 = vmul.f32 %v1439, %v1440
  %v1442 = vsub.f32 1.0, %v1441
  %v1443 = vmul.f32 %v1440, %v1442
  %v1444 = vadd.f32 %v1440, %v1443
  %vm1445 = vweird.f32 %v1439
  %vm1446 = vweird.f32 %v1440
  %vm1447 = vmor %vm1445, %vm1446
  %v1448 = vsel %vm1447, %v1440, %v1444
  %v1449 = vand.u32 2147483647, %v1439
  %vm1450 = vcmp.eq.f32.partialorder %v1449, 8.507059e+37
  %v1451 = vand.u32 %v1439, 2147483648
  %v1452 = vor.u32 1.1754944e-38, %v1451
  %v1453 = vsel %vm1450, %v1452, %v1448
  %v1454 = vmul.f32 %v1404, %v1453
  %v1455 = vmul.f32 %v1454, -30.0
  %s1456 = scalar_lea.vmem %s21, 1
  %1457 = vst.msk [vmem:[%s1456] sm:$0x1] %vm1020, %v1455
  %v1458 = vld [vmem:[#allocation5] sm:$0x3]
  %v1459 = vld [vmem:[%s10] sm:$0xff]
  %v1460 = vld [vmem:[%s10 + $0x8] sm:$0xff]
  %v1461 = vld [vmem:[%s10 + $0x10] sm:$0xff]
  %v1462 = vld [vmem:[%s10 + $0x18] sm:$0xff]
  %v1463 = vld [vmem:[%s10 + $0x20] sm:$0xff]
  %v1464 = vld [vmem:[%s10 + $0x28] sm:$0xff]
  %v1465 = vld [vmem:[%s10 + $0x30] sm:$0xff]
  %v1466 = vld [vmem:[%s10 + $0x38] sm:$0xff]
  %v1467 = vld [vmem:[%s12] sm:$0x1]
  %v1469 = vperm.slane %v1467, 0
  %1471 = vmatpush.msra.mxu0 0.0
  %1472 = vmatpush.msra.mxu0 0.0
  %1473 = vmatpush.msra.mxu0 0.0
  %1474 = vmatpush.msra.mxu0 0.0
  %1475 = vmatpush.msra.mxu0 0.0
  %1476 = vmatpush.msra.mxu0 0.0
  %1477 = vmatpush.msra.mxu0 0.0
  %1478 = vmatpush.msra.mxu0 0.0
  %1479 = vmatpush.msra.mxu0 %v1466
  %1480 = vmatpush.msra.mxu0 %v1465
  %1481 = vmatpush.msra.mxu0 %v1464
  %1482 = vmatpush.msra.mxu0 %v1463
  %1483 = vmatpush.msra.mxu0 %v1462
  %1484 = vmatpush.msra.mxu0 %v1461
  %1485 = vmatpush.msra.mxu0 %v1460
  %1486 = vmatpush.msra.mxu0 %v1459
  %1487 = vmatmul.f32.gmra.mxu0 %v83
  %v1488 = vpop.f32.mrf.mxu0
  %v1489 = vadd.f32 %v1469, %v1488
  %1490 = vmatmul.f32.gmra.mxu0 %v86
  %v1491 = vpop.f32.mrf.mxu0
  %v1492 = vadd.f32 %v1469, %v1491
  %1493 = vdwg.mxu0
  %1494 = vst.msk [vmem:[#allocation3] sm:$0xff] %vm81, %v1489
  %1495 = vst.msk [vmem:[#allocation3 + $0x8] sm:$0xff] %vm81, %v1492
  %v1496 = vld [vmem:[%s13] sm:$0xff]
  %v1497 = vld [vmem:[%s13 + $0x8] sm:$0xff]
  %v1498 = vld [vmem:[%s13 + $0x10] sm:$0xff]
  %v1499 = vld [vmem:[%s13 + $0x18] sm:$0xff]
  %v1500 = vld [vmem:[%s13 + $0x20] sm:$0xff]
  %v1501 = vld [vmem:[%s13 + $0x28] sm:$0xff]
  %v1502 = vld [vmem:[%s13 + $0x30] sm:$0xff]
  %v1503 = vld [vmem:[%s13 + $0x38] sm:$0xff]
  %v1504 = vld [vmem:[%s15] sm:$0x1]
  %v1506 = vperm.slane %v1504, 0
  %1508 = vmatpush.msra.mxu0 0.0
  %1509 = vmatpush.msra.mxu0 0.0
  %1510 = vmatpush.msra.mxu0 0.0
  %1511 = vmatpush.msra.mxu0 0.0
  %1512 = vmatpush.msra.mxu0 0.0
  %1513 = vmatpush.msra.mxu0 0.0
  %1514 = vmatpush.msra.mxu0 0.0
  %1515 = vmatpush.msra.mxu0 0.0
  %1516 = vmatpush.msra.mxu0 %v1503
  %1517 = vmatpush.msra.mxu0 %v1502
  %1518 = vmatpush.msra.mxu0 %v1501
  %1519 = vmatpush.msra.mxu0 %v1500
  %1520 = vmatpush.msra.mxu0 %v1499
  %1521 = vmatpush.msra.mxu0 %v1498
  %1522 = vmatpush.msra.mxu0 %v1497
  %1523 = vmatpush.msra.mxu0 %v1496
  %1524 = vmatmul.f32.gmra.mxu0 %v83
  %v1525 = vpop.f32.mrf.mxu0
  %v1526 = vadd.f32 %v1506, %v1525
  %1527 = vmatmul.f32.gmra.mxu0 %v86
  %v1528 = vpop.f32.mrf.mxu0
  %v1529 = vadd.f32 %v1506, %v1528
  %1530 = vdwg.mxu0
  %1531 = vst.msk [vmem:[#allocation4] sm:$0xff] %vm81, %v1526
  %1532 = vst.msk [vmem:[#allocation4 + $0x8] sm:$0xff] %vm81, %v1529
  %v1533 = vld [vmem:[%s11] sm:$0xff]
  %v1534 = vld [vmem:[%s11 + $0x8] sm:$0xff]
  %v1535 = vld [vmem:[%s14] sm:$0xff]
  %v1536 = vld [vmem:[%s14 + $0x8] sm:$0xff]
  %v1537 = vld [vmem:[#allocation3] sm:$0x3]
  %vm1538 = vcmask 130048
  %v1540 = vsel %vm1538, %v1458, 0
  %1542 = vmatpush.msra.mxu0 0.0
  %1543 = vmatpush.msra.mxu0 0.0
  %1544 = vmatpush.msra.mxu0 0.0
  %1545 = vmatpush.msra.mxu0 0.0
  %1546 = vmatpush.msra.mxu0 0.0
  %1547 = vmatpush.msra.mxu0 0.0
  %1548 = vmatpush.msra.mxu0 0.0
  %1549 = vmatpush.msra.mxu0 0.0
  %1550 = vmatpush.msra.mxu0 0.0
  %1551 = vmatpush.msra.mxu0 0.0
  %1552 = vmatpush.msra.mxu0 0.0
  %1553 = vmatpush.msra.mxu0 0.0
  %1554 = vmatpush.msra.mxu0 0.0
  %1555 = vmatpush.msra.mxu0 0.0
  %1556 = vmatpush.msra.mxu0 %v1534
  %1557 = vmatpush.msra.mxu0 %v1533
  %1558 = vmatmul.f32.gmra.mxu0 %v1540
  %v1559 = vpop.f32.mrf.mxu0
  %v1560 = vadd.f32 0.0, %v1559
  %1561 = vdwg.mxu0
  %v1562 = vadd.f32 %v1537, %v1560
  %v1563 = vxor.u32 %v1562, 2147483648
  %v1564 = vmul.f32 %v1563, 1.442695
  %v1565 = vpow.pop %v1564
  %v1566 = vadd.f32 %v1565, 1.0
  %v1567 = vrcp.pop %v1566
  %v1568 = vmul.f32 %v1566, %v1567
  %v1569 = vsub.f32 1.0, %v1568
  %v1570 = vmul.f32 %v1567, %v1569
  %v1571 = vadd.f32 %v1567, %v1570
  %vm1572 = vweird.f32 %v1566
  %vm1573 = vweird.f32 %v1567
  %vm1574 = vmor %vm1572, %vm1573
  %v1575 = vsel %vm1574, %v1567, %v1571
  %v1576 = vand.u32 2147483647, %v1566
  %vm1577 = vcmp.eq.f32.partialorder %v1576, 8.507059e+37
  %v1578 = vand.u32 %v1566, 2147483648
  %v1579 = vor.u32 1.1754944e-38, %v1578
  %v1580 = vsel %vm1577, %v1579, %v1575
  %v1581 = vmul.f32 1.0, %v1580
  %v1582 = vtanh.pop %v1562
  %v1583 = vmul.f32 %v1581, 0.0
  %1585 = vrot.lane.b32.xlu0 %v1582, 80
  %v1586 = vpop.permute.xlu0 %1585
  %v1588 = vmul.f32 %v1581, %v1586
  %1590 = vrot.lane.b32.xlu0 %v1588, 16
  %v1591 = vpop.permute.xlu0 %1590
  %v1593 = vadd.f32 %v1583, %v1591
  %v1594 = vtanh.pop %v1593
  %1596 = vrot.lane.b32.xlu0 %v1594, 16
  %v1597 = vpop.permute.xlu0 %1596
  %v1599 = vmul.f32 %v1581, %v1597
  %1601 = vrot.lane.b32.xlu0 %v1599, 96
  %v1602 = vpop.permute.xlu0 %1601
  %vm1604 = vcmask 123904
  %1605 = vst.msk [vmem:[#allocation6] sm:$0x3] %vm1604, %v1602
  %v1606 = vld [vmem:[#allocation4 + $0xe] sm:$0x3]
  %1607 = vrot.lane.b32.xlu0 %v1458, 112
  %v1608 = vpop.permute.xlu0 %1607
  %v1609 = vsel %vm1538, %v1608, 0
  %1611 = vmatpush.msra.mxu0 0.0
  %1612 = vmatpush.msra.mxu0 0.0
  %1613 = vmatpush.msra.mxu0 0.0
  %1614 = vmatpush.msra.mxu0 0.0
  %1615 = vmatpush.msra.mxu0 0.0
  %1616 = vmatpush.msra.mxu0 0.0
  %1617 = vmatpush.msra.mxu0 0.0
  %1618 = vmatpush.msra.mxu0 0.0
  %1619 = vmatpush.msra.mxu0 0.0
  %1620 = vmatpush.msra.mxu0 0.0
  %1621 = vmatpush.msra.mxu0 0.0
  %1622 = vmatpush.msra.mxu0 0.0
  %1623 = vmatpush.msra.mxu0 0.0
  %1624 = vmatpush.msra.mxu0 0.0
  %1625 = vmatpush.msra.mxu0 %v1536
  %1626 = vmatpush.msra.mxu0 %v1535
  %1627 = vmatmul.f32.gmra.mxu0 %v1609
  %v1628 = vpop.f32.mrf.mxu0
  %v1629 = vadd.f32 0.0, %v1628
  %1630 = vdwg.mxu0
  %v1631 = vadd.f32 %v1606, %v1629
  %v1632 = vxor.u32 %v1631, 2147483648
  %v1633 = vmul.f32 %v1632, 1.442695
  %v1634 = vpow.pop %v1633
  %v1635 = vadd.f32 %v1634, 1.0
  %v1636 = vrcp.pop %v1635
  %v1637 = vmul.f32 %v1635, %v1636
  %v1638 = vsub.f32 1.0, %v1637
  %v1639 = vmul.f32 %v1636, %v1638
  %v1640 = vadd.f32 %v1636, %v1639
  %vm1641 = vweird.f32 %v1635
  %vm1642 = vweird.f32 %v1636
  %vm1643 = vmor %vm1641, %vm1642
  %v1644 = vsel %vm1643, %v1636, %v1640
  %v1645 = vand.u32 2147483647, %v1635
  %vm1646 = vcmp.eq.f32.partialorder %v1645, 8.507059e+37
  %v1647 = vand.u32 %v1635, 2147483648
  %v1648 = vor.u32 1.1754944e-38, %v1647
  %v1649 = vsel %vm1646, %v1648, %v1644
  %v1650 = vmul.f32 1.0, %v1649
  %v1651 = vtanh.pop %v1631
  %v1652 = vmul.f32 %v1650, 0.0
  %1654 = vrot.lane.b32.xlu0 %v1651, 80
  %v1655 = vpop.permute.xlu0 %1654
  %v1657 = vmul.f32 %v1650, %v1655
  %1659 = vrot.lane.b32.xlu0 %v1657, 16
  %v1660 = vpop.permute.xlu0 %1659
  %v1662 = vadd.f32 %v1652, %v1660
  %v1663 = vtanh.pop %v1662
  %1665 = vrot.lane.b32.xlu0 %v1663, 16
  %v1666 = vpop.permute.xlu0 %1665
  %v1668 = vmul.f32 %v1650, %v1666
  %1670 = vrot.lane.b32.xlu0 %v1668, 112
  %v1671 = vpop.permute.xlu0 %1670
  %vm1673 = vcmask 255104
  %1674 = vst.msk [vmem:[#allocation6 + $0xe] sm:$0x3] %vm1673, %v1671
  %v1675 = vld [vmem:[#allocation3 + $0x2] sm:$0x3]
  %v1676 = vsel %vm1538, %v1602, 0
  %1678 = vmatpush.msra.mxu0 0.0
  %1679 = vmatpush.msra.mxu0 0.0
  %1680 = vmatpush.msra.mxu0 0.0
  %1681 = vmatpush.msra.mxu0 0.0
  %1682 = vmatpush.msra.mxu0 0.0
  %1683 = vmatpush.msra.mxu0 0.0
  %1684 = vmatpush.msra.mxu0 0.0
  %1685 = vmatpush.msra.mxu0 0.0
  %1686 = vmatpush.msra.mxu0 0.0
  %1687 = vmatpush.msra.mxu0 0.0
  %1688 = vmatpush.msra.mxu0 0.0
  %1689 = vmatpush.msra.mxu0 0.0
  %1690 = vmatpush.msra.mxu0 0.0
  %1691 = vmatpush.msra.mxu0 0.0
  %1692 = vmatpush.msra.mxu0 %v1534
  %1693 = vmatpush.msra.mxu0 %v1533
  %1694 = vmatmul.f32.gmra.mxu0 %v1676
  %v1695 = vpop.f32.mrf.mxu0
  %v1696 = vadd.f32 0.0, %v1695
  %1697 = vdwg.mxu0
  %v1698 = vadd.f32 %v1675, %v1696
  %v1699 = vxor.u32 %v1698, 2147483648
  %v1700 = vmul.f32 %v1699, 1.442695
  %v1701 = vpow.pop %v1700
  %v1702 = vadd.f32 %v1701, 1.0
  %v1703 = vrcp.pop %v1702
  %v1704 = vmul.f32 %v1702, %v1703
  %v1705 = vsub.f32 1.0, %v1704
  %v1706 = vmul.f32 %v1703, %v1705
  %v1707 = vadd.f32 %v1703, %v1706
  %vm1708 = vweird.f32 %v1702
  %vm1709 = vweird.f32 %v1703
  %vm1710 = vmor %vm1708, %vm1709
  %v1711 = vsel %vm1710, %v1703, %v1707
  %v1712 = vand.u32 2147483647, %v1702
  %vm1713 = vcmp.eq.f32.partialorder %v1712, 8.507059e+37
  %v1714 = vand.u32 %v1702, 2147483648
  %v1715 = vor.u32 1.1754944e-38, %v1714
  %v1716 = vsel %vm1713, %v1715, %v1711
  %v1717 = vmul.f32 1.0, %v1716
  %v1718 = vtanh.pop %v1698
  %v1719 = vmul.f32 %v1717, %v1593
  %1721 = vrot.lane.b32.xlu0 %v1718, 80
  %v1722 = vpop.permute.xlu0 %1721
  %v1724 = vmul.f32 %v1717, %v1722
  %1726 = vrot.lane.b32.xlu0 %v1724, 16
  %v1727 = vpop.permute.xlu0 %1726
  %v1729 = vadd.f32 %v1719, %v1727
  %v1730 = vtanh.pop %v1729
  %1732 = vrot.lane.b32.xlu0 %v1730, 16
  %v1733 = vpop.permute.xlu0 %1732
  %v1735 = vmul.f32 %v1717, %v1733
  %1737 = vrot.lane.b32.xlu0 %v1735, 96
  %v1738 = vpop.permute.xlu0 %1737
  %1740 = vst.msk [vmem:[#allocation6 + $0x2] sm:$0x3] %vm1604, %v1738
  %v1741 = vld [vmem:[#allocation4 + $0xc] sm:$0x3]
  %1742 = vrot.lane.b32.xlu0 %v1668, 96
  %v1743 = vpop.permute.xlu0 %1742
  %v1744 = vsel %vm1538, %v1743, 0
  %1746 = vmatpush.msra.mxu0 0.0
  %1747 = vmatpush.msra.mxu0 0.0
  %1748 = vmatpush.msra.mxu0 0.0
  %1749 = vmatpush.msra.mxu0 0.0
  %1750 = vmatpush.msra.mxu0 0.0
  %1751 = vmatpush.msra.mxu0 0.0
  %1752 = vmatpush.msra.mxu0 0.0
  %1753 = vmatpush.msra.mxu0 0.0
  %1754 = vmatpush.msra.mxu0 0.0
  %1755 = vmatpush.msra.mxu0 0.0
  %1756 = vmatpush.msra.mxu0 0.0
  %1757 = vmatpush.msra.mxu0 0.0
  %1758 = vmatpush.msra.mxu0 0.0
  %1759 = vmatpush.msra.mxu0 0.0
  %1760 = vmatpush.msra.mxu0 %v1536
  %1761 = vmatpush.msra.mxu0 %v1535
  %1762 = vmatmul.f32.gmra.mxu0 %v1744
  %v1763 = vpop.f32.mrf.mxu0
  %v1764 = vadd.f32 0.0, %v1763
  %1765 = vdwg.mxu0
  %v1766 = vadd.f32 %v1741, %v1764
  %v1767 = vxor.u32 %v1766, 2147483648
  %v1768 = vmul.f32 %v1767, 1.442695
  %v1769 = vpow.pop %v1768
  %v1770 = vadd.f32 %v1769, 1.0
  %v1771 = vrcp.pop %v1770
  %v1772 = vmul.f32 %v1770, %v1771
  %v1773 = vsub.f32 1.0, %v1772
  %v1774 = vmul.f32 %v1771, %v1773
  %v1775 = vadd.f32 %v1771, %v1774
  %vm1776 = vweird.f32 %v1770
  %vm1777 = vweird.f32 %v1771
  %vm1778 = vmor %vm1776, %vm1777
  %v1779 = vsel %vm1778, %v1771, %v1775
  %v1780 = vand.u32 2147483647, %v1770
  %vm1781 = vcmp.eq.f32.partialorder %v1780, 8.507059e+37
  %v1782 = vand.u32 %v1770, 2147483648
  %v1783 = vor.u32 1.1754944e-38, %v1782
  %v1784 = vsel %vm1781, %v1783, %v1779
  %v1785 = vmul.f32 1.0, %v1784
  %v1786 = vtanh.pop %v1766
  %v1787 = vmul.f32 %v1785, %v1662
  %1789 = vrot.lane.b32.xlu0 %v1786, 80
  %v1790 = vpop.permute.xlu0 %1789
  %v1792 = vmul.f32 %v1785, %v1790
  %1794 = vrot.lane.b32.xlu0 %v1792, 16
  %v1795 = vpop.permute.xlu0 %1794
  %v1797 = vadd.f32 %v1787, %v1795
  %v1798 = vtanh.pop %v1797
  %1800 = vrot.lane.b32.xlu0 %v1798, 16
  %v1801 = vpop.permute.xlu0 %1800
  %v1803 = vmul.f32 %v1785, %v1801
  %1805 = vrot.lane.b32.xlu0 %v1803, 112
  %v1806 = vpop.permute.xlu0 %1805
  %1808 = vst.msk [vmem:[#allocation6 + $0xc] sm:$0x3] %vm1673, %v1806
  %v1809 = vld [vmem:[#allocation3 + $0x4] sm:$0x3]
  %v1810 = vsel %vm1538, %v1738, 0
  %1812 = vmatpush.msra.mxu0 0.0
  %1813 = vmatpush.msra.mxu0 0.0
  %1814 = vmatpush.msra.mxu0 0.0
  %1815 = vmatpush.msra.mxu0 0.0
  %1816 = vmatpush.msra.mxu0 0.0
  %1817 = vmatpush.msra.mxu0 0.0
  %1818 = vmatpush.msra.mxu0 0.0
  %1819 = vmatpush.msra.mxu0 0.0
  %1820 = vmatpush.msra.mxu0 0.0
  %1821 = vmatpush.msra.mxu0 0.0
  %1822 = vmatpush.msra.mxu0 0.0
  %1823 = vmatpush.msra.mxu0 0.0
  %1824 = vmatpush.msra.mxu0 0.0
  %1825 = vmatpush.msra.mxu0 0.0
  %1826 = vmatpush.msra.mxu0 %v1534
  %1827 = vmatpush.msra.mxu0 %v1533
  %1828 = vmatmul.f32.gmra.mxu0 %v1810
  %v1829 = vpop.f32.mrf.mxu0
  %v1830 = vadd.f32 0.0, %v1829
  %1831 = vdwg.mxu0
  %v1832 = vadd.f32 %v1809, %v1830
  %v1833 = vxor.u32 %v1832, 2147483648
  %v1834 = vmul.f32 %v1833, 1.442695
  %v1835 = vpow.pop %v1834
  %v1836 = vadd.f32 %v1835, 1.0
  %v1837 = vrcp.pop %v1836
  %v1838 = vmul.f32 %v1836, %v1837
  %v1839 = vsub.f32 1.0, %v1838
  %v1840 = vmul.f32 %v1837, %v1839
  %v1841 = vadd.f32 %v1837, %v1840
  %vm1842 = vweird.f32 %v1836
  %vm1843 = vweird.f32 %v1837
  %vm1844 = vmor %vm1842, %vm1843
  %v1845 = vsel %vm1844, %v1837, %v1841
  %v1846 = vand.u32 2147483647, %v1836
  %vm1847 = vcmp.eq.f32.partialorder %v1846, 8.507059e+37
  %v1848 = vand.u32 %v1836, 2147483648
  %v1849 = vor.u32 1.1754944e-38, %v1848
  %v1850 = vsel %vm1847, %v1849, %v1845
  %v1851 = vmul.f32 1.0, %v1850
  %v1852 = vtanh.pop %v1832
  %v1853 = vmul.f32 %v1851, %v1729
  %1855 = vrot.lane.b32.xlu0 %v1852, 80
  %v1856 = vpop.permute.xlu0 %1855
  %v1858 = vmul.f32 %v1851, %v1856
  %1860 = vrot.lane.b32.xlu0 %v1858, 16
  %v1861 = vpop.permute.xlu0 %1860
  %v1863 = vadd.f32 %v1853, %v1861
  %v1864 = vtanh.pop %v1863
  %1866 = vrot.lane.b32.xlu0 %v1864, 16
  %v1867 = vpop.permute.xlu0 %1866
  %v1869 = vmul.f32 %v1851, %v1867
  %1871 = vrot.lane.b32.xlu0 %v1869, 96
  %v1872 = vpop.permute.xlu0 %1871
  %1874 = vst.msk [vmem:[#allocation6 + $0x4] sm:$0x3] %vm1604, %v1872
  %v1875 = vld [vmem:[#allocation4 + $0xa] sm:$0x3]
  %1876 = vrot.lane.b32.xlu0 %v1803, 96
  %v1877 = vpop.permute.xlu0 %1876
  %v1878 = vsel %vm1538, %v1877, 0
  %1880 = vmatpush.msra.mxu0 0.0
  %1881 = vmatpush.msra.mxu0 0.0
  %1882 = vmatpush.msra.mxu0 0.0
  %1883 = vmatpush.msra.mxu0 0.0
  %1884 = vmatpush.msra.mxu0 0.0
  %1885 = vmatpush.msra.mxu0 0.0
  %1886 = vmatpush.msra.mxu0 0.0
  %1887 = vmatpush.msra.mxu0 0.0
  %1888 = vmatpush.msra.mxu0 0.0
  %1889 = vmatpush.msra.mxu0 0.0
  %1890 = vmatpush.msra.mxu0 0.0
  %1891 = vmatpush.msra.mxu0 0.0
  %1892 = vmatpush.msra.mxu0 0.0
  %1893 = vmatpush.msra.mxu0 0.0
  %1894 = vmatpush.msra.mxu0 %v1536
  %1895 = vmatpush.msra.mxu0 %v1535
  %1896 = vmatmul.f32.gmra.mxu0 %v1878
  %v1897 = vpop.f32.mrf.mxu0
  %v1898 = vadd.f32 0.0, %v1897
  %1899 = vdwg.mxu0
  %v1900 = vadd.f32 %v1875, %v1898
  %v1901 = vxor.u32 %v1900, 2147483648
  %v1902 = vmul.f32 %v1901, 1.442695
  %v1903 = vpow.pop %v1902
  %v1904 = vadd.f32 %v1903, 1.0
  %v1905 = vrcp.pop %v1904
  %v1906 = vmul.f32 %v1904, %v1905
  %v1907 = vsub.f32 1.0, %v1906
  %v1908 = vmul.f32 %v1905, %v1907
  %v1909 = vadd.f32 %v1905, %v1908
  %vm1910 = vweird.f32 %v1904
  %vm1911 = vweird.f32 %v1905
  %vm1912 = vmor %vm1910, %vm1911
  %v1913 = vsel %vm1912, %v1905, %v1909
  %v1914 = vand.u32 2147483647, %v1904
  %vm1915 = vcmp.eq.f32.partialorder %v1914, 8.507059e+37
  %v1916 = vand.u32 %v1904, 2147483648
  %v1917 = vor.u32 1.1754944e-38, %v1916
  %v1918 = vsel %vm1915, %v1917, %v1913
  %v1919 = vmul.f32 1.0, %v1918
  %v1920 = vtanh.pop %v1900
  %v1921 = vmul.f32 %v1919, %v1797
  %1923 = vrot.lane.b32.xlu0 %v1920, 80
  %v1924 = vpop.permute.xlu0 %1923
  %v1926 = vmul.f32 %v1919, %v1924
  %1928 = vrot.lane.b32.xlu0 %v1926, 16
  %v1929 = vpop.permute.xlu0 %1928
  %v1931 = vadd.f32 %v1921, %v1929
  %v1932 = vtanh.pop %v1931
  %1934 = vrot.lane.b32.xlu0 %v1932, 16
  %v1935 = vpop.permute.xlu0 %1934
  %v1937 = vmul.f32 %v1919, %v1935
  %1939 = vrot.lane.b32.xlu0 %v1937, 112
  %v1940 = vpop.permute.xlu0 %1939
  %1942 = vst.msk [vmem:[#allocation6 + $0xa] sm:$0x3] %vm1673, %v1940
  %v1943 = vld [vmem:[#allocation3 + $0x6] sm:$0x3]
  %v1944 = vsel %vm1538, %v1872, 0
  %1946 = vmatpush.msra.mxu0 0.0
  %1947 = vmatpush.msra.mxu0 0.0
  %1948 = vmatpush.msra.mxu0 0.0
  %1949 = vmatpush.msra.mxu0 0.0
  %1950 = vmatpush.msra.mxu0 0.0
  %1951 = vmatpush.msra.mxu0 0.0
  %1952 = vmatpush.msra.mxu0 0.0
  %1953 = vmatpush.msra.mxu0 0.0
  %1954 = vmatpush.msra.mxu0 0.0
  %1955 = vmatpush.msra.mxu0 0.0
  %1956 = vmatpush.msra.mxu0 0.0
  %1957 = vmatpush.msra.mxu0 0.0
  %1958 = vmatpush.msra.mxu0 0.0
  %1959 = vmatpush.msra.mxu0 0.0
  %1960 = vmatpush.msra.mxu0 %v1534
  %1961 = vmatpush.msra.mxu0 %v1533
  %1962 = vmatmul.f32.gmra.mxu0 %v1944
  %v1963 = vpop.f32.mrf.mxu0
  %v1964 = vadd.f32 0.0, %v1963
  %1965 = vdwg.mxu0
  %v1966 = vadd.f32 %v1943, %v1964
  %v1967 = vxor.u32 %v1966, 2147483648
  %v1968 = vmul.f32 %v1967, 1.442695
  %v1969 = vpow.pop %v1968
  %v1970 = vadd.f32 %v1969, 1.0
  %v1971 = vrcp.pop %v1970
  %v1972 = vmul.f32 %v1970, %v1971
  %v1973 = vsub.f32 1.0, %v1972
  %v1974 = vmul.f32 %v1971, %v1973
  %v1975 = vadd.f32 %v1971, %v1974
  %vm1976 = vweird.f32 %v1970
  %vm1977 = vweird.f32 %v1971
  %vm1978 = vmor %vm1976, %vm1977
  %v1979 = vsel %vm1978, %v1971, %v1975
  %v1980 = vand.u32 2147483647, %v1970
  %vm1981 = vcmp.eq.f32.partialorder %v1980, 8.507059e+37
  %v1982 = vand.u32 %v1970, 2147483648
  %v1983 = vor.u32 1.1754944e-38, %v1982
  %v1984 = vsel %vm1981, %v1983, %v1979
  %v1985 = vmul.f32 1.0, %v1984
  %v1986 = vtanh.pop %v1966
  %v1987 = vmul.f32 %v1985, %v1863
  %1989 = vrot.lane.b32.xlu0 %v1986, 80
  %v1990 = vpop.permute.xlu0 %1989
  %v1992 = vmul.f32 %v1985, %v1990
  %1994 = vrot.lane.b32.xlu0 %v1992, 16
  %v1995 = vpop.permute.xlu0 %1994
  %v1997 = vadd.f32 %v1987, %v1995
  %v1998 = vtanh.pop %v1997
  %2000 = vrot.lane.b32.xlu0 %v1998, 16
  %v2001 = vpop.permute.xlu0 %2000
  %v2003 = vmul.f32 %v1985, %v2001
  %2005 = vrot.lane.b32.xlu0 %v2003, 96
  %v2006 = vpop.permute.xlu0 %2005
  %2008 = vst.msk [vmem:[#allocation6 + $0x6] sm:$0x3] %vm1604, %v2006
  %v2009 = vld [vmem:[#allocation4 + $0x8] sm:$0x3]
  %2010 = vrot.lane.b32.xlu0 %v1937, 96
  %v2011 = vpop.permute.xlu0 %2010
  %v2012 = vsel %vm1538, %v2011, 0
  %2014 = vmatpush.msra.mxu0 0.0
  %2015 = vmatpush.msra.mxu0 0.0
  %2016 = vmatpush.msra.mxu0 0.0
  %2017 = vmatpush.msra.mxu0 0.0
  %2018 = vmatpush.msra.mxu0 0.0
  %2019 = vmatpush.msra.mxu0 0.0
  %2020 = vmatpush.msra.mxu0 0.0
  %2021 = vmatpush.msra.mxu0 0.0
  %2022 = vmatpush.msra.mxu0 0.0
  %2023 = vmatpush.msra.mxu0 0.0
  %2024 = vmatpush.msra.mxu0 0.0
  %2025 = vmatpush.msra.mxu0 0.0
  %2026 = vmatpush.msra.mxu0 0.0
  %2027 = vmatpush.msra.mxu0 0.0
  %2028 = vmatpush.msra.mxu0 %v1536
  %2029 = vmatpush.msra.mxu0 %v1535
  %2030 = vmatmul.f32.gmra.mxu0 %v2012
  %v2031 = vpop.f32.mrf.mxu0
  %v2032 = vadd.f32 0.0, %v2031
  %2033 = vdwg.mxu0
  %v2034 = vadd.f32 %v2009, %v2032
  %v2035 = vxor.u32 %v2034, 2147483648
  %v2036 = vmul.f32 %v2035, 1.442695
  %v2037 = vpow.pop %v2036
  %v2038 = vadd.f32 %v2037, 1.0
  %v2039 = vrcp.pop %v2038
  %v2040 = vmul.f32 %v2038, %v2039
  %v2041 = vsub.f32 1.0, %v2040
  %v2042 = vmul.f32 %v2039, %v2041
  %v2043 = vadd.f32 %v2039, %v2042
  %vm2044 = vweird.f32 %v2038
  %vm2045 = vweird.f32 %v2039
  %vm2046 = vmor %vm2044, %vm2045
  %v2047 = vsel %vm2046, %v2039, %v2043
  %v2048 = vand.u32 2147483647, %v2038
  %vm2049 = vcmp.eq.f32.partialorder %v2048, 8.507059e+37
  %v2050 = vand.u32 %v2038, 2147483648
  %v2051 = vor.u32 1.1754944e-38, %v2050
  %v2052 = vsel %vm2049, %v2051, %v2047
  %v2053 = vmul.f32 1.0, %v2052
  %v2054 = vtanh.pop %v2034
  %v2055 = vmul.f32 %v2053, %v1931
  %2057 = vrot.lane.b32.xlu0 %v2054, 80
  %v2058 = vpop.permute.xlu0 %2057
  %v2060 = vmul.f32 %v2053, %v2058
  %2062 = vrot.lane.b32.xlu0 %v2060, 16
  %v2063 = vpop.permute.xlu0 %2062
  %v2065 = vadd.f32 %v2055, %v2063
  %v2066 = vtanh.pop %v2065
  %2068 = vrot.lane.b32.xlu0 %v2066, 16
  %v2069 = vpop.permute.xlu0 %2068
  %v2071 = vmul.f32 %v2053, %v2069
  %2073 = vrot.lane.b32.xlu0 %v2071, 112
  %v2074 = vpop.permute.xlu0 %2073
  %2076 = vst.msk [vmem:[#allocation6 + $0x8] sm:$0x3] %vm1673, %v2074
  %v2077 = vld [vmem:[#allocation3 + $0x8] sm:$0x3]
  %v2078 = vsel %vm1538, %v2006, 0
  %2080 = vmatpush.msra.mxu0 0.0
  %2081 = vmatpush.msra.mxu0 0.0
  %2082 = vmatpush.msra.mxu0 0.0
  %2083 = vmatpush.msra.mxu0 0.0
  %2084 = vmatpush.msra.mxu0 0.0
  %2085 = vmatpush.msra.mxu0 0.0
  %2086 = vmatpush.msra.mxu0 0.0
  %2087 = vmatpush.msra.mxu0 0.0
  %2088 = vmatpush.msra.mxu0 0.0
  %2089 = vmatpush.msra.mxu0 0.0
  %2090 = vmatpush.msra.mxu0 0.0
  %2091 = vmatpush.msra.mxu0 0.0
  %2092 = vmatpush.msra.mxu0 0.0
  %2093 = vmatpush.msra.mxu0 0.0
  %2094 = vmatpush.msra.mxu0 %v1534
  %2095 = vmatpush.msra.mxu0 %v1533
  %2096 = vmatmul.f32.gmra.mxu0 %v2078
  %v2097 = vpop.f32.mrf.mxu0
  %v2098 = vadd.f32 0.0, %v2097
  %2099 = vdwg.mxu0
  %v2100 = vadd.f32 %v2077, %v2098
  %v2101 = vxor.u32 %v2100, 2147483648
  %v2102 = vmul.f32 %v2101, 1.442695
  %v2103 = vpow.pop %v2102
  %v2104 = vadd.f32 %v2103, 1.0
  %v2105 = vrcp.pop %v2104
  %v2106 = vmul.f32 %v2104, %v2105
  %v2107 = vsub.f32 1.0, %v2106
  %v2108 = vmul.f32 %v2105, %v2107
  %v2109 = vadd.f32 %v2105, %v2108
  %vm2110 = vweird.f32 %v2104
  %vm2111 = vweird.f32 %v2105
  %vm2112 = vmor %vm2110, %vm2111
  %v2113 = vsel %vm2112, %v2105, %v2109
  %v2114 = vand.u32 2147483647, %v2104
  %vm2115 = vcmp.eq.f32.partialorder %v2114, 8.507059e+37
  %v2116 = vand.u32 %v2104, 2147483648
  %v2117 = vor.u32 1.1754944e-38, %v2116
  %v2118 = vsel %vm2115, %v2117, %v2113
  %v2119 = vmul.f32 1.0, %v2118
  %v2120 = vtanh.pop %v2100
  %v2121 = vmul.f32 %v2119, %v1997
  %2123 = vrot.lane.b32.xlu0 %v2120, 80
  %v2124 = vpop.permute.xlu0 %2123
  %v2126 = vmul.f32 %v2119, %v2124
  %2128 = vrot.lane.b32.xlu0 %v2126, 16
  %v2129 = vpop.permute.xlu0 %2128
  %v2131 = vadd.f32 %v2121, %v2129
  %v2132 = vtanh.pop %v2131
  %2134 = vrot.lane.b32.xlu0 %v2132, 16
  %v2135 = vpop.permute.xlu0 %2134
  %v2137 = vmul.f32 %v2119, %v2135
  %2139 = vrot.lane.b32.xlu0 %v2137, 96
  %v2140 = vpop.permute.xlu0 %2139
  %2142 = vst.msk [vmem:[#allocation6 + $0x8] sm:$0x3] %vm1604, %v2140
  %v2143 = vld [vmem:[#allocation4 + $0x6] sm:$0x3]
  %2144 = vrot.lane.b32.xlu0 %v2071, 96
  %v2145 = vpop.permute.xlu0 %2144
  %v2146 = vsel %vm1538, %v2145, 0
  %2148 = vmatpush.msra.mxu0 0.0
  %2149 = vmatpush.msra.mxu0 0.0
  %2150 = vmatpush.msra.mxu0 0.0
  %2151 = vmatpush.msra.mxu0 0.0
  %2152 = vmatpush.msra.mxu0 0.0
  %2153 = vmatpush.msra.mxu0 0.0
  %2154 = vmatpush.msra.mxu0 0.0
  %2155 = vmatpush.msra.mxu0 0.0
  %2156 = vmatpush.msra.mxu0 0.0
  %2157 = vmatpush.msra.mxu0 0.0
  %2158 = vmatpush.msra.mxu0 0.0
  %2159 = vmatpush.msra.mxu0 0.0
  %2160 = vmatpush.msra.mxu0 0.0
  %2161 = vmatpush.msra.mxu0 0.0
  %2162 = vmatpush.msra.mxu0 %v1536
  %2163 = vmatpush.msra.mxu0 %v1535
  %2164 = vmatmul.f32.gmra.mxu0 %v2146
  %v2165 = vpop.f32.mrf.mxu0
  %v2166 = vadd.f32 0.0, %v2165
  %2167 = vdwg.mxu0
  %v2168 = vadd.f32 %v2143, %v2166
  %v2169 = vxor.u32 %v2168, 2147483648
  %v2170 = vmul.f32 %v2169, 1.442695
  %v2171 = vpow.pop %v2170
  %v2172 = vadd.f32 %v2171, 1.0
  %v2173 = vrcp.pop %v2172
  %v2174 = vmul.f32 %v2172, %v2173
  %v2175 = vsub.f32 1.0, %v2174
  %v2176 = vmul.f32 %v2173, %v2175
  %v2177 = vadd.f32 %v2173, %v2176
  %vm2178 = vweird.f32 %v2172
  %vm2179 = vweird.f32 %v2173
  %vm2180 = vmor %vm2178, %vm2179
  %v2181 = vsel %vm2180, %v2173, %v2177
  %v2182 = vand.u32 2147483647, %v2172
  %vm2183 = vcmp.eq.f32.partialorder %v2182, 8.507059e+37
  %v2184 = vand.u32 %v2172, 2147483648
  %v2185 = vor.u32 1.1754944e-38, %v2184
  %v2186 = vsel %vm2183, %v2185, %v2181
  %v2187 = vmul.f32 1.0, %v2186
  %v2188 = vtanh.pop %v2168
  %v2189 = vmul.f32 %v2187, %v2065
  %2191 = vrot.lane.b32.xlu0 %v2188, 80
  %v2192 = vpop.permute.xlu0 %2191
  %v2194 = vmul.f32 %v2187, %v2192
  %2196 = vrot.lane.b32.xlu0 %v2194, 16
  %v2197 = vpop.permute.xlu0 %2196
  %v2199 = vadd.f32 %v2189, %v2197
  %v2200 = vtanh.pop %v2199
  %2202 = vrot.lane.b32.xlu0 %v2200, 16
  %v2203 = vpop.permute.xlu0 %2202
  %v2205 = vmul.f32 %v2187, %v2203
  %2207 = vrot.lane.b32.xlu0 %v2205, 112
  %v2208 = vpop.permute.xlu0 %2207
  %2210 = vst.msk [vmem:[#allocation6 + $0x6] sm:$0x3] %vm1673, %v2208
  %v2211 = vld [vmem:[#allocation3 + $0xa] sm:$0x3]
  %v2212 = vsel %vm1538, %v2140, 0
  %2214 = vmatpush.msra.mxu0 0.0
  %2215 = vmatpush.msra.mxu0 0.0
  %2216 = vmatpush.msra.mxu0 0.0
  %2217 = vmatpush.msra.mxu0 0.0
  %2218 = vmatpush.msra.mxu0 0.0
  %2219 = vmatpush.msra.mxu0 0.0
  %2220 = vmatpush.msra.mxu0 0.0
  %2221 = vmatpush.msra.mxu0 0.0
  %2222 = vmatpush.msra.mxu0 0.0
  %2223 = vmatpush.msra.mxu0 0.0
  %2224 = vmatpush.msra.mxu0 0.0
  %2225 = vmatpush.msra.mxu0 0.0
  %2226 = vmatpush.msra.mxu0 0.0
  %2227 = vmatpush.msra.mxu0 0.0
  %2228 = vmatpush.msra.mxu0 %v1534
  %2229 = vmatpush.msra.mxu0 %v1533
  %2230 = vmatmul.f32.gmra.mxu0 %v2212
  %v2231 = vpop.f32.mrf.mxu0
  %v2232 = vadd.f32 0.0, %v2231
  %2233 = vdwg.mxu0
  %v2234 = vadd.f32 %v2211, %v2232
  %v2235 = vxor.u32 %v2234, 2147483648
  %v2236 = vmul.f32 %v2235, 1.442695
  %v2237 = vpow.pop %v2236
  %v2238 = vadd.f32 %v2237, 1.0
  %v2239 = vrcp.pop %v2238
  %v2240 = vmul.f32 %v2238, %v2239
  %v2241 = vsub.f32 1.0, %v2240
  %v2242 = vmul.f32 %v2239, %v2241
  %v2243 = vadd.f32 %v2239, %v2242
  %vm2244 = vweird.f32 %v2238
  %vm2245 = vweird.f32 %v2239
  %vm2246 = vmor %vm2244, %vm2245
  %v2247 = vsel %vm2246, %v2239, %v2243
  %v2248 = vand.u32 2147483647, %v2238
  %vm2249 = vcmp.eq.f32.partialorder %v2248, 8.507059e+37
  %v2250 = vand.u32 %v2238, 2147483648
  %v2251 = vor.u32 1.1754944e-38, %v2250
  %v2252 = vsel %vm2249, %v2251, %v2247
  %v2253 = vmul.f32 1.0, %v2252
  %v2254 = vtanh.pop %v2234
  %v2255 = vmul.f32 %v2253, %v2131
  %2257 = vrot.lane.b32.xlu0 %v2254, 80
  %v2258 = vpop.permute.xlu0 %2257
  %v2260 = vmul.f32 %v2253, %v2258
  %2262 = vrot.lane.b32.xlu0 %v2260, 16
  %v2263 = vpop.permute.xlu0 %2262
  %v2265 = vadd.f32 %v2255, %v2263
  %v2266 = vtanh.pop %v2265
  %2268 = vrot.lane.b32.xlu0 %v2266, 16
  %v2269 = vpop.permute.xlu0 %2268
  %v2271 = vmul.f32 %v2253, %v2269
  %2273 = vrot.lane.b32.xlu0 %v2271, 96
  %v2274 = vpop.permute.xlu0 %2273
  %2276 = vst.msk [vmem:[#allocation6 + $0xa] sm:$0x3] %vm1604, %v2274
  %v2277 = vld [vmem:[#allocation4 + $0x4] sm:$0x3]
  %2278 = vrot.lane.b32.xlu0 %v2205, 96
  %v2279 = vpop.permute.xlu0 %2278
  %v2280 = vsel %vm1538, %v2279, 0
  %2282 = vmatpush.msra.mxu0 0.0
  %2283 = vmatpush.msra.mxu0 0.0
  %2284 = vmatpush.msra.mxu0 0.0
  %2285 = vmatpush.msra.mxu0 0.0
  %2286 = vmatpush.msra.mxu0 0.0
  %2287 = vmatpush.msra.mxu0 0.0
  %2288 = vmatpush.msra.mxu0 0.0
  %2289 = vmatpush.msra.mxu0 0.0
  %2290 = vmatpush.msra.mxu0 0.0
  %2291 = vmatpush.msra.mxu0 0.0
  %2292 = vmatpush.msra.mxu0 0.0
  %2293 = vmatpush.msra.mxu0 0.0
  %2294 = vmatpush.msra.mxu0 0.0
  %2295 = vmatpush.msra.mxu0 0.0
  %2296 = vmatpush.msra.mxu0 %v1536
  %2297 = vmatpush.msra.mxu0 %v1535
  %2298 = vmatmul.f32.gmra.mxu0 %v2280
  %v2299 = vpop.f32.mrf.mxu0
  %v2300 = vadd.f32 0.0, %v2299
  %2301 = vdwg.mxu0
  %v2302 = vadd.f32 %v2277, %v2300
  %v2303 = vxor.u32 %v2302, 2147483648
  %v2304 = vmul.f32 %v2303, 1.442695
  %v2305 = vpow.pop %v2304
  %v2306 = vadd.f32 %v2305, 1.0
  %v2307 = vrcp.pop %v2306
  %v2308 = vmul.f32 %v2306, %v2307
  %v2309 = vsub.f32 1.0, %v2308
  %v2310 = vmul.f32 %v2307, %v2309
  %v2311 = vadd.f32 %v2307, %v2310
  %vm2312 = vweird.f32 %v2306
  %vm2313 = vweird.f32 %v2307
  %vm2314 = vmor %vm2312, %vm2313
  %v2315 = vsel %vm2314, %v2307, %v2311
  %v2316 = vand.u32 2147483647, %v2306
  %vm2317 = vcmp.eq.f32.partialorder %v2316, 8.507059e+37
  %v2318 = vand.u32 %v2306, 2147483648
  %v2319 = vor.u32 1.1754944e-38, %v2318
  %v2320 = vsel %vm2317, %v2319, %v2315
  %v2321 = vmul.f32 1.0, %v2320
  %v2322 = vtanh.pop %v2302
  %v2323 = vmul.f32 %v2321, %v2199
  %2325 = vrot.lane.b32.xlu0 %v2322, 80
  %v2326 = vpop.permute.xlu0 %2325
  %v2328 = vmul.f32 %v2321, %v2326
  %2330 = vrot.lane.b32.xlu0 %v2328, 16
  %v2331 = vpop.permute.xlu0 %2330
  %v2333 = vadd.f32 %v2323, %v2331
  %v2334 = vtanh.pop %v2333
  %2336 = vrot.lane.b32.xlu0 %v2334, 16
  %v2337 = vpop.permute.xlu0 %2336
  %v2339 = vmul.f32 %v2321, %v2337
  %2341 = vrot.lane.b32.xlu0 %v2339, 112
  %v2342 = vpop.permute.xlu0 %2341
  %2344 = vst.msk [vmem:[#allocation6 + $0x4] sm:$0x3] %vm1673, %v2342
  %v2345 = vld [vmem:[#allocation3 + $0xc] sm:$0x3]
  %v2346 = vsel %vm1538, %v2274, 0
  %2348 = vmatpush.msra.mxu0 0.0
  %2349 = vmatpush.msra.mxu0 0.0
  %2350 = vmatpush.msra.mxu0 0.0
  %2351 = vmatpush.msra.mxu0 0.0
  %2352 = vmatpush.msra.mxu0 0.0
  %2353 = vmatpush.msra.mxu0 0.0
  %2354 = vmatpush.msra.mxu0 0.0
  %2355 = vmatpush.msra.mxu0 0.0
  %2356 = vmatpush.msra.mxu0 0.0
  %2357 = vmatpush.msra.mxu0 0.0
  %2358 = vmatpush.msra.mxu0 0.0
  %2359 = vmatpush.msra.mxu0 0.0
  %2360 = vmatpush.msra.mxu0 0.0
  %2361 = vmatpush.msra.mxu0 0.0
  %2362 = vmatpush.msra.mxu0 %v1534
  %2363 = vmatpush.msra.mxu0 %v1533
  %2364 = vmatmul.f32.gmra.mxu0 %v2346
  %v2365 = vpop.f32.mrf.mxu0
  %v2366 = vadd.f32 0.0, %v2365
  %2367 = vdwg.mxu0
  %v2368 = vadd.f32 %v2345, %v2366
  %v2369 = vxor.u32 %v2368, 2147483648
  %v2370 = vmul.f32 %v2369, 1.442695
  %v2371 = vpow.pop %v2370
  %v2372 = vadd.f32 %v2371, 1.0
  %v2373 = vrcp.pop %v2372
  %v2374 = vmul.f32 %v2372, %v2373
  %v2375 = vsub.f32 1.0, %v2374
  %v2376 = vmul.f32 %v2373, %v2375
  %v2377 = vadd.f32 %v2373, %v2376
  %vm2378 = vweird.f32 %v2372
  %vm2379 = vweird.f32 %v2373
  %vm2380 = vmor %vm2378, %vm2379
  %v2381 = vsel %vm2380, %v2373, %v2377
  %v2382 = vand.u32 2147483647, %v2372
  %vm2383 = vcmp.eq.f32.partialorder %v2382, 8.507059e+37
  %v2384 = vand.u32 %v2372, 2147483648
  %v2385 = vor.u32 1.1754944e-38, %v2384
  %v2386 = vsel %vm2383, %v2385, %v2381
  %v2387 = vmul.f32 1.0, %v2386
  %v2388 = vtanh.pop %v2368
  %v2389 = vmul.f32 %v2387, %v2265
  %2391 = vrot.lane.b32.xlu0 %v2388, 80
  %v2392 = vpop.permute.xlu0 %2391
  %v2394 = vmul.f32 %v2387, %v2392
  %2396 = vrot.lane.b32.xlu0 %v2394, 16
  %v2397 = vpop.permute.xlu0 %2396
  %v2399 = vadd.f32 %v2389, %v2397
  %v2400 = vtanh.pop %v2399
  %2402 = vrot.lane.b32.xlu0 %v2400, 16
  %v2403 = vpop.permute.xlu0 %2402
  %v2405 = vmul.f32 %v2387, %v2403
  %2407 = vrot.lane.b32.xlu0 %v2405, 96
  %v2408 = vpop.permute.xlu0 %2407
  %2410 = vst.msk [vmem:[#allocation6 + $0xc] sm:$0x3] %vm1604, %v2408
  %v2411 = vld [vmem:[#allocation4 + $0x2] sm:$0x3]
  %2412 = vrot.lane.b32.xlu0 %v2339, 96
  %v2413 = vpop.permute.xlu0 %2412
  %v2414 = vsel %vm1538, %v2413, 0
  %2416 = vmatpush.msra.mxu0 0.0
  %2417 = vmatpush.msra.mxu0 0.0
  %2418 = vmatpush.msra.mxu0 0.0
  %2419 = vmatpush.msra.mxu0 0.0
  %2420 = vmatpush.msra.mxu0 0.0
  %2421 = vmatpush.msra.mxu0 0.0
  %2422 = vmatpush.msra.mxu0 0.0
  %2423 = vmatpush.msra.mxu0 0.0
  %2424 = vmatpush.msra.mxu0 0.0
  %2425 = vmatpush.msra.mxu0 0.0
  %2426 = vmatpush.msra.mxu0 0.0
  %2427 = vmatpush.msra.mxu0 0.0
  %2428 = vmatpush.msra.mxu0 0.0
  %2429 = vmatpush.msra.mxu0 0.0
  %2430 = vmatpush.msra.mxu0 %v1536
  %2431 = vmatpush.msra.mxu0 %v1535
  %2432 = vmatmul.f32.gmra.mxu0 %v2414
  %v2433 = vpop.f32.mrf.mxu0
  %v2434 = vadd.f32 0.0, %v2433
  %2435 = vdwg.mxu0
  %v2436 = vadd.f32 %v2411, %v2434
  %v2437 = vxor.u32 %v2436, 2147483648
  %v2438 = vmul.f32 %v2437, 1.442695
  %v2439 = vpow.pop %v2438
  %v2440 = vadd.f32 %v2439, 1.0
  %v2441 = vrcp.pop %v2440
  %v2442 = vmul.f32 %v2440, %v2441
  %v2443 = vsub.f32 1.0, %v2442
  %v2444 = vmul.f32 %v2441, %v2443
  %v2445 = vadd.f32 %v2441, %v2444
  %vm2446 = vweird.f32 %v2440
  %vm2447 = vweird.f32 %v2441
  %vm2448 = vmor %vm2446, %vm2447
  %v2449 = vsel %vm2448, %v2441, %v2445
  %v2450 = vand.u32 2147483647, %v2440
  %vm2451 = vcmp.eq.f32.partialorder %v2450, 8.507059e+37
  %v2452 = vand.u32 %v2440, 2147483648
  %v2453 = vor.u32 1.1754944e-38, %v2452
  %v2454 = vsel %vm2451, %v2453, %v2449
  %v2455 = vmul.f32 1.0, %v2454
  %v2456 = vtanh.pop %v2436
  %v2457 = vmul.f32 %v2455, %v2333
  %2459 = vrot.lane.b32.xlu0 %v2456, 80
  %v2460 = vpop.permute.xlu0 %2459
  %v2462 = vmul.f32 %v2455, %v2460
  %2464 = vrot.lane.b32.xlu0 %v2462, 16
  %v2465 = vpop.permute.xlu0 %2464
  %v2467 = vadd.f32 %v2457, %v2465
  %v2468 = vtanh.pop %v2467
  %2470 = vrot.lane.b32.xlu0 %v2468, 16
  %v2471 = vpop.permute.xlu0 %2470
  %v2473 = vmul.f32 %v2455, %v2471
  %2475 = vrot.lane.b32.xlu0 %v2473, 112
  %v2476 = vpop.permute.xlu0 %2475
  %2478 = vst.msk [vmem:[#allocation6 + $0x2] sm:$0x3] %vm1673, %v2476
  %v2479 = vld [vmem:[#allocation3 + $0xe] sm:$0x3]
  %v2480 = vsel %vm1538, %v2408, 0
  %2482 = vmatpush.msra.mxu0 0.0
  %2483 = vmatpush.msra.mxu0 0.0
  %2484 = vmatpush.msra.mxu0 0.0
  %2485 = vmatpush.msra.mxu0 0.0
  %2486 = vmatpush.msra.mxu0 0.0
  %2487 = vmatpush.msra.mxu0 0.0
  %2488 = vmatpush.msra.mxu0 0.0
  %2489 = vmatpush.msra.mxu0 0.0
  %2490 = vmatpush.msra.mxu0 0.0
  %2491 = vmatpush.msra.mxu0 0.0
  %2492 = vmatpush.msra.mxu0 0.0
  %2493 = vmatpush.msra.mxu0 0.0
  %2494 = vmatpush.msra.mxu0 0.0
  %2495 = vmatpush.msra.mxu0 0.0
  %2496 = vmatpush.msra.mxu0 %v1534
  %2497 = vmatpush.msra.mxu0 %v1533
  %2498 = vmatmul.f32.gmra.mxu0 %v2480
  %v2499 = vpop.f32.mrf.mxu0
  %v2500 = vadd.f32 0.0, %v2499
  %2501 = vdwg.mxu0
  %v2502 = vadd.f32 %v2479, %v2500
  %v2503 = vxor.u32 %v2502, 2147483648
  %v2504 = vmul.f32 %v2503, 1.442695
  %v2505 = vpow.pop %v2504
  %v2506 = vadd.f32 %v2505, 1.0
  %v2507 = vrcp.pop %v2506
  %v2508 = vmul.f32 %v2506, %v2507
  %v2509 = vsub.f32 1.0, %v2508
  %v2510 = vmul.f32 %v2507, %v2509
  %v2511 = vadd.f32 %v2507, %v2510
  %vm2512 = vweird.f32 %v2506
  %vm2513 = vweird.f32 %v2507
  %vm2514 = vmor %vm2512, %vm2513
  %v2515 = vsel %vm2514, %v2507, %v2511
  %v2516 = vand.u32 2147483647, %v2506
  %vm2517 = vcmp.eq.f32.partialorder %v2516, 8.507059e+37
  %v2518 = vand.u32 %v2506, 2147483648
  %v2519 = vor.u32 1.1754944e-38, %v2518
  %v2520 = vsel %vm2517, %v2519, %v2515
  %v2521 = vmul.f32 1.0, %v2520
  %v2522 = vtanh.pop %v2502
  %v2523 = vmul.f32 %v2521, %v2399
  %2525 = vrot.lane.b32.xlu0 %v2522, 80
  %v2526 = vpop.permute.xlu0 %2525
  %v2528 = vmul.f32 %v2521, %v2526
  %2530 = vrot.lane.b32.xlu0 %v2528, 16
  %v2531 = vpop.permute.xlu0 %2530
  %v2533 = vadd.f32 %v2523, %v2531
  %v2534 = vtanh.pop %v2533
  %2536 = vrot.lane.b32.xlu0 %v2534, 16
  %v2537 = vpop.permute.xlu0 %2536
  %v2539 = vmul.f32 %v2521, %v2537
  %2541 = vrot.lane.b32.xlu0 %v2539, 96
  %v2542 = vpop.permute.xlu0 %2541
  %2544 = vst.msk [vmem:[#allocation6 + $0xe] sm:$0x3] %vm1604, %v2542
  %v2545 = vld [vmem:[#allocation4] sm:$0x3]
  %2546 = vrot.lane.b32.xlu0 %v2473, 96
  %v2547 = vpop.permute.xlu0 %2546
  %v2548 = vsel %vm1538, %v2547, 0
  %2550 = vmatpush.msra.mxu0 0.0
  %2551 = vmatpush.msra.mxu0 0.0
  %2552 = vmatpush.msra.mxu0 0.0
  %2553 = vmatpush.msra.mxu0 0.0
  %2554 = vmatpush.msra.mxu0 0.0
  %2555 = vmatpush.msra.mxu0 0.0
  %2556 = vmatpush.msra.mxu0 0.0
  %2557 = vmatpush.msra.mxu0 0.0
  %2558 = vmatpush.msra.mxu0 0.0
  %2559 = vmatpush.msra.mxu0 0.0
  %2560 = vmatpush.msra.mxu0 0.0
  %2561 = vmatpush.msra.mxu0 0.0
  %2562 = vmatpush.msra.mxu0 0.0
  %2563 = vmatpush.msra.mxu0 0.0
  %2564 = vmatpush.msra.mxu0 %v1536
  %2565 = vmatpush.msra.mxu0 %v1535
  %2566 = vmatmul.f32.gmra.mxu0 %v2548
  %v2567 = vpop.f32.mrf.mxu0
  %v2568 = vadd.f32 0.0, %v2567
  %2569 = vdwg.mxu0
  %v2570 = vadd.f32 %v2545, %v2568
  %v2571 = vxor.u32 %v2570, 2147483648
  %v2572 = vmul.f32 %v2571, 1.442695
  %v2573 = vpow.pop %v2572
  %v2574 = vadd.f32 %v2573, 1.0
  %v2575 = vrcp.pop %v2574
  %v2576 = vmul.f32 %v2574, %v2575
  %v2577 = vsub.f32 1.0, %v2576
  %v2578 = vmul.f32 %v2575, %v2577
  %v2579 = vadd.f32 %v2575, %v2578
  %vm2580 = vweird.f32 %v2574
  %vm2581 = vweird.f32 %v2575
  %vm2582 = vmor %vm2580, %vm2581
  %v2583 = vsel %vm2582, %v2575, %v2579
  %v2584 = vand.u32 2147483647, %v2574
  %vm2585 = vcmp.eq.f32.partialorder %v2584, 8.507059e+37
  %v2586 = vand.u32 %v2574, 2147483648
  %v2587 = vor.u32 1.1754944e-38, %v2586
  %v2588 = vsel %vm2585, %v2587, %v2583
  %v2589 = vmul.f32 1.0, %v2588
  %v2590 = vtanh.pop %v2570
  %v2591 = vmul.f32 %v2589, %v2467
  %2593 = vrot.lane.b32.xlu0 %v2590, 80
  %v2594 = vpop.permute.xlu0 %2593
  %v2596 = vmul.f32 %v2589, %v2594
  %2598 = vrot.lane.b32.xlu0 %v2596, 16
  %v2599 = vpop.permute.xlu0 %2598
  %v2601 = vadd.f32 %v2591, %v2599
  %v2602 = vtanh.pop %v2601
  %2604 = vrot.lane.b32.xlu0 %v2602, 16
  %v2605 = vpop.permute.xlu0 %2604
  %v2607 = vmul.f32 %v2589, %v2605
  %2609 = vrot.lane.b32.xlu0 %v2607, 112
  %v2610 = vpop.permute.xlu0 %2609
  %2612 = vst.msk [vmem:[#allocation6] sm:$0x3] %vm1673, %v2610
  %v2613 = vld [vmem:[#allocation6] sm:$0xff]
  %v2614 = vld [vmem:[#allocation6 + $0x8] sm:$0xff]
  %v2615 = vld [vmem:[%s16] sm:$0xff]
  %v2616 = vld [vmem:[%s16 + $0x8] sm:$0xff]
  %v2617 = vld [vmem:[%s16 + $0x10] sm:$0xff]
  %v2618 = vld [vmem:[%s16 + $0x18] sm:$0xff]
  %v2619 = vld [vmem:[%s17] sm:$0x1]
  %v2621 = vperm.slane %v2619, 0
  %v2624 = vsel %vm119, %v2613, 0
  %v2627 = vsel %vm119, %v2614, 0
  %2629 = vmatpush.msra.mxu0 0.0
  %2630 = vmatpush.msra.mxu0 0.0
  %2631 = vmatpush.msra.mxu0 0.0
  %2632 = vmatpush.msra.mxu0 0.0
  %2633 = vmatpush.msra.mxu0 0.0
  %2634 = vmatpush.msra.mxu0 0.0
  %2635 = vmatpush.msra.mxu0 0.0
  %2636 = vmatpush.msra.mxu0 0.0
  %2637 = vmatpush.msra.mxu0 0.0
  %2638 = vmatpush.msra.mxu0 0.0
  %2639 = vmatpush.msra.mxu0 0.0
  %2640 = vmatpush.msra.mxu0 0.0
  %2641 = vmatpush.msra.mxu0 %v2618
  %2642 = vmatpush.msra.mxu0 %v2617
  %2643 = vmatpush.msra.mxu0 %v2616
  %2644 = vmatpush.msra.mxu0 %v2615
  %2645 = vmatmul.f32.gmra.mxu0 %v2624
  %v2646 = vpop.f32.mrf.mxu0
  %v2647 = vadd.f32 %v2621, %v2646
  %2648 = vmatmul.f32.gmra.mxu0 %v2627
  %v2649 = vpop.f32.mrf.mxu0
  %v2650 = vadd.f32 %v2621, %v2649
  %2651 = vdwg.mxu0
  %v2652 = vmax.f32 %v2647, 0.0
  %v2653 = vmax.f32 %v2650, 0.0
  %v2654 = vld [vmem:[%s18] sm:$0xff]
  %v2655 = vld [vmem:[%s18 + $0x8] sm:$0xff]
  %v2656 = vld [vmem:[%s18 + $0x10] sm:$0xff]
  %v2657 = vld [vmem:[%s18 + $0x18] sm:$0xff]
  %v2658 = vld [vmem:[%s18 + $0x20] sm:$0xff]
  %v2659 = vld [vmem:[%s18 + $0x28] sm:$0xff]
  %v2660 = vld [vmem:[%s18 + $0x30] sm:$0xff]
  %v2661 = vld [vmem:[%s18 + $0x38] sm:$0xff]
  %v2662 = vld [vmem:[%s18 + $0x40] sm:$0xff]
  %v2663 = vld [vmem:[%s18 + $0x48] sm:$0xff]
  %v2664 = vld [vmem:[%s18 + $0x50] sm:$0xff]
  %v2665 = vld [vmem:[%s18 + $0x58] sm:$0xff]
  %v2666 = vld [vmem:[%s18 + $0x60] sm:$0xff]
  %v2667 = vld [vmem:[%s18 + $0x68] sm:$0xff]
  %v2668 = vld [vmem:[%s18 + $0x70] sm:$0xff]
  %v2669 = vld [vmem:[%s18 + $0x78] sm:$0xff]
  %v2670 = vld [vmem:[%s19] sm:$0x1]
  %v2672 = vperm.slane %v2670, 0
  %2674 = vmatpush.msra.mxu0 %v2669
  %2675 = vmatpush.msra.mxu0 %v2668
  %2676 = vmatpush.msra.mxu0 %v2667
  %2677 = vmatpush.msra.mxu0 %v2666
  %2678 = vmatpush.msra.mxu0 %v2665
  %2679 = vmatpush.msra.mxu0 %v2664
  %2680 = vmatpush.msra.mxu0 %v2663
  %2681 = vmatpush.msra.mxu0 %v2662
  %2682 = vmatpush.msra.mxu0 %v2661
  %2683 = vmatpush.msra.mxu0 %v2660
  %2684 = vmatpush.msra.mxu0 %v2659
  %2685 = vmatpush.msra.mxu0 %v2658
  %2686 = vmatpush.msra.mxu0 %v2657
  %2687 = vmatpush.msra.mxu0 %v2656
  %2688 = vmatpush.msra.mxu0 %v2655
  %2689 = vmatpush.msra.mxu0 %v2654
  %2690 = vmatmul.f32.gmra.mxu0 %v2652
  %v2691 = vpop.f32.mrf.mxu0
  %v2692 = vadd.f32 %v2672, %v2691
  %2693 = vmatmul.f32.gmra.mxu0 %v2653
  %v2694 = vpop.f32.mrf.mxu0
  %v2695 = vadd.f32 %v2672, %v2694
  %2696 = vdwg.mxu0
  %vm2697 = vcmask 89088
  %2698 = vst.msk [vmem:[%s20] sm:$0xff] %vm2697, %v2692
  %2699 = vst.msk [vmem:[%s20 + $0x8] sm:$0xff] %vm2697, %v2695
  // Predicated region
  $region82: #{forward.1} parent=0 // pred_check
    _
  $region83: #{forward.1} parent=0 // pred_check_branch
    %2701 = sbr.rel (0) target = $region85
  $region84: #{forward.1} parent=0 // pred_region
    _
  $region85: #{forward.1} parent=0 // pred_fallthru
    _
  // Predicated region
  $region86: #{forward.1} parent=0 // pred_check
    _
  $region87: #{forward.1} parent=0 // pred_check_branch
    %2703 = sbr.rel (0) target = $region89
  $region88: #{forward.1} parent=0 // pred_region
    _
  $region89: #{forward.1} parent=0 // pred_fallthru
    _
  // Predicated region
  $region90: #{forward.1} parent=0 // pred_check
    _
  $region91: #{forward.1} parent=0 // pred_check_branch
    %2705 = sbr.rel (0) target = $region93
  $region92: #{forward.1} parent=0 // pred_region
    _
  $region93: #{forward.1} parent=0 // pred_fallthru
    _
  // Predicated region
  $region94: #{forward.1} parent=0 // pred_check
    _
  $region95: #{forward.1} parent=0 // pred_check_branch
    %2707 = sbr.rel (0) target = $region97
  $region96: #{forward.1} parent=0 // pred_region
    _
  $region97: #{forward.1} parent=0 // pred_fallthru
    _

</llo_original>
